<compile_context>
chip_gen: v7x
topology: tpu7x:2x2x1
jax: 0.10.0
libtpu: 0.0.40
codegen_flags: <defaults>
</compile_context>

<pallas_src>
import functools

import jax
import jax.numpy as jnp
from jax import lax
from jax.experimental import pallas as pl
from jax.experimental.pallas import tpu as pltpu


def _attn_group_body(x_ref, mask_ref, wqkv_ref, bqkv_ref, wo_ref, bo_ref,
                     out_ref, ctx_ref, *, attnw_ref, seq_len, head_dim,
                     heads_per_group, num_groups, scale, has_pad, approx_recip,
                     compute_dtype):
    """One (batch, head_group) grid step."""
    g = pl.program_id(1)
    Dg = heads_per_group * head_dim

    x = x_ref[0]                                           # (S_pad, E), cdt
    w = wqkv_ref[g]                                        # (E, 3*Dg), cdt (resident)

    # Fused q/k/v projection for this head group: one MXU matmul, f32 accum.
    qkv = jnp.dot(x, w, preferred_element_type=jnp.float32) + bqkv_ref[g]
    qkv = qkv.astype(compute_dtype)                        # (S_pad, 3*Dg)

    o_cols = []
    for hh in range(heads_per_group):                      # small static loop
        lo = hh * head_dim
        q = qkv[:, lo:lo + head_dim]                       # (S_pad, D)
        k = qkv[:, Dg + lo:Dg + lo + head_dim]             # (S_pad, D)
        v = qkv[:, 2 * Dg + lo:2 * Dg + lo + head_dim]     # (S_pad, D)

        # Scaled scores; contract over head_dim without transposing k.
        s = lax.dot_general(q, k, (((1,), (1,)), ((), ())),
                            preferred_element_type=jnp.float32) * scale
        if has_pad:
            # Precomputed additive 0 / -1e30 key-padding row (1, S_pad).
            s = s + mask_ref[...]

        # Numerically-stable softmax in f32 (matches torch softmax(dtype=f32)).
        m = jnp.max(s, axis=-1, keepdims=True)
        e = jnp.exp(s - m)
        denom = jnp.sum(e, axis=-1, keepdims=True)
        p = e * pl.reciprocal(denom, approx=approx_recip)  # (S_pad, S_pad)

        if attnw_ref is not None:
            attnw_ref[0, hh] = p.astype(attnw_ref.dtype)

        # TODO(synk): training-mode attention dropout not implemented
        # (inference semantics: p=0 / training=False -> identity).

        # Cast p back to the compute dtype before PV (matches torch).
        o = jnp.dot(p.astype(compute_dtype), v,
                    preferred_element_type=jnp.float32)    # (S_pad, D), f32
        o_cols.append(o.astype(compute_dtype))

    # Store this group's context columns (no read-modify-write of a full
    # (S_pad, E) accumulator).
    o_grp = o_cols[0] if len(o_cols) == 1 else jnp.concatenate(o_cols, axis=-1)
    ctx_ref[g] = o_grp                                     # (S_pad, Dg)

    # Single out-projection in the final head-group step (long-K matmuls over
    # resident wo), written once per batch element.
    # TODO(synk): for very long sequences (S_pad >= ~2048) a flash-style
    # key-blocked inner loop would be needed to fit v7x's 64 MiB VMEM.
    @pl.when(g == num_groups - 1)
    def _():
        acc = jnp.dot(ctx_ref[0], wo_ref[0], preferred_element_type=jnp.float32)
        for gg in range(1, num_groups):
            acc = acc + jnp.dot(ctx_ref[gg], wo_ref[gg],
                                preferred_element_type=jnp.float32)
        out_ref[0] = (acc + bo_ref[...]).astype(out_ref.dtype)


def _kernel_with_weights(x_ref, mask_ref, wqkv_ref, bqkv_ref, wo_ref, bo_ref,
                         out_ref, attnw_ref, ctx_ref, **kw):
    _attn_group_body(x_ref, mask_ref, wqkv_ref, bqkv_ref, wo_ref, bo_ref,
                     out_ref, ctx_ref, attnw_ref=attnw_ref, **kw)


def _kernel_no_weights(x_ref, mask_ref, wqkv_ref, bqkv_ref, wo_ref, bo_ref,
                       out_ref, ctx_ref, **kw):
    _attn_group_body(x_ref, mask_ref, wqkv_ref, bqkv_ref, wo_ref, bo_ref,
                     out_ref, ctx_ref, attnw_ref=None, **kw)


def siglip_attention(hidden_states, params, *, num_heads,
                     return_attn_weights=False, attn_weights_dtype=None,
                     compute_dtype=None, approx_recip=None):
    """Pallas implementation of SiglipAttention.forward.

    hidden_states: (B, S, E)
    params: dict with wq/wk/wv/wo of shape (E, E) (nn.Linear (out, in) layout)
            and bq/bk/bv/bo of shape (E,).
    Returns (attn_output (B, S, E), attn_weights (B, H, S, S)) when
    return_attn_weights=True, else just attn_output.
    compute_dtype: dtype fed to the MXU (default: input dtype; pass
    jnp.bfloat16 to force bf16 matmuls with f32 accumulation).
    """
    B, S, E = hidden_states.shape
    assert E % num_heads == 0, "embed_dim must be divisible by num_heads"
    H = num_heads
    D = E // H
    scale = float(D) ** -0.5
    dtype = hidden_states.dtype
    cdt = jnp.dtype(compute_dtype) if compute_dtype is not None else jnp.dtype(dtype)
    attn_dtype = (jnp.dtype(attn_weights_dtype)
                  if attn_weights_dtype is not None else jnp.dtype(dtype))
    if approx_recip is None:
        approx_recip = not return_attn_weights

    # Head grouping: largest divisor of H with D*hpb <= 128 lanes (keeps the
    # fused-QKV matmul N-dim and the context column stores lane-dense).
    hpb = 1
    for cand in range(min(H, max(1, 128 // D)), 0, -1):
        if H % cand == 0:
            hpb = cand
            break
    G = H // hpb
    Dg = hpb * D

    # Lane-dense sequence padding (multiple of 128). Padded key columns are
    # masked with an additive -1e30 row; padding is trimmed before returning.
    S_pad = ((S + 127) // 128) * 128
    has_pad = S_pad != S
    x = hidden_states.astype(cdt)
    if has_pad:
        x = jnp.pad(x, ((0, 0), (0, S_pad - S), (0, 0)))
        mask = jnp.where(jnp.arange(S_pad) < S, 0.0, -1e30).astype(jnp.float32)
        mask = mask.reshape(1, S_pad)
    else:
        mask = jnp.zeros((1, S_pad), jnp.float32)

    # nn.Linear weights are (out, in). Pre-transpose so y = x @ W, then group
    # heads and fuse q/k/v per group -> (G, E, 3*Dg).  out_proj -> (G, Dg, E).
    def regroup(w):                      # (E_out, E_in) -> (G, E_in, Dg)
        return w.T.reshape(E, G, Dg).transpose(1, 0, 2)

    wqkv = jnp.concatenate(
        [regroup(params["wq"]), regroup(params["wk"]), regroup(params["wv"])],
        axis=-1).astype(cdt)                                   # (G, E, 3*Dg)
    bqkv = jnp.concatenate(
        [params["bq"].reshape(G, 1, Dg), params["bk"].reshape(G, 1, Dg),
         params["bv"].reshape(G, 1, Dg)], axis=-1).astype(jnp.float32)
    wo = params["wo"].T.reshape(G, Dg, E).astype(cdt)          # (G, Dg, E)
    bo = params["bo"].reshape(1, E).astype(jnp.float32)

    # BlockSpecs. Weights/biases/mask are resident (constant index_map, full
    # array) and sliced per head group inside the kernel.
    x_spec = pl.BlockSpec((1, S_pad, E), lambda b, g: (b, 0, 0))
    mask_spec = pl.BlockSpec((1, S_pad), lambda b, g: (0, 0))
    wqkv_spec = pl.BlockSpec((G, E, 3 * Dg), lambda b, g: (0, 0, 0))
    bqkv_spec = pl.BlockSpec((G, 1, 3 * Dg), lambda b, g: (0, 0, 0))
    wo_spec = pl.BlockSpec((G, Dg, E), lambda b, g: (0, 0, 0))
    bo_spec = pl.BlockSpec((1, E), lambda b, g: (0, 0))
    out_spec = pl.BlockSpec((1, S_pad, E), lambda b, g: (b, 0, 0))

    in_specs = [x_spec, mask_spec, wqkv_spec, bqkv_spec, wo_spec, bo_spec]

    out_shapes = [jax.ShapeDtypeStruct((B, S_pad, E), dtype)]
    out_specs = [out_spec]
    if return_attn_weights:
        out_shapes.append(jax.ShapeDtypeStruct((B, H, S_pad, S_pad), attn_dtype))
        out_specs.append(
            pl.BlockSpec((1, hpb, S_pad, S_pad), lambda b, g: (b, g, 0, 0)))
        kernel_fn = _kernel_with_weights
    else:
        kernel_fn = _kernel_no_weights

    kernel = functools.partial(
        kernel_fn, seq_len=S, head_dim=D, heads_per_group=hpb, num_groups=G,
        scale=scale, has_pad=has_pad, approx_recip=approx_recip,
        compute_dtype=cdt)

    # VMEM budget from actual dtypes / blocks, clamped to ~85% of capacity.
    cdt_b = jnp.dtype(cdt).itemsize
    in_b = jnp.dtype(dtype).itemsize
    attn_b = jnp.dtype(attn_dtype).itemsize
    est = (2 * S_pad * E * cdt_b                 # x block (double-buffered)
           + 2 * E * 3 * E * cdt_b               # resident fused qkv weights
           + 2 * E * E * cdt_b                   # resident out-proj weights
           + 2 * S_pad * E * in_b                # output block
           + S_pad * E * cdt_b                   # context scratch
           + S_pad * 3 * Dg * (4 + cdt_b)        # fused qkv intermediate
           + hpb * 3 * S_pad * S_pad * 4         # per-group s / e / p tiles
           + S_pad * E * 4                       # out-projection accumulator
           + (2 * hpb * S_pad * S_pad * attn_b if return_attn_weights else 0)
           + (1 << 16))
    try:
        cap = int(pltpu.get_tpu_info().vmem_capacity_bytes)
    except Exception:
        cap = 64 * 2 ** 20
    vmem_limit = int(min(int(0.85 * cap), max(32 * 2 ** 20, int(1.4 * est))))

    flops = int(B * (2 * S_pad * E * 3 * E          # qkv projection
                     + H * 4 * S_pad * S_pad * D    # scores + PV
                     + 2 * S_pad * E * E))          # out projection
    bytes_accessed = int(cdt_b * B * S_pad * E              # x in
                         + cdt_b * 4 * E * E                 # weights (once)
                         + in_b * B * S_pad * E              # out
                         + (attn_b * B * H * S_pad * S_pad
                            if return_attn_weights else 0))
    cost = pl.CostEstimate(flops=flops,
                           transcendentals=int(B * H * S_pad * S_pad),
                           bytes_accessed=bytes_accessed)

    results = pl.pallas_call(
        kernel,
        out_shape=tuple(out_shapes),
        grid_spec=pltpu.PrefetchScalarGridSpec(
            num_scalar_prefetch=0,
            grid=(B, G),
            in_specs=in_specs,
            out_specs=out_specs,
            scratch_shapes=[pltpu.VMEM((G, S_pad, Dg), cdt)],
        ),
        compiler_params=pltpu.CompilerParams(
            # batch is megacore-shardable; the head-group axis carries the
            # context accumulation so it stays sequential.
            dimension_semantics=("parallel", "arbitrary"),
            vmem_limit_bytes=vmem_limit,
        ),
        cost_estimate=cost,
    )(x, mask, wqkv, bqkv, wo, bo)

    if return_attn_weights:
        out_pad, attnw_pad = results
        return out_pad[:, :S, :], attnw_pad[:, :, :S, :S]
    (out_pad,) = results
    return out_pad[:, :S, :]


def _reference(hidden_states, params, *, num_heads):
    """Pure-JAX reference (mirrors the PyTorch forward)."""
    B, S, E = hidden_states.shape
    D = E // num_heads
    scale = D ** (-0.5)

    def lin(x, w, b):
        return jnp.einsum('bse,oe->bso', x, w) + b

    q = lin(hidden_states, params["wq"], params["bq"])
    k = lin(hidden_states, params["wk"], params["bk"])
    v = lin(hidden_states, params["wv"], params["bv"])

    def split(x):
        return x.reshape(B, S, num_heads, D).transpose(0, 2, 1, 3)

    qh, kh, vh = split(q), split(k), split(v)
    s = jnp.einsum('bhqd,bhkd->bhqk', qh, kh) * scale
    p = jax.nn.softmax(s.astype(jnp.float32), axis=-1).astype(q.dtype)
    o = jnp.einsum('bhqk,bhkd->bhqd', p, vh)
    o = o.transpose(0, 2, 1, 3).reshape(B, S, E)
    out = lin(o, params["wo"], params["bo"])
    return out, p


if __name__ == "__main__":
    # Small shapes consistent with the module: hidden_size=32, heads=4, seq=8, batch=2
    B, S, E, H = 2, 8, 32, 4

    key = jax.random.PRNGKey(0)
    keys = jax.random.split(key, 10)

    def init_w(k):
        return jax.random.normal(k, (E, E), dtype=jnp.float32) * 0.05

    def init_b(k):
        return jax.random.normal(k, (E,), dtype=jnp.float32) * 0.01

    params = {
        "wq": init_w(keys[0]), "bq": init_b(keys[1]),
        "wk": init_w(keys[2]), "bk": init_b(keys[3]),
        "wv": init_w(keys[4]), "bv": init_b(keys[5]),
        "wo": init_w(keys[6]), "bo": init_b(keys[7]),
    }

    x = jax.random.normal(keys[8], (B, S, E), dtype=jnp.float32)
    ref_out, ref_w = _reference(x, params, num_heads=H)

    # 1) Full path: f32 compute, attention weights returned, exact reciprocal.
    out, attn_w = siglip_attention(x, params, num_heads=H,
                                   return_attn_weights=True)
    out = jax.block_until_ready(out)
    attn_w = jax.block_until_ready(attn_w)
    assert out.shape == (B, S, E)
    assert attn_w.shape == (B, H, S, S)
    assert jnp.allclose(out, ref_out, atol=1e-4, rtol=1e-4)
    assert jnp.allclose(attn_w, ref_w, atol=1e-4, rtol=1e-4)

    # 2) Fast path: no attention-weights writeback, EUP approx reciprocal.
    out_fast = jax.block_until_ready(
        siglip_attention(x, params, num_heads=H))
    assert out_fast.shape == (B, S, E)
    assert jnp.allclose(out_fast, ref_out, atol=2e-2, rtol=2e-2)

    # 3) bf16 MXU path (bf16 operands, f32 accumulation), loose tolerance.
    x_bf = x.astype(jnp.bfloat16)
    params_bf = {kk: vv.astype(jnp.bfloat16) for kk, vv in params.items()}
    out_bf = jax.block_until_ready(
        siglip_attention(x_bf, params_bf, num_heads=H))
    assert out_bf.dtype == jnp.bfloat16
    assert jnp.allclose(out_bf.astype(jnp.float32), ref_out, atol=7e-2, rtol=7e-2)

    print("KERNEL_OK")
</pallas_src>

<mosaic_0001>
module attributes {stable_mosaic.version = 11 : i64} {
  func.func @_kernel_with_weights(%arg0: i32, %arg1: i32, %arg2: memref<1x128x32xf32, #tpu.memory_space<vmem>>, %arg3: memref<1x128xf32, #tpu.memory_space<vmem>>, %arg4: memref<1x32x96xf32, #tpu.memory_space<vmem>>, %arg5: memref<1x1x96xf32, #tpu.memory_space<vmem>>, %arg6: memref<1x32x32xf32, #tpu.memory_space<vmem>>, %arg7: memref<1x32xf32, #tpu.memory_space<vmem>>, %arg8: memref<1x128x32xf32, #tpu.memory_space<vmem>>, %arg9: memref<1x4x128x128xf32, #tpu.memory_space<vmem>>, %arg10: memref<1x128x32xf32, #tpu.memory_space<vmem>>) attributes {dimension_semantics = [#tpu.dimension_semantics<parallel>, #tpu.dimension_semantics<arbitrary>], iteration_bounds = array<i64: 2, 1>, scalar_prefetch = 0 : i64, scratch_operands = 1 : i64, tpu.core_type = #tpu.core_type<tc>, window_params = [{transform_indices = @transform_0, window_bounds = array<i64: 1, 128, 32>}, {pipeline_mode = #tpu.pipeline_mode<synchronous>, transform_indices = @transform_1, window_bounds = array<i64: 1, 128>}, {pipeline_mode = #tpu.pipeline_mode<synchronous>, transform_indices = @transform_2, window_bounds = array<i64: 1, 32, 96>}, {pipeline_mode = #tpu.pipeline_mode<synchronous>, transform_indices = @transform_3, window_bounds = array<i64: 1, 1, 96>}, {pipeline_mode = #tpu.pipeline_mode<synchronous>, transform_indices = @transform_4, window_bounds = array<i64: 1, 32, 32>}, {pipeline_mode = #tpu.pipeline_mode<synchronous>, transform_indices = @transform_5, window_bounds = array<i64: 1, 32>}, {transform_indices = @transform_6, window_bounds = array<i64: 1, 128, 32>}, {transform_indices = @transform_7, window_bounds = array<i64: 1, 4, 128, 128>}]} {
    %c0 = arith.constant 0 : index
    %c0_0 = arith.constant 0 : index
    %c0_1 = arith.constant 0 : index
    %0 = vector.load %arg2[%c0, %c0_0, %c0_1] : memref<1x128x32xf32, #tpu.memory_space<vmem>>, vector<1x128x32xf32>
    %1 = vector.shape_cast %0 : vector<1x128x32xf32> to vector<128x32xf32>
    %2 = arith.index_cast %arg1 : i32 to index
    %c0_2 = arith.constant 0 : index
    %c0_3 = arith.constant 0 : index
    %3 = vector.load %arg4[%2, %c0_2, %c0_3] : memref<1x32x96xf32, #tpu.memory_space<vmem>>, vector<1x32x96xf32>
    %4 = vector.shape_cast %3 : vector<1x32x96xf32> to vector<32x96xf32>
    %cst = arith.constant dense<0.000000e+00> : vector<128x96xf32>
    %5 = tpu.matmul %1, %4, %cst {dimension_numbers = #tpu.dot_dimension_numbers<[1], [0], [0], [1], [0, 0, 1, 1], [], []>} : vector<128x32xf32>, vector<32x96xf32>, vector<128x96xf32> -> vector<128x96xf32>
    %6 = arith.index_cast %arg1 : i32 to index
    %c0_4 = arith.constant 0 : index
    %c0_5 = arith.constant 0 : index
    %7 = vector.load %arg5[%6, %c0_4, %c0_5] : memref<1x1x96xf32, #tpu.memory_space<vmem>>, vector<1x1x96xf32>
    %8 = vector.shape_cast %7 : vector<1x1x96xf32> to vector<1x96xf32>
    %9 = vector.broadcast %8 : vector<1x96xf32> to vector<128x96xf32>
    %10 = arith.addf %5, %9 : vector<128x96xf32>
    %11 = vector.extract_strided_slice %10 {offsets = [0, 0], sizes = [128, 8], strides = [1, 1]} : vector<128x96xf32> to vector<128x8xf32>
    %12 = vector.extract_strided_slice %10 {offsets = [0, 32], sizes = [128, 8], strides = [1, 1]} : vector<128x96xf32> to vector<128x8xf32>
    %13 = vector.extract_strided_slice %10 {offsets = [0, 64], sizes = [128, 8], strides = [1, 1]} : vector<128x96xf32> to vector<128x8xf32>
    %cst_6 = arith.constant dense<0.000000e+00> : vector<128x128xf32>
    %14 = tpu.matmul %11, %12, %cst_6 {dimension_numbers = #tpu.dot_dimension_numbers<[1], [1], [0], [0], [0, 0, 1, 0], [], []>} : vector<128x8xf32>, vector<128x8xf32>, vector<128x128xf32> -> vector<128x128xf32>
    %cst_7 = arith.constant 0.353553385 : f32
    %15 = vector.broadcast %cst_7 : f32 to vector<128x128xf32>
    %16 = arith.mulf %14, %15 : vector<128x128xf32>
    %c0_8 = arith.constant 0 : index
    %c0_9 = arith.constant 0 : index
    %17 = vector.load %arg3[%c0_8, %c0_9] : memref<1x128xf32, #tpu.memory_space<vmem>>, vector<1x128xf32>
    %18 = vector.broadcast %17 : vector<1x128xf32> to vector<128x128xf32>
    %19 = arith.addf %16, %18 : vector<128x128xf32>
    %cst_10 = arith.constant dense<0xFF800000> : vector<128xf32>
    %20 = vector.multi_reduction <maximumf>, %19, %cst_10 [1] : vector<128x128xf32> to vector<128xf32>
    %21 = vector.shape_cast %20 : vector<128xf32> to vector<128x1xf32>
    %22 = vector.broadcast %21 : vector<128x1xf32> to vector<128x128xf32>
    %23 = arith.subf %19, %22 : vector<128x128xf32>
    %24 = math.exp %23 : vector<128x128xf32>
    %cst_11 = arith.constant dense<0.000000e+00> : vector<128xf32>
    %25 = vector.multi_reduction <add>, %24, %cst_11 [1] : vector<128x128xf32> to vector<128xf32>
    %26 = vector.shape_cast %25 : vector<128xf32> to vector<128x1xf32>
    %27 = tpu.reciprocal %26 : vector<128x1xf32> -> vector<128x1xf32>
    %28 = vector.broadcast %27 : vector<128x1xf32> to vector<128x128xf32>
    %29 = arith.mulf %24, %28 : vector<128x128xf32>
    %c0_12 = arith.constant 0 : index
    %c0_13 = arith.constant 0 : index
    %c0_14 = arith.constant 0 : index
    %c0_15 = arith.constant 0 : index
    %30 = vector.load %arg9[%c0_12, %c0_13, %c0_14, %c0_15] : memref<1x4x128x128xf32, #tpu.memory_space<vmem>>, vector<1x1x128x128xf32>
    %31 = vector.shape_cast %30 : vector<1x1x128x128xf32> to vector<128x128xf32>
    %32 = vector.shape_cast %29 : vector<128x128xf32> to vector<1x1x128x128xf32>
    tpu.vector_store %arg9[%c0_12, %c0_13, %c0_14, %c0_15], %32 {strides = array<i32>} : memref<1x4x128x128xf32, #tpu.memory_space<vmem>>, vector<1x1x128x128xf32>,
    %cst_16 = arith.constant dense<0.000000e+00> : vector<128x8xf32>
    %33 = tpu.matmul %29, %13, %cst_16 {dimension_numbers = #tpu.dot_dimension_numbers<[1], [0], [0], [1], [0, 0, 1, 1], [], []>} : vector<128x128xf32>, vector<128x8xf32>, vector<128x8xf32> -> vector<128x8xf32>
    %34 = vector.extract_strided_slice %10 {offsets = [0, 8], sizes = [128, 8], strides = [1, 1]} : vector<128x96xf32> to vector<128x8xf32>
    %35 = vector.extract_strided_slice %10 {offsets = [0, 40], sizes = [128, 8], strides = [1, 1]} : vector<128x96xf32> to vector<128x8xf32>
    %36 = vector.extract_strided_slice %10 {offsets = [0, 72], sizes = [128, 8], strides = [1, 1]} : vector<128x96xf32> to vector<128x8xf32>
    %cst_17 = arith.constant dense<0.000000e+00> : vector<128x128xf32>
    %37 = tpu.matmul %34, %35, %cst_17 {dimension_numbers = #tpu.dot_dimension_numbers<[1], [1], [0], [0], [0, 0, 1, 0], [], []>} : vector<128x8xf32>, vector<128x8xf32>, vector<128x128xf32> -> vector<128x128xf32>
    %cst_18 = arith.constant 0.353553385 : f32
    %38 = vector.broadcast %cst_18 : f32 to vector<128x128xf32>
    %39 = arith.mulf %37, %38 : vector<128x128xf32>
    %c0_19 = arith.constant 0 : index
    %c0_20 = arith.constant 0 : index
    %40 = vector.load %arg3[%c0_19, %c0_20] : memref<1x128xf32, #tpu.memory_space<vmem>>, vector<1x128xf32>
    %41 = vector.broadcast %40 : vector<1x128xf32> to vector<128x128xf32>
    %42 = arith.addf %39, %41 : vector<128x128xf32>
    %cst_21 = arith.constant dense<0xFF800000> : vector<128xf32>
    %43 = vector.multi_reduction <maximumf>, %42, %cst_21 [1] : vector<128x128xf32> to vector<128xf32>
    %44 = vector.shape_cast %43 : vector<128xf32> to vector<128x1xf32>
    %45 = vector.broadcast %44 : vector<128x1xf32> to vector<128x128xf32>
    %46 = arith.subf %42, %45 : vector<128x128xf32>
    %47 = math.exp %46 : vector<128x128xf32>
    %cst_22 = arith.constant dense<0.000000e+00> : vector<128xf32>
    %48 = vector.multi_reduction <add>, %47, %cst_22 [1] : vector<128x128xf32> to vector<128xf32>
    %49 = vector.shape_cast %48 : vector<128xf32> to vector<128x1xf32>
    %50 = tpu.reciprocal %49 : vector<128x1xf32> -> vector<128x1xf32>
    %51 = vector.broadcast %50 : vector<128x1xf32> to vector<128x128xf32>
    %52 = arith.mulf %47, %51 : vector<128x128xf32>
    %c0_23 = arith.constant 0 : index
    %c1 = arith.constant 1 : index
    %c0_24 = arith.constant 0 : index
    %c0_25 = arith.constant 0 : index
    %53 = vector.load %arg9[%c0_23, %c1, %c0_24, %c0_25] : memref<1x4x128x128xf32, #tpu.memory_space<vmem>>, vector<1x1x128x128xf32>
    %54 = vector.shape_cast %53 : vector<1x1x128x128xf32> to vector<128x128xf32>
    %55 = vector.shape_cast %52 : vector<128x128xf32> to vector<1x1x128x128xf32>
    tpu.vector_store %arg9[%c0_23, %c1, %c0_24, %c0_25], %55 {strides = array<i32>} : memref<1x4x128x128xf32, #tpu.memory_space<vmem>>, vector<1x1x128x128xf32>,
    %cst_26 = arith.constant dense<0.000000e+00> : vector<128x8xf32>
    %56 = tpu.matmul %52, %36, %cst_26 {dimension_numbers = #tpu.dot_dimension_numbers<[1], [0], [0], [1], [0, 0, 1, 1], [], []>} : vector<128x128xf32>, vector<128x8xf32>, vector<128x8xf32> -> vector<128x8xf32>
    %57 = vector.extract_strided_slice %10 {offsets = [0, 16], sizes = [128, 8], strides = [1, 1]} : vector<128x96xf32> to vector<128x8xf32>
    %58 = vector.extract_strided_slice %10 {offsets = [0, 48], sizes = [128, 8], strides = [1, 1]} : vector<128x96xf32> to vector<128x8xf32>
    %59 = vector.extract_strided_slice %10 {offsets = [0, 80], sizes = [128, 8], strides = [1, 1]} : vector<128x96xf32> to vector<128x8xf32>
    %cst_27 = arith.constant dense<0.000000e+00> : vector<128x128xf32>
    %60 = tpu.matmul %57, %58, %cst_27 {dimension_numbers = #tpu.dot_dimension_numbers<[1], [1], [0], [0], [0, 0, 1, 0], [], []>} : vector<128x8xf32>, vector<128x8xf32>, vector<128x128xf32> -> vector<128x128xf32>
    %cst_28 = arith.constant 0.353553385 : f32
    %61 = vector.broadcast %cst_28 : f32 to vector<128x128xf32>
    %62 = arith.mulf %60, %61 : vector<128x128xf32>
    %c0_29 = arith.constant 0 : index
    %c0_30 = arith.constant 0 : index
    %63 = vector.load %arg3[%c0_29, %c0_30] : memref<1x128xf32, #tpu.memory_space<vmem>>, vector<1x128xf32>
    %64 = vector.broadcast %63 : vector<1x128xf32> to vector<128x128xf32>
    %65 = arith.addf %62, %64 : vector<128x128xf32>
    %cst_31 = arith.constant dense<0xFF800000> : vector<128xf32>
    %66 = vector.multi_reduction <maximumf>, %65, %cst_31 [1] : vector<128x128xf32> to vector<128xf32>
    %67 = vector.shape_cast %66 : vector<128xf32> to vector<128x1xf32>
    %68 = vector.broadcast %67 : vector<128x1xf32> to vector<128x128xf32>
    %69 = arith.subf %65, %68 : vector<128x128xf32>
    %70 = math.exp %69 : vector<128x128xf32>
    %cst_32 = arith.constant dense<0.000000e+00> : vector<128xf32>
    %71 = vector.multi_reduction <add>, %70, %cst_32 [1] : vector<128x128xf32> to vector<128xf32>
    %72 = vector.shape_cast %71 : vector<128xf32> to vector<128x1xf32>
    %73 = tpu.reciprocal %72 : vector<128x1xf32> -> vector<128x1xf32>
    %74 = vector.broadcast %73 : vector<128x1xf32> to vector<128x128xf32>
    %75 = arith.mulf %70, %74 : vector<128x128xf32>
    %c0_33 = arith.constant 0 : index
    %c2 = arith.constant 2 : index
    %c0_34 = arith.constant 0 : index
    %c0_35 = arith.constant 0 : index
    %76 = vector.load %arg9[%c0_33, %c2, %c0_34, %c0_35] : memref<1x4x128x128xf32, #tpu.memory_space<vmem>>, vector<1x1x128x128xf32>
    %77 = vector.shape_cast %76 : vector<1x1x128x128xf32> to vector<128x128xf32>
    %78 = vector.shape_cast %75 : vector<128x128xf32> to vector<1x1x128x128xf32>
    tpu.vector_store %arg9[%c0_33, %c2, %c0_34, %c0_35], %78 {strides = array<i32>} : memref<1x4x128x128xf32, #tpu.memory_space<vmem>>, vector<1x1x128x128xf32>,
    %cst_36 = arith.constant dense<0.000000e+00> : vector<128x8xf32>
    %79 = tpu.matmul %75, %59, %cst_36 {dimension_numbers = #tpu.dot_dimension_numbers<[1], [0], [0], [1], [0, 0, 1, 1], [], []>} : vector<128x128xf32>, vector<128x8xf32>, vector<128x8xf32> -> vector<128x8xf32>
    %80 = vector.extract_strided_slice %10 {offsets = [0, 24], sizes = [128, 8], strides = [1, 1]} : vector<128x96xf32> to vector<128x8xf32>
    %81 = vector.extract_strided_slice %10 {offsets = [0, 56], sizes = [128, 8], strides = [1, 1]} : vector<128x96xf32> to vector<128x8xf32>
    %82 = vector.extract_strided_slice %10 {offsets = [0, 88], sizes = [128, 8], strides = [1, 1]} : vector<128x96xf32> to vector<128x8xf32>
    %cst_37 = arith.constant dense<0.000000e+00> : vector<128x128xf32>
    %83 = tpu.matmul %80, %81, %cst_37 {dimension_numbers = #tpu.dot_dimension_numbers<[1], [1], [0], [0], [0, 0, 1, 0], [], []>} : vector<128x8xf32>, vector<128x8xf32>, vector<128x128xf32> -> vector<128x128xf32>
    %cst_38 = arith.constant 0.353553385 : f32
    %84 = vector.broadcast %cst_38 : f32 to vector<128x128xf32>
    %85 = arith.mulf %83, %84 : vector<128x128xf32>
    %c0_39 = arith.constant 0 : index
    %c0_40 = arith.constant 0 : index
    %86 = vector.load %arg3[%c0_39, %c0_40] : memref<1x128xf32, #tpu.memory_space<vmem>>, vector<1x128xf32>
    %87 = vector.broadcast %86 : vector<1x128xf32> to vector<128x128xf32>
    %88 = arith.addf %85, %87 : vector<128x128xf32>
    %cst_41 = arith.constant dense<0xFF800000> : vector<128xf32>
    %89 = vector.multi_reduction <maximumf>, %88, %cst_41 [1] : vector<128x128xf32> to vector<128xf32>
    %90 = vector.shape_cast %89 : vector<128xf32> to vector<128x1xf32>
    %91 = vector.broadcast %90 : vector<128x1xf32> to vector<128x128xf32>
    %92 = arith.subf %88, %91 : vector<128x128xf32>
    %93 = math.exp %92 : vector<128x128xf32>
    %cst_42 = arith.constant dense<0.000000e+00> : vector<128xf32>
    %94 = vector.multi_reduction <add>, %93, %cst_42 [1] : vector<128x128xf32> to vector<128xf32>
    %95 = vector.shape_cast %94 : vector<128xf32> to vector<128x1xf32>
    %96 = tpu.reciprocal %95 : vector<128x1xf32> -> vector<128x1xf32>
    %97 = vector.broadcast %96 : vector<128x1xf32> to vector<128x128xf32>
    %98 = arith.mulf %93, %97 : vector<128x128xf32>
    %c0_43 = arith.constant 0 : index
    %c3 = arith.constant 3 : index
    %c0_44 = arith.constant 0 : index
    %c0_45 = arith.constant 0 : index
    %99 = vector.load %arg9[%c0_43, %c3, %c0_44, %c0_45] : memref<1x4x128x128xf32, #tpu.memory_space<vmem>>, vector<1x1x128x128xf32>
    %100 = vector.shape_cast %99 : vector<1x1x128x128xf32> to vector<128x128xf32>
    %101 = vector.shape_cast %98 : vector<128x128xf32> to vector<1x1x128x128xf32>
    tpu.vector_store %arg9[%c0_43, %c3, %c0_44, %c0_45], %101 {strides = array<i32>} : memref<1x4x128x128xf32, #tpu.memory_space<vmem>>, vector<1x1x128x128xf32>,
    %cst_46 = arith.constant dense<0.000000e+00> : vector<128x8xf32>
    %102 = tpu.matmul %98, %82, %cst_46 {dimension_numbers = #tpu.dot_dimension_numbers<[1], [0], [0], [1], [0, 0, 1, 1], [], []>} : vector<128x128xf32>, vector<128x8xf32>, vector<128x8xf32> -> vector<128x8xf32>
    %103 = tpu.concatenate %33, %56, %79, %102 in 1 : vector<128x8xf32>, vector<128x8xf32>, vector<128x8xf32>, vector<128x8xf32> -> vector<128x32xf32>
    %104 = arith.index_cast %arg1 : i32 to index
    %c0_47 = arith.constant 0 : index
    %c0_48 = arith.constant 0 : index
    %105 = vector.load %arg10[%104, %c0_47, %c0_48] : memref<1x128x32xf32, #tpu.memory_space<vmem>>, vector<1x128x32xf32>
    %106 = vector.shape_cast %105 : vector<1x128x32xf32> to vector<128x32xf32>
    %107 = vector.shape_cast %103 : vector<128x32xf32> to vector<1x128x32xf32>
    tpu.vector_store %arg10[%104, %c0_47, %c0_48], %107 {strides = array<i32>} : memref<1x128x32xf32, #tpu.memory_space<vmem>>, vector<1x128x32xf32>,
    %c0_i32 = arith.constant 0 : i32
    %108 = arith.cmpi eq, %arg1, %c0_i32 : i32
    %109 = arith.extui %108 : i1 to i32
    %c0_i32_49 = arith.constant 0 : i32
    %110 = arith.cmpi ne, %109, %c0_i32_49 : i32
    scf.if %110 {
      %c0_50 = arith.constant 0 : index
      %c0_51 = arith.constant 0 : index
      %c0_52 = arith.constant 0 : index
      %111 = vector.load %arg10[%c0_50, %c0_51, %c0_52] : memref<1x128x32xf32, #tpu.memory_space<vmem>>, vector<1x128x32xf32>
      %112 = vector.shape_cast %111 : vector<1x128x32xf32> to vector<128x32xf32>
      %c0_53 = arith.constant 0 : index
      %c0_54 = arith.constant 0 : index
      %c0_55 = arith.constant 0 : index
      %113 = vector.load %arg6[%c0_53, %c0_54, %c0_55] : memref<1x32x32xf32, #tpu.memory_space<vmem>>, vector<1x32x32xf32>
      %114 = vector.shape_cast %113 : vector<1x32x32xf32> to vector<32x32xf32>
      %cst_56 = arith.constant dense<0.000000e+00> : vector<128x32xf32>
      %115 = tpu.matmul %112, %114, %cst_56 {dimension_numbers = #tpu.dot_dimension_numbers<[1], [0], [0], [1], [0, 0, 1, 1], [], []>} : vector<128x32xf32>, vector<32x32xf32>, vector<128x32xf32> -> vector<128x32xf32>
      %c0_57 = arith.constant 0 : index
      %c0_58 = arith.constant 0 : index
      %116 = vector.load %arg7[%c0_57, %c0_58] : memref<1x32xf32, #tpu.memory_space<vmem>>, vector<1x32xf32>
      %117 = vector.broadcast %116 : vector<1x32xf32> to vector<128x32xf32>
      %118 = arith.addf %115, %117 : vector<128x32xf32>
      %c0_59 = arith.constant 0 : index
      %c0_60 = arith.constant 0 : index
      %c0_61 = arith.constant 0 : index
      %119 = vector.load %arg8[%c0_59, %c0_60, %c0_61] : memref<1x128x32xf32, #tpu.memory_space<vmem>>, vector<1x128x32xf32>
      %120 = vector.shape_cast %119 : vector<1x128x32xf32> to vector<128x32xf32>
      %121 = vector.shape_cast %118 : vector<128x32xf32> to vector<1x128x32xf32>
      tpu.vector_store %arg8[%c0_59, %c0_60, %c0_61], %121 {strides = array<i32>} : memref<1x128x32xf32, #tpu.memory_space<vmem>>, vector<1x128x32xf32>,
    } else {
    }
    return
  }
  func.func @transform_0(%arg0: i32, %arg1: i32) -> (i32, i32, i32) {
    %c0_i32 = arith.constant 0 : i32
    %c0_i32_0 = arith.constant 0 : i32
    %c0_i32_1 = arith.constant 0 : i32
    return %arg0, %c0_i32, %c0_i32_0 : i32, i32, i32
  }
  func.func @transform_1(%arg0: i32, %arg1: i32) -> (i32, i32) {
    %c0_i32 = arith.constant 0 : i32
    %c0_i32_0 = arith.constant 0 : i32
    %c0_i32_1 = arith.constant 0 : i32
    return %c0_i32, %c0_i32_0 : i32, i32
  }
  func.func @transform_2(%arg0: i32, %arg1: i32) -> (i32, i32, i32) {
    %c0_i32 = arith.constant 0 : i32
    %c0_i32_0 = arith.constant 0 : i32
    %c0_i32_1 = arith.constant 0 : i32
    %c0_i32_2 = arith.constant 0 : i32
    return %c0_i32, %c0_i32_0, %c0_i32_1 : i32, i32, i32
  }
  func.func @transform_3(%arg0: i32, %arg1: i32) -> (i32, i32, i32) {
    %c0_i32 = arith.constant 0 : i32
    %c0_i32_0 = arith.constant 0 : i32
    %c0_i32_1 = arith.constant 0 : i32
    %c0_i32_2 = arith.constant 0 : i32
    return %c0_i32, %c0_i32_0, %c0_i32_1 : i32, i32, i32
  }
  func.func @transform_4(%arg0: i32, %arg1: i32) -> (i32, i32, i32) {
    %c0_i32 = arith.constant 0 : i32
    %c0_i32_0 = arith.constant 0 : i32
    %c0_i32_1 = arith.constant 0 : i32
    %c0_i32_2 = arith.constant 0 : i32
    return %c0_i32, %c0_i32_0, %c0_i32_1 : i32, i32, i32
  }
  func.func @transform_5(%arg0: i32, %arg1: i32) -> (i32, i32) {
    %c0_i32 = arith.constant 0 : i32
    %c0_i32_0 = arith.constant 0 : i32
    %c0_i32_1 = arith.constant 0 : i32
    return %c0_i32, %c0_i32_0 : i32, i32
  }
  func.func @transform_6(%arg0: i32, %arg1: i32) -> (i32, i32, i32) {
    %c0_i32 = arith.constant 0 : i32
    %c0_i32_0 = arith.constant 0 : i32
    %c0_i32_1 = arith.constant 0 : i32
    return %arg0, %c0_i32, %c0_i32_0 : i32, i32, i32
  }
  func.func @transform_7(%arg0: i32, %arg1: i32) -> (i32, i32, i32, i32) {
    %c0_i32 = arith.constant 0 : i32
    %c0_i32_0 = arith.constant 0 : i32
    %c0_i32_1 = arith.constant 0 : i32
    return %arg0, %arg1, %c0_i32, %c0_i32_0 : i32, i32, i32, i32
  }
}

</mosaic_0001>

<llo_original>
// kernel: tpu_custom_call.1
$region0: #{tpu_custom_call.1}
  #allocation0 [shape = 'u32[]', space=smem, size = 0x4, offset = 0x4, fixed_abs, tag = 'smem constant byte address 0x4 - core index']
  #allocation1 [shape = 'u32[144,128]{1,0:T(1,128)}', space=vmem, size = 0x12000, scoped, tag = 'internal scratch']
  #allocation2 [shape = 'f32[1,128,32]{2,1,0:T(8,128)}', space=vmem, size = 0x10000, scoped, tag = 'scratch operand']
  %s0 = inlined_call_operand.vmem [shape: f32[2,128,32], index: 0, kind: input, shape index: {}]
  %s1 = inlined_call_operand.vmem [shape: f32[1,128], index: 1, kind: input, shape index: {}]
  %s2 = inlined_call_operand.vmem [shape: f32[1,32,96], index: 2, kind: input, shape index: {}]
  %s3 = inlined_call_operand.vmem [shape: f32[1,1,96], index: 3, kind: input, shape index: {}]
  %s4 = inlined_call_operand.vmem [shape: f32[1,32,32], index: 4, kind: input, shape index: {}]
  %s5 = inlined_call_operand.vmem [shape: f32[1,32], index: 5, kind: input, shape index: {}]
  %s6 = inlined_call_operand.vmem [shape: f32[2,128,32], index: 6, kind: output, shape index: {0}]
  %s7 = inlined_call_operand.hbm [shape: f32[2,4,128,128], index: 7, kind: output, shape index: {1}]
  %8 = xla_tuple %s6, %s7
  %s9 = sld [smem:[#allocation0]]
  $region69: #{tpu_custom_call.1} parent=0
    _
  %s11 = ssub.s32 1, %s9
  %s12 = scalar_select 0, %s11, %s9
  $region1: #{tpu_custom_call.1} parent=0
    #allocation3 [shape = 'u8[524288]{0}', space=vmem, size = 0x80000, scoped, tag = 'output window, operand 1']
    #allocation4 [shape = 's32[2]{0}', space=sflag, size = 0x8, scoped, tag = 'scoped memory for tpu_custom_call.1']
    %13 = vsyncpa [#allocation4], 0
    %s14 = scalar_lea.sflag [#allocation4], 1
    %15 = vsyncpa %s14, 0
    loop: start=0, step=1, limit=4
    $region2: #{tpu_custom_call.1} parent=1 // loop_pre_header
      _
    $region3: #{tpu_custom_call.1} parent=1 // loop_header
      %s17 = sphi 0, %s21
      %p18 = scmp.ge.s32.totalorder %s17, 4
      %s24 = sphi 0, %s36
      %s25 = sphi 0, %s32
      %s26 = sphi 0, %s24
      %s27 = sphi 0, %s25
      %s28 = sphi 0, %s26
      %s29 = sphi 0, %s27
      %s39 = sphi 0, %s41
      %s42 = sphi 0, %s39
      %s43 = sphi 0, %s42
      %s59 = sphi 0, %s43
      %s63 = sphi 0, %s63
      %s65 = sphi 0, %s63
      %s66 = sphi 0, %s65
      %s80 = sphi 0, %s66
      %s84 = sphi 0, %s84
      %s86 = sphi 0, %s84
      %s87 = sphi 0, %s86
      %s101 = sphi 0, %s87
      %s105 = sphi 0, %s105
      %s107 = sphi 0, %s105
      %s108 = sphi 0, %s107
      %s122 = sphi 0, %s108
      %s126 = sphi 0, %s126
      %s128 = sphi 0, %s126
      %s129 = sphi 0, %s128
      %s143 = sphi 0, %s129
      %s147 = sphi 0, %s147
      %s149 = sphi 0, %s147
      %s150 = sphi 0, %s149
      %s164 = sphi 0, %s150
      %s170 = sphi 0, %s172
      %s173 = sphi 0, %s170
      %s174 = sphi 0, %s173
      %s190 = sphi 0, %s174
      %s198 = sphi 0, %s200
      %s201 = sphi 0, %s198
      %s202 = sphi 0, %s201
      %s218 = sphi 0, %s202
    $region4: #{tpu_custom_call.1} parent=1 // loop_header_branch
      %20 = sbr.rel (%p18) target = $region8
    $region5: #{tpu_custom_call.1} parent=1 // loop_body
      %s22 = ssub.s32 %s17, 1
      %s23 = ssub.s32 %s17, 2
      %s30 = sadd.s32 1, %s25
      %p31 = scmp.ge.s32.totalorder %s30, 1
      %s32 = scalar_select %p31, 0, %s30
      %s33 = sadd.s32 1, %s24
      %s34 = scalar_select %p31, %s33, %s24
      %p35 = scmp.ge.s32.totalorder %s34, 2
      %s36 = scalar_select %p35, 0, %s34
      %s37 = ssub.s32 %s24, %s36
      %p38 = scmp.eq.s32.totalorder %s37, 0
      %s40 = sadd.s32 %s39, 1
      %s41 = scalar_select %p38, %s39, %s40
      %p44 = pneg %p38
      %p45 = scmp.eq.s32.totalorder %s17, 1
      %p46 = por %p44, %p45
      %p47 = scmp.ne.s32.totalorder %s39, %s42
      %p48 = scmp.eq.s32.totalorder %s17, 0
      %p49 = por %p47, %p48
      %p50 = scmp.ne.s32.totalorder %s39, %s42
      %p51 = scmp.eq.s32.totalorder %s22, 1
      %p52 = por %p50, %p51
      %p53 = scmp.ne.s32.totalorder %s42, %s43
      %p54 = scmp.eq.s32.totalorder %s22, 0
      %p55 = por %p53, %p54
      %p56 = scmp.ne.s32.totalorder %s42, %s43
      %p57 = scmp.eq.s32.totalorder %s23, 1
      %p58 = por %p56, %p57
      %p60 = scmp.ne.s32.totalorder %s43, %s59
      %p61 = scmp.eq.s32.totalorder %s23, 0
      %p62 = por %p60, %p61
      %s64 = sadd.s32 %s63, 1
      %p67 = scmp.eq.s32.totalorder %s17, 1
      %p68 = scmp.ne.s32.totalorder %s63, %s65
      %p69 = scmp.eq.s32.totalorder %s17, 0
      %p70 = por %p68, %p69
      %p71 = scmp.ne.s32.totalorder %s63, %s65
      %p72 = scmp.eq.s32.totalorder %s22, 1
      %p73 = por %p71, %p72
      %p74 = scmp.ne.s32.totalorder %s65, %s66
      %p75 = scmp.eq.s32.totalorder %s22, 0
      %p76 = por %p74, %p75
      %p77 = scmp.ne.s32.totalorder %s65, %s66
      %p78 = scmp.eq.s32.totalorder %s23, 1
      %p79 = por %p77, %p78
      %p81 = scmp.ne.s32.totalorder %s66, %s80
      %p82 = scmp.eq.s32.totalorder %s23, 0
      %p83 = por %p81, %p82
      %s85 = sadd.s32 %s84, 1
      %p88 = scmp.eq.s32.totalorder %s17, 1
      %p89 = scmp.ne.s32.totalorder %s84, %s86
      %p90 = scmp.eq.s32.totalorder %s17, 0
      %p91 = por %p89, %p90
      %p92 = scmp.ne.s32.totalorder %s84, %s86
      %p93 = scmp.eq.s32.totalorder %s22, 1
      %p94 = por %p92, %p93
      %p95 = scmp.ne.s32.totalorder %s86, %s87
      %p96 = scmp.eq.s32.totalorder %s22, 0
      %p97 = por %p95, %p96
      %p98 = scmp.ne.s32.totalorder %s86, %s87
      %p99 = scmp.eq.s32.totalorder %s23, 1
      %p100 = por %p98, %p99
      %p102 = scmp.ne.s32.totalorder %s87, %s101
      %p103 = scmp.eq.s32.totalorder %s23, 0
      %p104 = por %p102, %p103
      %s106 = sadd.s32 %s105, 1
      %p109 = scmp.eq.s32.totalorder %s17, 1
      %p110 = scmp.ne.s32.totalorder %s105, %s107
      %p111 = scmp.eq.s32.totalorder %s17, 0
      %p112 = por %p110, %p111
      %p113 = scmp.ne.s32.totalorder %s105, %s107
      %p114 = scmp.eq.s32.totalorder %s22, 1
      %p115 = por %p113, %p114
      %p116 = scmp.ne.s32.totalorder %s107, %s108
      %p117 = scmp.eq.s32.totalorder %s22, 0
      %p118 = por %p116, %p117
      %p119 = scmp.ne.s32.totalorder %s107, %s108
      %p120 = scmp.eq.s32.totalorder %s23, 1
      %p121 = por %p119, %p120
      %p123 = scmp.ne.s32.totalorder %s108, %s122
      %p124 = scmp.eq.s32.totalorder %s23, 0
      %p125 = por %p123, %p124
      %s127 = sadd.s32 %s126, 1
      %p130 = scmp.eq.s32.totalorder %s17, 1
      %p131 = scmp.ne.s32.totalorder %s126, %s128
      %p132 = scmp.eq.s32.totalorder %s17, 0
      %p133 = por %p131, %p132
      %p134 = scmp.ne.s32.totalorder %s126, %s128
      %p135 = scmp.eq.s32.totalorder %s22, 1
      %p136 = por %p134, %p135
      %p137 = scmp.ne.s32.totalorder %s128, %s129
      %p138 = scmp.eq.s32.totalorder %s22, 0
      %p139 = por %p137, %p138
      %p140 = scmp.ne.s32.totalorder %s128, %s129
      %p141 = scmp.eq.s32.totalorder %s23, 1
      %p142 = por %p140, %p141
      %p144 = scmp.ne.s32.totalorder %s129, %s143
      %p145 = scmp.eq.s32.totalorder %s23, 0
      %p146 = por %p144, %p145
      %s148 = sadd.s32 %s147, 1
      %p151 = scmp.eq.s32.totalorder %s17, 1
      %p152 = scmp.ne.s32.totalorder %s147, %s149
      %p153 = scmp.eq.s32.totalorder %s17, 0
      %p154 = por %p152, %p153
      %p155 = scmp.ne.s32.totalorder %s147, %s149
      %p156 = scmp.eq.s32.totalorder %s22, 1
      %p157 = por %p155, %p156
      %p158 = scmp.ne.s32.totalorder %s149, %s150
      %p159 = scmp.eq.s32.totalorder %s22, 0
      %p160 = por %p158, %p159
      %p161 = scmp.ne.s32.totalorder %s149, %s150
      %p162 = scmp.eq.s32.totalorder %s23, 1
      %p163 = por %p161, %p162
      %p165 = scmp.ne.s32.totalorder %s150, %s164
      %p166 = scmp.eq.s32.totalorder %s23, 0
      %p167 = por %p165, %p166
      %s168 = ssub.s32 %s24, %s36
      %p169 = scmp.eq.s32.totalorder %s168, 0
      %s171 = sadd.s32 %s170, 1
      %s172 = scalar_select %p169, %s170, %s171
      %p175 = pneg %p169
      %p176 = scmp.eq.s32.totalorder %s17, 1
      %p177 = por %p175, %p176
      %p178 = scmp.ne.s32.totalorder %s170, %s173
      %p179 = scmp.eq.s32.totalorder %s17, 0
      %p180 = por %p178, %p179
      %p181 = scmp.ne.s32.totalorder %s170, %s173
      %p182 = scmp.eq.s32.totalorder %s22, 1
      %p183 = por %p181, %p182
      %p184 = scmp.ne.s32.totalorder %s173, %s174
      %p185 = scmp.eq.s32.totalorder %s22, 0
      %p186 = por %p184, %p185
      %p187 = scmp.ne.s32.totalorder %s173, %s174
      %p188 = scmp.eq.s32.totalorder %s23, 1
      %p189 = por %p187, %p188
      %p191 = scmp.ne.s32.totalorder %s174, %s190
      %p192 = scmp.eq.s32.totalorder %s23, 0
      %p193 = por %p191, %p192
      %s194 = ssub.s32 %s24, %s36
      %s195 = ssub.s32 %s25, %s32
      %s196 = sor.u32 %s194, %s195
      %p197 = scmp.eq.s32.totalorder %s196, 0
      %s199 = sadd.s32 %s198, 1
      %s200 = scalar_select %p197, %s198, %s199
      %p203 = pneg %p197
      %p204 = scmp.eq.s32.totalorder %s17, 1
      %p205 = por %p203, %p204
      %p206 = scmp.ne.s32.totalorder %s198, %s201
      %p207 = scmp.eq.s32.totalorder %s17, 0
      %p208 = por %p206, %p207
      %p209 = scmp.ne.s32.totalorder %s198, %s201
      %p210 = scmp.eq.s32.totalorder %s22, 1
      %p211 = por %p209, %p210
      %p212 = scmp.ne.s32.totalorder %s201, %s202
      %p213 = scmp.eq.s32.totalorder %s22, 0
      %p214 = por %p212, %p213
      %p215 = scmp.ne.s32.totalorder %s201, %s202
      %p216 = scmp.eq.s32.totalorder %s23, 1
      %p217 = por %p215, %p216
      %p219 = scmp.ne.s32.totalorder %s202, %s218
      %p220 = scmp.eq.s32.totalorder %s23, 0
      %p221 = por %p219, %p220
      %p222 = scmp.le.s32.totalorder 1, %s17
      %p223 = scmp.lt.s32.totalorder %s17, 3
      %p224 = pnand %p222, %p223
      %p225 = pneg %p224
      // Predicated region
      $region9: #{tpu_custom_call.1} parent=5 // pred_check
        _
      $region10: #{tpu_custom_call.1} parent=5 // pred_check_branch
        %227 = sbr.rel (%p224) target = $region12
      $region11: #{tpu_custom_call.1} parent=5 // pred_region
        %s228 = ssub.s32 %s17, 1
        // Predicated region
        $region13: #{tpu_custom_call.1} parent=11 // pred_check
          %p229 = pneg %p76
        $region14: #{tpu_custom_call.1} parent=11 // pred_check_branch
          %231 = sbr.rel (%p229) target = $region16
        $region15: #{tpu_custom_call.1} parent=11 // pred_region
          _
        $region16: #{tpu_custom_call.1} parent=11 // pred_fallthru
          _
        // Predicated region
        $region17: #{tpu_custom_call.1} parent=11 // pred_check
          %p232 = pneg %p97
        $region18: #{tpu_custom_call.1} parent=11 // pred_check_branch
          %234 = sbr.rel (%p232) target = $region20
        $region19: #{tpu_custom_call.1} parent=11 // pred_region
          _
        $region20: #{tpu_custom_call.1} parent=11 // pred_fallthru
          _
        // Predicated region
        $region21: #{tpu_custom_call.1} parent=11 // pred_check
          %p235 = pneg %p118
        $region22: #{tpu_custom_call.1} parent=11 // pred_check_branch
          %237 = sbr.rel (%p235) target = $region24
        $region23: #{tpu_custom_call.1} parent=11 // pred_region
          _
        $region24: #{tpu_custom_call.1} parent=11 // pred_fallthru
          _
        // Predicated region
        $region25: #{tpu_custom_call.1} parent=11 // pred_check
          %p238 = pneg %p139
        $region26: #{tpu_custom_call.1} parent=11 // pred_check_branch
          %240 = sbr.rel (%p238) target = $region28
        $region27: #{tpu_custom_call.1} parent=11 // pred_region
          _
        $region28: #{tpu_custom_call.1} parent=11 // pred_fallthru
          _
        // Predicated region
        $region29: #{tpu_custom_call.1} parent=11 // pred_check
          %p241 = pneg %p160
        $region30: #{tpu_custom_call.1} parent=11 // pred_check_branch
          %243 = sbr.rel (%p241) target = $region32
        $region31: #{tpu_custom_call.1} parent=11 // pred_region
          _
        $region32: #{tpu_custom_call.1} parent=11 // pred_fallthru
          _
      $region12: #{tpu_custom_call.1} parent=5 // pred_fallthru
        _
      %p244 = scmp.lt.s32.totalorder %s17, 2
      // Predicated region
      $region33: #{tpu_custom_call.1} parent=5 // pred_check
        %p245 = pneg %p244
      $region34: #{tpu_custom_call.1} parent=5 // pred_check_branch
        %247 = sbr.rel (%p245) target = $region36
      $region35: #{tpu_custom_call.1} parent=5 // pred_region
        // Predicated region
        $region37: #{tpu_custom_call.1} parent=35 // pred_check
          %p248 = pneg %p49
        $region38: #{tpu_custom_call.1} parent=35 // pred_check_branch
          %250 = sbr.rel (%p248) target = $region40
        $region39: #{tpu_custom_call.1} parent=35 // pred_region
          %p251 = scmp.lt.s32.totalorder %s24, 1
          %s252 = scalar_select %p251, %s24, 1
          %s253 = smul.addr %s252, 16
          %s254 = smul.addr %s253, 8
          %s255 = scalar_lea.vmem %s0, %s254
        $region40: #{tpu_custom_call.1} parent=35 // pred_fallthru
          _
      $region36: #{tpu_custom_call.1} parent=5 // pred_fallthru
        _
      %p256 = scmp.le.s32.totalorder 1, %s17
      %p257 = scmp.lt.s32.totalorder %s17, 3
      %p258 = pnand %p256, %p257
      %p259 = pneg %p258
      // Predicated region
      $region41: #{tpu_custom_call.1} parent=5 // pred_check
        _
      $region42: #{tpu_custom_call.1} parent=5 // pred_check_branch
        %261 = sbr.rel (%p258) target = $region44
      $region43: #{tpu_custom_call.1} parent=5 // pred_region
        %s262 = ssub.s32 %s17, 1
        %p263 = scmp.lt.s32.totalorder %s26, 1
        %s264 = scalar_select %p263, %s26, 1
        %s265 = smul.addr %s264, 16
        %s266 = smul.addr %s265, 8
        %s267 = scalar_lea.vmem %s0, %s266
        %p268 = pneg %p55
        %p269 = pneg %p52
        %p270 = pneg %p76
        %p271 = pneg %p73
        %p272 = pneg %p97
        %p273 = pneg %p94
        %p274 = pneg %p118
        %p275 = pneg %p115
        %p276 = pneg %p139
        %p277 = pneg %p136
        %p278 = pneg %p160
        %p279 = pneg %p157
        %p280 = pneg %p186
        %p281 = pneg %p183
        %p282 = scmp.lt.s32.totalorder %s26, 1
        %s283 = scalar_select %p282, %s26, 1
        %s284 = smul.addr %s283, 16
        %s285 = smul.addr %s284, 8
        %s286 = scalar_lea.vmem %s6, %s285
        %p287 = pneg %p214
        %p288 = pneg %p211
        %s289 = sand.u32 %s201, 1
        %s290 = scalar_lea.sflag [#allocation4], %s289
        %s291 = sand.u32 %s201, 1
        %s292 = smul.addr %s291, 512
        %s293 = scalar_lea.vmem [#allocation3], %s292
        %p294 = scmp.lt.s32.totalorder %s26, 1
        %s295 = scalar_select %p294, %s26, 1
        %s296 = smul.addr %s295, 16
        %s297 = smul.addr %s296, 8
        %s298 = scalar_lea.vmem %s0, %s297
        %p299 = scmp.lt.s32.totalorder %s26, 1
        %s300 = scalar_select %p299, %s26, 1
        %s301 = smul.addr %s300, 16
        %s302 = smul.addr %s301, 8
        %s303 = scalar_lea.vmem %s6, %s302
        %s304 = smul.u32 4, %s27
        %v305 = vld [vmem:[%s298] sm:$0xff]
        %v306 = vld [vmem:[%s298 + $0x8] sm:$0xff]
        %v307 = vld [vmem:[%s298 + $0x10] sm:$0xff]
        %v308 = vld [vmem:[%s298 + $0x18] sm:$0xff]
        %v309 = vld [vmem:[%s298 + $0x20] sm:$0xff]
        %v310 = vld [vmem:[%s298 + $0x28] sm:$0xff]
        %v311 = vld [vmem:[%s298 + $0x30] sm:$0xff]
        %v312 = vld [vmem:[%s298 + $0x38] sm:$0xff]
        %v313 = vld [vmem:[%s298 + $0x40] sm:$0xff]
        %v314 = vld [vmem:[%s298 + $0x48] sm:$0xff]
        %v315 = vld [vmem:[%s298 + $0x50] sm:$0xff]
        %v316 = vld [vmem:[%s298 + $0x58] sm:$0xff]
        %v317 = vld [vmem:[%s298 + $0x60] sm:$0xff]
        %v318 = vld [vmem:[%s298 + $0x68] sm:$0xff]
        %v319 = vld [vmem:[%s298 + $0x70] sm:$0xff]
        %v320 = vld [vmem:[%s298 + $0x78] sm:$0xff]
        %s321 = smul.u32 %s27, 32
        %s322 = scalar_lea.vmem %s2, %s321
        %v323 = vld [vmem:[%s322] sm:$0xff]
        %v324 = vld [vmem:[%s322 + $0x8] sm:$0xff]
        %v325 = vld [vmem:[%s322 + $0x10] sm:$0xff]
        %v326 = vld [vmem:[%s322 + $0x18] sm:$0xff]
        %s327 = scalar_lea.vmem %s3, %s27
        %v328 = vld [vmem:[%s327] sm:$0x1]
        %v330 = vlaneseq
        %v331 = vshrl.u32 %v330, 7
        %v332 = vsub.s32 0, %v331
        %v333 = vrot.slane %v328, %v332
        %vm335 = vcmask 261120
        %v337 = vsel %vm335, %v305, 0
        %v340 = vsel %vm335, %v306, 0
        %v343 = vsel %vm335, %v307, 0
        %v346 = vsel %vm335, %v308, 0
        %v349 = vsel %vm335, %v309, 0
        %v352 = vsel %vm335, %v310, 0
        %v355 = vsel %vm335, %v311, 0
        %v358 = vsel %vm335, %v312, 0
        %v361 = vsel %vm335, %v313, 0
        %v364 = vsel %vm335, %v314, 0
        %v367 = vsel %vm335, %v315, 0
        %v370 = vsel %vm335, %v316, 0
        %v373 = vsel %vm335, %v317, 0
        %v376 = vsel %vm335, %v318, 0
        %v379 = vsel %vm335, %v319, 0
        %v382 = vsel %vm335, %v320, 0
        %384 = vmatprep.subr.mxu0 0.0
        %385 = vmatpush1.msra.mxu0 %v323
        %386 = vmatprep.subr.mxu0 0.0
        %387 = vmatpush1.msra.mxu0 %v324
        %388 = vmatprep.subr.mxu0 0.0
        %389 = vmatpush1.msra.mxu0 %v325
        %390 = vmatprep.subr.mxu0 0.0
        %391 = vmatpush1.msra.mxu0 %v326
        %392 = vmatprep.subr.mxu0 0.0
        %393 = vmatpush1.msra.mxu0 0.0
        %394 = vmatprep.subr.mxu0 0.0
        %395 = vmatpush1.msra.mxu0 0.0
        %396 = vmatprep.subr.mxu0 0.0
        %397 = vmatpush1.msra.mxu0 0.0
        %398 = vmatprep.subr.mxu0 0.0
        %399 = vmatpush1.msra.mxu0 0.0
        %400 = vmatprep.subr.mxu0 0.0
        %401 = vmatpush1.msra.mxu0 0.0
        %402 = vmatprep.subr.mxu0 0.0
        %403 = vmatpush1.msra.mxu0 0.0
        %404 = vmatprep.subr.mxu0 0.0
        %405 = vmatpush1.msra.mxu0 0.0
        %406 = vmatprep.subr.mxu0 0.0
        %407 = vmatpush1.msra.mxu0 0.0
        %408 = vmatprep.subr.mxu0 0.0
        %409 = vmatpush1.msra.mxu0 0.0
        %410 = vmatprep.subr.mxu0 0.0
        %411 = vmatpush1.msra.mxu0 0.0
        %412 = vmatprep.subr.mxu0 0.0
        %413 = vmatpush1.msra.mxu0 0.0
        %414 = vmatprep.subr.mxu0 0.0
        %415 = vmatpush1.msra.mxu0 0.0
        %416 = vmatprep.subr.mxu0 0.0
        %417 = vmatpush1.msra.mxu0 0.0
        %418 = vmatprep.subr.mxu0 0.0
        %419 = vmatpush1.msra.mxu0 0.0
        %420 = vmatprep.subr.mxu0 0.0
        %421 = vmatpush1.msra.mxu0 0.0
        %422 = vmatprep.subr.mxu0 0.0
        %423 = vmatpush1.msra.mxu0 0.0
        %424 = vmatprep.subr.mxu0 0.0
        %425 = vmatpush1.msra.mxu0 0.0
        %426 = vmatprep.subr.mxu0 0.0
        %427 = vmatpush1.msra.mxu0 0.0
        %428 = vmatprep.subr.mxu0 0.0
        %429 = vmatpush1.msra.mxu0 0.0
        %430 = vmatprep.subr.mxu0 0.0
        %431 = vmatpush1.msra.mxu0 0.0
        %432 = vmatprep.subr.mxu0 0.0
        %433 = vmatpush1.msra.mxu0 0.0
        %434 = vmatprep.subr.mxu0 0.0
        %435 = vmatpush1.msra.mxu0 0.0
        %436 = vmatprep.subr.mxu0 0.0
        %437 = vmatpush1.msra.mxu0 0.0
        %438 = vmatprep.subr.mxu0 0.0
        %439 = vmatpush1.msra.mxu0 0.0
        %440 = vmatprep.subr.mxu0 0.0
        %441 = vmatpush1.msra.mxu0 0.0
        %442 = vmatprep.subr.mxu0 0.0
        %443 = vmatpush1.msra.mxu0 0.0
        %444 = vmatprep.subr.mxu0 0.0
        %445 = vmatpush1.msra.mxu0 0.0
        %446 = vmatprep.subr.mxu0 0.0
        %447 = vmatpush1.msra.mxu0 0.0
        %448 = vmatprep.mubr.f32.mxu0 0.0
        %449 = vmatmul.mubr.f32.gmra.mrb[0].mxu0 %v337
        %v450 = vpop.f32.mrb[0].mxu0
        %v451 = vadd.f32 %v333, %v450
        %v452 = vpop.f32.mrb[0].mxu0
        %453 = vmatprep.mubr.f32.mxu0 0.0
        %454 = vmatmul.mubr.f32.gmra.mrb[0].mxu0 %v340
        %v455 = vpop.f32.mrb[0].mxu0
        %v456 = vadd.f32 %v333, %v455
        %v457 = vpop.f32.mrb[0].mxu0
        %458 = vmatprep.mubr.f32.mxu0 0.0
        %459 = vmatmul.mubr.f32.gmra.mrb[0].mxu0 %v343
        %v460 = vpop.f32.mrb[0].mxu0
        %v461 = vadd.f32 %v333, %v460
        %v462 = vpop.f32.mrb[0].mxu0
        %463 = vmatprep.mubr.f32.mxu0 0.0
        %464 = vmatmul.mubr.f32.gmra.mrb[0].mxu0 %v346
        %v465 = vpop.f32.mrb[0].mxu0
        %v466 = vadd.f32 %v333, %v465
        %v467 = vpop.f32.mrb[0].mxu0
        %468 = vmatprep.mubr.f32.mxu0 0.0
        %469 = vmatmul.mubr.f32.gmra.mrb[0].mxu0 %v349
        %v470 = vpop.f32.mrb[0].mxu0
        %v471 = vadd.f32 %v333, %v470
        %v472 = vpop.f32.mrb[0].mxu0
        %473 = vmatprep.mubr.f32.mxu0 0.0
        %474 = vmatmul.mubr.f32.gmra.mrb[0].mxu0 %v352
        %v475 = vpop.f32.mrb[0].mxu0
        %v476 = vadd.f32 %v333, %v475
        %v477 = vpop.f32.mrb[0].mxu0
        %478 = vmatprep.mubr.f32.mxu0 0.0
        %479 = vmatmul.mubr.f32.gmra.mrb[0].mxu0 %v355
        %v480 = vpop.f32.mrb[0].mxu0
        %v481 = vadd.f32 %v333, %v480
        %v482 = vpop.f32.mrb[0].mxu0
        %483 = vmatprep.mubr.f32.mxu0 0.0
        %484 = vmatmul.mubr.f32.gmra.mrb[0].mxu0 %v358
        %v485 = vpop.f32.mrb[0].mxu0
        %v486 = vadd.f32 %v333, %v485
        %v487 = vpop.f32.mrb[0].mxu0
        %488 = vmatprep.mubr.f32.mxu0 0.0
        %489 = vmatmul.mubr.f32.gmra.mrb[0].mxu0 %v361
        %v490 = vpop.f32.mrb[0].mxu0
        %v491 = vadd.f32 %v333, %v490
        %v492 = vpop.f32.mrb[0].mxu0
        %493 = vmatprep.mubr.f32.mxu0 0.0
        %494 = vmatmul.mubr.f32.gmra.mrb[0].mxu0 %v364
        %v495 = vpop.f32.mrb[0].mxu0
        %v496 = vadd.f32 %v333, %v495
        %v497 = vpop.f32.mrb[0].mxu0
        %498 = vmatprep.mubr.f32.mxu0 0.0
        %499 = vmatmul.mubr.f32.gmra.mrb[0].mxu0 %v367
        %v500 = vpop.f32.mrb[0].mxu0
        %v501 = vadd.f32 %v333, %v500
        %v502 = vpop.f32.mrb[0].mxu0
        %503 = vmatprep.mubr.f32.mxu0 0.0
        %504 = vmatmul.mubr.f32.gmra.mrb[0].mxu0 %v370
        %v505 = vpop.f32.mrb[0].mxu0
        %v506 = vadd.f32 %v333, %v505
        %v507 = vpop.f32.mrb[0].mxu0
        %508 = vmatprep.mubr.f32.mxu0 0.0
        %509 = vmatmul.mubr.f32.gmra.mrb[0].mxu0 %v373
        %v510 = vpop.f32.mrb[0].mxu0
        %v511 = vadd.f32 %v333, %v510
        %v512 = vpop.f32.mrb[0].mxu0
        %513 = vmatprep.mubr.f32.mxu0 0.0
        %514 = vmatmul.mubr.f32.gmra.mrb[0].mxu0 %v376
        %v515 = vpop.f32.mrb[0].mxu0
        %v516 = vadd.f32 %v333, %v515
        %v517 = vpop.f32.mrb[0].mxu0
        %518 = vmatprep.mubr.f32.mxu0 0.0
        %519 = vmatmul.mubr.f32.gmra.mrb[0].mxu0 %v379
        %v520 = vpop.f32.mrb[0].mxu0
        %v521 = vadd.f32 %v333, %v520
        %v522 = vpop.f32.mrb[0].mxu0
        %523 = vmatprep.mubr.f32.mxu0 0.0
        %524 = vmatmul.mubr.f32.gmra.mrb[0].mxu0 %v382
        %v525 = vpop.f32.mrb[0].mxu0
        %v526 = vadd.f32 %v333, %v525
        %v527 = vpop.f32.mrb[0].mxu0
        %528 = vdwg.mxu0
        %545 = vrot.lane.b32.xlu0 %v451, 96
        %v546 = vpop.permute.xlu0 %545
        %547 = vrot.lane.b32.xlu0 %v456, 96
        %v548 = vpop.permute.xlu0 %547
        %549 = vrot.lane.b32.xlu0 %v461, 96
        %v550 = vpop.permute.xlu0 %549
        %551 = vrot.lane.b32.xlu0 %v466, 96
        %v552 = vpop.permute.xlu0 %551
        %553 = vrot.lane.b32.xlu0 %v471, 96
        %v554 = vpop.permute.xlu0 %553
        %555 = vrot.lane.b32.xlu0 %v476, 96
        %v556 = vpop.permute.xlu0 %555
        %557 = vrot.lane.b32.xlu0 %v481, 96
        %v558 = vpop.permute.xlu0 %557
        %559 = vrot.lane.b32.xlu0 %v486, 96
        %v560 = vpop.permute.xlu0 %559
        %561 = vrot.lane.b32.xlu0 %v491, 96
        %v562 = vpop.permute.xlu0 %561
        %563 = vrot.lane.b32.xlu0 %v496, 96
        %v564 = vpop.permute.xlu0 %563
        %565 = vrot.lane.b32.xlu0 %v501, 96
        %v566 = vpop.permute.xlu0 %565
        %567 = vrot.lane.b32.xlu0 %v506, 96
        %v568 = vpop.permute.xlu0 %567
        %569 = vrot.lane.b32.xlu0 %v511, 96
        %v570 = vpop.permute.xlu0 %569
        %571 = vrot.lane.b32.xlu0 %v516, 96
        %v572 = vpop.permute.xlu0 %571
        %573 = vrot.lane.b32.xlu0 %v521, 96
        %v574 = vpop.permute.xlu0 %573
        %575 = vrot.lane.b32.xlu0 %v526, 96
        %v576 = vpop.permute.xlu0 %575
        %vm577 = vcmask 64512
        %v578 = vsel %vm577, %v451, 0
        %v580 = vsel %vm577, %v456, 0
        %v582 = vsel %vm577, %v461, 0
        %v584 = vsel %vm577, %v466, 0
        %v586 = vsel %vm577, %v471, 0
        %v588 = vsel %vm577, %v476, 0
        %v590 = vsel %vm577, %v481, 0
        %v592 = vsel %vm577, %v486, 0
        %v594 = vsel %vm577, %v491, 0
        %v596 = vsel %vm577, %v496, 0
        %v598 = vsel %vm577, %v501, 0
        %v600 = vsel %vm577, %v506, 0
        %v602 = vsel %vm577, %v511, 0
        %v604 = vsel %vm577, %v516, 0
        %v606 = vsel %vm577, %v521, 0
        %v608 = vsel %vm577, %v526, 0
        %v610 = vsel %vm577, %v546, 0
        %v612 = vsel %vm577, %v548, 0
        %v614 = vsel %vm577, %v550, 0
        %v616 = vsel %vm577, %v552, 0
        %v618 = vsel %vm577, %v554, 0
        %v620 = vsel %vm577, %v556, 0
        %v622 = vsel %vm577, %v558, 0
        %v624 = vsel %vm577, %v560, 0
        %v626 = vsel %vm577, %v562, 0
        %v628 = vsel %vm577, %v564, 0
        %v630 = vsel %vm577, %v566, 0
        %v632 = vsel %vm577, %v568, 0
        %v634 = vsel %vm577, %v570, 0
        %v636 = vsel %vm577, %v572, 0
        %v638 = vsel %vm577, %v574, 0
        %v640 = vsel %vm577, %v576, 0
        %642 = vmatprep.subr.mxu0 0.0
        %643 = vmatpush1.xpose.msra.mxu0 %v610
        %644 = vmatprep.subr.mxu0 0.0
        %645 = vmatpush1.xpose.msra.mxu0 %v612
        %646 = vmatprep.subr.mxu0 0.0
        %647 = vmatpush1.xpose.msra.mxu0 %v614
        %648 = vmatprep.subr.mxu0 0.0
        %649 = vmatpush1.xpose.msra.mxu0 %v616
        %650 = vmatprep.subr.mxu0 0.0
        %651 = vmatpush1.xpose.msra.mxu0 %v618
        %652 = vmatprep.subr.mxu0 0.0
        %653 = vmatpush1.xpose.msra.mxu0 %v620
        %654 = vmatprep.subr.mxu0 0.0
        %655 = vmatpush1.xpose.msra.mxu0 %v622
        %656 = vmatprep.subr.mxu0 0.0
        %657 = vmatpush1.xpose.msra.mxu0 %v624
        %658 = vmatprep.subr.mxu0 0.0
        %659 = vmatpush1.xpose.msra.mxu0 %v626
        %660 = vmatprep.subr.mxu0 0.0
        %661 = vmatpush1.xpose.msra.mxu0 %v628
        %662 = vmatprep.subr.mxu0 0.0
        %663 = vmatpush1.xpose.msra.mxu0 %v630
        %664 = vmatprep.subr.mxu0 0.0
        %665 = vmatpush1.xpose.msra.mxu0 %v632
        %666 = vmatprep.subr.mxu0 0.0
        %667 = vmatpush1.xpose.msra.mxu0 %v634
        %668 = vmatprep.subr.mxu0 0.0
        %669 = vmatpush1.xpose.msra.mxu0 %v636
        %670 = vmatprep.subr.mxu0 0.0
        %671 = vmatpush1.xpose.msra.mxu0 %v638
        %672 = vmatprep.subr.mxu0 0.0
        %673 = vmatpush1.xpose.msra.mxu0 %v640
        %674 = vmatprep.subr.mxu0 0.0
        %675 = vmatpush1.xpose.msra.mxu0 0.0
        %676 = vmatprep.subr.mxu0 0.0
        %677 = vmatpush1.xpose.msra.mxu0 0.0
        %678 = vmatprep.subr.mxu0 0.0
        %679 = vmatpush1.xpose.msra.mxu0 0.0
        %680 = vmatprep.subr.mxu0 0.0
        %681 = vmatpush1.xpose.msra.mxu0 0.0
        %682 = vmatprep.subr.mxu0 0.0
        %683 = vmatpush1.xpose.msra.mxu0 0.0
        %684 = vmatprep.subr.mxu0 0.0
        %685 = vmatpush1.xpose.msra.mxu0 0.0
        %686 = vmatprep.subr.mxu0 0.0
        %687 = vmatpush1.xpose.msra.mxu0 0.0
        %688 = vmatprep.subr.mxu0 0.0
        %689 = vmatpush1.xpose.msra.mxu0 0.0
        %690 = vmatprep.subr.mxu0 0.0
        %691 = vmatpush1.xpose.msra.mxu0 0.0
        %692 = vmatprep.subr.mxu0 0.0
        %693 = vmatpush1.xpose.msra.mxu0 0.0
        %694 = vmatprep.subr.mxu0 0.0
        %695 = vmatpush1.xpose.msra.mxu0 0.0
        %696 = vmatprep.subr.mxu0 0.0
        %697 = vmatpush1.xpose.msra.mxu0 0.0
        %698 = vmatprep.subr.mxu0 0.0
        %699 = vmatpush1.xpose.msra.mxu0 0.0
        %700 = vmatprep.subr.mxu0 0.0
        %701 = vmatpush1.xpose.msra.mxu0 0.0
        %702 = vmatprep.subr.mxu0 0.0
        %703 = vmatpush1.xpose.msra.mxu0 0.0
        %704 = vmatprep.subr.mxu0 0.0
        %705 = vmatpush1.xpose.msra.mxu0 0.0
        %706 = vmatprep.mubr.f32.mxu0 0.0
        %707 = vmatmul.mubr.f32.gmra.mrb[0].mxu0 %v578
        %v708 = vpop.f32.mrb[0].mxu0
        %v709 = vadd.f32 0.0, %v708
        %v710 = vpop.f32.mrb[0].mxu0
        %711 = vmatprep.mubr.f32.mxu0 0.0
        %712 = vmatmul.mubr.f32.gmra.mrb[0].mxu0 %v580
        %v713 = vpop.f32.mrb[0].mxu0
        %v714 = vadd.f32 0.0, %v713
        %v715 = vpop.f32.mrb[0].mxu0
        %716 = vmatprep.mubr.f32.mxu0 0.0
        %717 = vmatmul.mubr.f32.gmra.mrb[0].mxu0 %v582
        %v718 = vpop.f32.mrb[0].mxu0
        %v719 = vadd.f32 0.0, %v718
        %v720 = vpop.f32.mrb[0].mxu0
        %721 = vmatprep.mubr.f32.mxu0 0.0
        %722 = vmatmul.mubr.f32.gmra.mrb[0].mxu0 %v584
        %v723 = vpop.f32.mrb[0].mxu0
        %v724 = vadd.f32 0.0, %v723
        %v725 = vpop.f32.mrb[0].mxu0
        %726 = vmatprep.mubr.f32.mxu0 0.0
        %727 = vmatmul.mubr.f32.gmra.mrb[0].mxu0 %v586
        %v728 = vpop.f32.mrb[0].mxu0
        %v729 = vadd.f32 0.0, %v728
        %v730 = vpop.f32.mrb[0].mxu0
        %731 = vmatprep.mubr.f32.mxu0 0.0
        %732 = vmatmul.mubr.f32.gmra.mrb[0].mxu0 %v588
        %v733 = vpop.f32.mrb[0].mxu0
        %v734 = vadd.f32 0.0, %v733
        %v735 = vpop.f32.mrb[0].mxu0
        %736 = vmatprep.mubr.f32.mxu0 0.0
        %737 = vmatmul.mubr.f32.gmra.mrb[0].mxu0 %v590
        %v738 = vpop.f32.mrb[0].mxu0
        %v739 = vadd.f32 0.0, %v738
        %v740 = vpop.f32.mrb[0].mxu0
        %741 = vmatprep.mubr.f32.mxu0 0.0
        %742 = vmatmul.mubr.f32.gmra.mrb[0].mxu0 %v592
        %v743 = vpop.f32.mrb[0].mxu0
        %v744 = vadd.f32 0.0, %v743
        %v745 = vpop.f32.mrb[0].mxu0
        %746 = vmatprep.mubr.f32.mxu0 0.0
        %747 = vmatmul.mubr.f32.gmra.mrb[0].mxu0 %v594
        %v748 = vpop.f32.mrb[0].mxu0
        %v749 = vadd.f32 0.0, %v748
        %v750 = vpop.f32.mrb[0].mxu0
        %751 = vmatprep.mubr.f32.mxu0 0.0
        %752 = vmatmul.mubr.f32.gmra.mrb[0].mxu0 %v596
        %v753 = vpop.f32.mrb[0].mxu0
        %v754 = vadd.f32 0.0, %v753
        %v755 = vpop.f32.mrb[0].mxu0
        %756 = vmatprep.mubr.f32.mxu0 0.0
        %757 = vmatmul.mubr.f32.gmra.mrb[0].mxu0 %v598
        %v758 = vpop.f32.mrb[0].mxu0
        %v759 = vadd.f32 0.0, %v758
        %v760 = vpop.f32.mrb[0].mxu0
        %761 = vmatprep.mubr.f32.mxu0 0.0
        %762 = vmatmul.mubr.f32.gmra.mrb[0].mxu0 %v600
        %v763 = vpop.f32.mrb[0].mxu0
        %v764 = vadd.f32 0.0, %v763
        %v765 = vpop.f32.mrb[0].mxu0
        %766 = vmatprep.mubr.f32.mxu0 0.0
        %767 = vmatmul.mubr.f32.gmra.mrb[0].mxu0 %v602
        %v768 = vpop.f32.mrb[0].mxu0
        %v769 = vadd.f32 0.0, %v768
        %v770 = vpop.f32.mrb[0].mxu0
        %771 = vmatprep.mubr.f32.mxu0 0.0
        %772 = vmatmul.mubr.f32.gmra.mrb[0].mxu0 %v604
        %v773 = vpop.f32.mrb[0].mxu0
        %v774 = vadd.f32 0.0, %v773
        %v775 = vpop.f32.mrb[0].mxu0
        %776 = vmatprep.mubr.f32.mxu0 0.0
        %777 = vmatmul.mubr.f32.gmra.mrb[0].mxu0 %v606
        %v778 = vpop.f32.mrb[0].mxu0
        %v779 = vadd.f32 0.0, %v778
        %v780 = vpop.f32.mrb[0].mxu0
        %781 = vmatprep.mubr.f32.mxu0 0.0
        %782 = vmatmul.mubr.f32.gmra.mrb[0].mxu0 %v608
        %v783 = vpop.f32.mrb[0].mxu0
        %v784 = vadd.f32 0.0, %v783
        %v785 = vpop.f32.mrb[0].mxu0
        %786 = vdwg.mxu0
        %v787 = vmul.f32 %v709, 0.35355338
        %v788 = vmul.f32 %v714, 0.35355338
        %v789 = vmul.f32 %v719, 0.35355338
        %v790 = vmul.f32 %v724, 0.35355338
        %v791 = vmul.f32 %v729, 0.35355338
        %v792 = vmul.f32 %v734, 0.35355338
        %v793 = vmul.f32 %v739, 0.35355338
        %v794 = vmul.f32 %v744, 0.35355338
        %v795 = vmul.f32 %v749, 0.35355338
        %v796 = vmul.f32 %v754, 0.35355338
        %v797 = vmul.f32 %v759, 0.35355338
        %v798 = vmul.f32 %v764, 0.35355338
        %v799 = vmul.f32 %v769, 0.35355338
        %v800 = vmul.f32 %v774, 0.35355338
        %v801 = vmul.f32 %v779, 0.35355338
        %v802 = vmul.f32 %v784, 0.35355338
        %v803 = vld [vmem:[%s1] sm:$0x1]
        %v805 = vlaneseq
        %v806 = vshrl.u32 %v805, 7
        %v807 = vsub.s32 0, %v806
        %v808 = vrot.slane %v803, %v807
        %v810 = vadd.f32 %v787, %v808
        %v811 = vadd.f32 %v788, %v808
        %v812 = vadd.f32 %v789, %v808
        %v813 = vadd.f32 %v790, %v808
        %v814 = vadd.f32 %v791, %v808
        %v815 = vadd.f32 %v792, %v808
        %v816 = vadd.f32 %v793, %v808
        %v817 = vadd.f32 %v794, %v808
        %v818 = vadd.f32 %v795, %v808
        %v819 = vadd.f32 %v796, %v808
        %v820 = vadd.f32 %v797, %v808
        %v821 = vadd.f32 %v798, %v808
        %v822 = vadd.f32 %v799, %v808
        %v823 = vadd.f32 %v800, %v808
        %v824 = vadd.f32 %v801, %v808
        %v825 = vadd.f32 %v802, %v808
        %826 = vmax.xlane.f32.xlu0 %v810
        %v827 = vpop.xlane.xlu0 %826
        %828 = vmax.xlane.f32.xlu0 %v811
        %v829 = vpop.xlane.xlu0 %828
        %830 = vmax.xlane.f32.xlu0 %v812
        %v831 = vpop.xlane.xlu0 %830
        %832 = vmax.xlane.f32.xlu0 %v813
        %v833 = vpop.xlane.xlu0 %832
        %834 = vmax.xlane.f32.xlu0 %v814
        %v835 = vpop.xlane.xlu0 %834
        %836 = vmax.xlane.f32.xlu0 %v815
        %v837 = vpop.xlane.xlu0 %836
        %838 = vmax.xlane.f32.xlu0 %v816
        %v839 = vpop.xlane.xlu0 %838
        %840 = vmax.xlane.f32.xlu0 %v817
        %v841 = vpop.xlane.xlu0 %840
        %842 = vmax.xlane.f32.xlu0 %v818
        %v843 = vpop.xlane.xlu0 %842
        %844 = vmax.xlane.f32.xlu0 %v819
        %v845 = vpop.xlane.xlu0 %844
        %846 = vmax.xlane.f32.xlu0 %v820
        %v847 = vpop.xlane.xlu0 %846
        %848 = vmax.xlane.f32.xlu0 %v821
        %v849 = vpop.xlane.xlu0 %848
        %850 = vmax.xlane.f32.xlu0 %v822
        %v851 = vpop.xlane.xlu0 %850
        %852 = vmax.xlane.f32.xlu0 %v823
        %v853 = vpop.xlane.xlu0 %852
        %854 = vmax.xlane.f32.xlu0 %v824
        %v855 = vpop.xlane.xlu0 %854
        %856 = vmax.xlane.f32.xlu0 %v825
        %v857 = vpop.xlane.xlu0 %856
        %v858 = vsub.f32 %v810, %v827
        %v859 = vsub.f32 %v811, %v829
        %v860 = vsub.f32 %v812, %v831
        %v861 = vsub.f32 %v813, %v833
        %v862 = vsub.f32 %v814, %v835
        %v863 = vsub.f32 %v815, %v837
        %v864 = vsub.f32 %v816, %v839
        %v865 = vsub.f32 %v817, %v841
        %v866 = vsub.f32 %v818, %v843
        %v867 = vsub.f32 %v819, %v845
        %v868 = vsub.f32 %v820, %v847
        %v869 = vsub.f32 %v821, %v849
        %v870 = vsub.f32 %v822, %v851
        %v871 = vsub.f32 %v823, %v853
        %v872 = vsub.f32 %v824, %v855
        %v873 = vsub.f32 %v825, %v857
        %v874 = vmul.f32 %v858, 1.442695
        %v875 = vpow.pop %v874
        %v876 = vmul.f32 %v859, 1.442695
        %v877 = vpow.pop %v876
        %v878 = vmul.f32 %v860, 1.442695
        %v879 = vpow.pop %v878
        %v880 = vmul.f32 %v861, 1.442695
        %v881 = vpow.pop %v880
        %v882 = vmul.f32 %v862, 1.442695
        %v883 = vpow.pop %v882
        %v884 = vmul.f32 %v863, 1.442695
        %v885 = vpow.pop %v884
        %v886 = vmul.f32 %v864, 1.442695
        %v887 = vpow.pop %v886
        %v888 = vmul.f32 %v865, 1.442695
        %v889 = vpow.pop %v888
        %v890 = vmul.f32 %v866, 1.442695
        %v891 = vpow.pop %v890
        %v892 = vmul.f32 %v867, 1.442695
        %v893 = vpow.pop %v892
        %v894 = vmul.f32 %v868, 1.442695
        %v895 = vpow.pop %v894
        %v896 = vmul.f32 %v869, 1.442695
        %v897 = vpow.pop %v896
        %v898 = vmul.f32 %v870, 1.442695
        %v899 = vpow.pop %v898
        %v900 = vmul.f32 %v871, 1.442695
        %v901 = vpow.pop %v900
        %v902 = vmul.f32 %v872, 1.442695
        %v903 = vpow.pop %v902
        %v904 = vmul.f32 %v873, 1.442695
        %v905 = vpow.pop %v904
        %906 = vadd.xlane.f32.xlu0 %v875
        %v907 = vpop.xlane.xlu0 %906
        %908 = vadd.xlane.f32.xlu0 %v877
        %v909 = vpop.xlane.xlu0 %908
        %910 = vadd.xlane.f32.xlu0 %v879
        %v911 = vpop.xlane.xlu0 %910
        %912 = vadd.xlane.f32.xlu0 %v881
        %v913 = vpop.xlane.xlu0 %912
        %914 = vadd.xlane.f32.xlu0 %v883
        %v915 = vpop.xlane.xlu0 %914
        %916 = vadd.xlane.f32.xlu0 %v885
        %v917 = vpop.xlane.xlu0 %916
        %918 = vadd.xlane.f32.xlu0 %v887
        %v919 = vpop.xlane.xlu0 %918
        %920 = vadd.xlane.f32.xlu0 %v889
        %v921 = vpop.xlane.xlu0 %920
        %922 = vadd.xlane.f32.xlu0 %v891
        %v923 = vpop.xlane.xlu0 %922
        %924 = vadd.xlane.f32.xlu0 %v893
        %v925 = vpop.xlane.xlu0 %924
        %926 = vadd.xlane.f32.xlu0 %v895
        %v927 = vpop.xlane.xlu0 %926
        %928 = vadd.xlane.f32.xlu0 %v897
        %v929 = vpop.xlane.xlu0 %928
        %930 = vadd.xlane.f32.xlu0 %v899
        %v931 = vpop.xlane.xlu0 %930
        %932 = vadd.xlane.f32.xlu0 %v901
        %v933 = vpop.xlane.xlu0 %932
        %934 = vadd.xlane.f32.xlu0 %v903
        %v935 = vpop.xlane.xlu0 %934
        %936 = vadd.xlane.f32.xlu0 %v905
        %v937 = vpop.xlane.xlu0 %936
        %v938 = vrcp.pop %v907
        %v939 = vrcp.pop %v909
        %v940 = vrcp.pop %v911
        %v941 = vrcp.pop %v913
        %v942 = vrcp.pop %v915
        %v943 = vrcp.pop %v917
        %v944 = vrcp.pop %v919
        %v945 = vrcp.pop %v921
        %v946 = vrcp.pop %v923
        %v947 = vrcp.pop %v925
        %v948 = vrcp.pop %v927
        %v949 = vrcp.pop %v929
        %v950 = vrcp.pop %v931
        %v951 = vrcp.pop %v933
        %v952 = vrcp.pop %v935
        %v953 = vrcp.pop %v937
        %v954 = vmul.f32 %v875, %v938
        %v955 = vmul.f32 %v877, %v939
        %v956 = vmul.f32 %v879, %v940
        %v957 = vmul.f32 %v881, %v941
        %v958 = vmul.f32 %v883, %v942
        %v959 = vmul.f32 %v885, %v943
        %v960 = vmul.f32 %v887, %v944
        %v961 = vmul.f32 %v889, %v945
        %v962 = vmul.f32 %v891, %v946
        %v963 = vmul.f32 %v893, %v947
        %v964 = vmul.f32 %v895, %v948
        %v965 = vmul.f32 %v897, %v949
        %v966 = vmul.f32 %v899, %v950
        %v967 = vmul.f32 %v901, %v951
        %v968 = vmul.f32 %v903, %v952
        %v969 = vmul.f32 %v905, %v953
        %970 = vst [vmem:[%s293] sm:$0xff] %v954
        %971 = vst [vmem:[%s293 + $0x8] sm:$0xff] %v955
        %972 = vst [vmem:[%s293 + $0x10] sm:$0xff] %v956
        %973 = vst [vmem:[%s293 + $0x18] sm:$0xff] %v957
        %974 = vst [vmem:[%s293 + $0x20] sm:$0xff] %v958
        %975 = vst [vmem:[%s293 + $0x28] sm:$0xff] %v959
        %976 = vst [vmem:[%s293 + $0x30] sm:$0xff] %v960
        %977 = vst [vmem:[%s293 + $0x38] sm:$0xff] %v961
        %978 = vst [vmem:[%s293 + $0x40] sm:$0xff] %v962
        %979 = vst [vmem:[%s293 + $0x48] sm:$0xff] %v963
        %980 = vst [vmem:[%s293 + $0x50] sm:$0xff] %v964
        %981 = vst [vmem:[%s293 + $0x58] sm:$0xff] %v965
        %982 = vst [vmem:[%s293 + $0x60] sm:$0xff] %v966
        %983 = vst [vmem:[%s293 + $0x68] sm:$0xff] %v967
        %984 = vst [vmem:[%s293 + $0x70] sm:$0xff] %v968
        %985 = vst [vmem:[%s293 + $0x78] sm:$0xff] %v969
        %986 = vrot.lane.b32.xlu0 %v451, 64
        %v987 = vpop.permute.xlu0 %986
        %988 = vrot.lane.b32.xlu0 %v456, 64
        %v989 = vpop.permute.xlu0 %988
        %990 = vrot.lane.b32.xlu0 %v461, 64
        %v991 = vpop.permute.xlu0 %990
        %992 = vrot.lane.b32.xlu0 %v466, 64
        %v993 = vpop.permute.xlu0 %992
        %994 = vrot.lane.b32.xlu0 %v471, 64
        %v995 = vpop.permute.xlu0 %994
        %996 = vrot.lane.b32.xlu0 %v476, 64
        %v997 = vpop.permute.xlu0 %996
        %998 = vrot.lane.b32.xlu0 %v481, 64
        %v999 = vpop.permute.xlu0 %998
        %1000 = vrot.lane.b32.xlu0 %v486, 64
        %v1001 = vpop.permute.xlu0 %1000
        %1002 = vrot.lane.b32.xlu0 %v491, 64
        %v1003 = vpop.permute.xlu0 %1002
        %1004 = vrot.lane.b32.xlu0 %v496, 64
        %v1005 = vpop.permute.xlu0 %1004
        %1006 = vrot.lane.b32.xlu0 %v501, 64
        %v1007 = vpop.permute.xlu0 %1006
        %1008 = vrot.lane.b32.xlu0 %v506, 64
        %v1009 = vpop.permute.xlu0 %1008
        %1010 = vrot.lane.b32.xlu0 %v511, 64
        %v1011 = vpop.permute.xlu0 %1010
        %1012 = vrot.lane.b32.xlu0 %v516, 64
        %v1013 = vpop.permute.xlu0 %1012
        %1014 = vrot.lane.b32.xlu0 %v521, 64
        %v1015 = vpop.permute.xlu0 %1014
        %1016 = vrot.lane.b32.xlu0 %v526, 64
        %v1017 = vpop.permute.xlu0 %1016
        %1034 = vmatprep.subr.mxu0 0.0
        %1035 = vmatpush1.msra.mxu0 %v987
        %1036 = vmatprep.subr.mxu0 0.0
        %1037 = vmatpush1.msra.mxu0 %v989
        %1038 = vmatprep.subr.mxu0 0.0
        %1039 = vmatpush1.msra.mxu0 %v991
        %1040 = vmatprep.subr.mxu0 0.0
        %1041 = vmatpush1.msra.mxu0 %v993
        %1042 = vmatprep.subr.mxu0 0.0
        %1043 = vmatpush1.msra.mxu0 %v995
        %1044 = vmatprep.subr.mxu0 0.0
        %1045 = vmatpush1.msra.mxu0 %v997
        %1046 = vmatprep.subr.mxu0 0.0
        %1047 = vmatpush1.msra.mxu0 %v999
        %1048 = vmatprep.subr.mxu0 0.0
        %1049 = vmatpush1.msra.mxu0 %v1001
        %1050 = vmatprep.subr.mxu0 0.0
        %1051 = vmatpush1.msra.mxu0 %v1003
        %1052 = vmatprep.subr.mxu0 0.0
        %1053 = vmatpush1.msra.mxu0 %v1005
        %1054 = vmatprep.subr.mxu0 0.0
        %1055 = vmatpush1.msra.mxu0 %v1007
        %1056 = vmatprep.subr.mxu0 0.0
        %1057 = vmatpush1.msra.mxu0 %v1009
        %1058 = vmatprep.subr.mxu0 0.0
        %1059 = vmatpush1.msra.mxu0 %v1011
        %1060 = vmatprep.subr.mxu0 0.0
        %1061 = vmatpush1.msra.mxu0 %v1013
        %1062 = vmatprep.subr.mxu0 0.0
        %1063 = vmatpush1.msra.mxu0 %v1015
        %1064 = vmatprep.subr.mxu0 0.0
        %1065 = vmatpush1.msra.mxu0 %v1017
        %1066 = vmatprep.subr.mxu0 0.0
        %1067 = vmatpush1.msra.mxu0 0.0
        %1068 = vmatprep.subr.mxu0 0.0
        %1069 = vmatpush1.msra.mxu0 0.0
        %1070 = vmatprep.subr.mxu0 0.0
        %1071 = vmatpush1.msra.mxu0 0.0
        %1072 = vmatprep.subr.mxu0 0.0
        %1073 = vmatpush1.msra.mxu0 0.0
        %1074 = vmatprep.subr.mxu0 0.0
        %1075 = vmatpush1.msra.mxu0 0.0
        %1076 = vmatprep.subr.mxu0 0.0
        %1077 = vmatpush1.msra.mxu0 0.0
        %1078 = vmatprep.subr.mxu0 0.0
        %1079 = vmatpush1.msra.mxu0 0.0
        %1080 = vmatprep.subr.mxu0 0.0
        %1081 = vmatpush1.msra.mxu0 0.0
        %1082 = vmatprep.subr.mxu0 0.0
        %1083 = vmatpush1.msra.mxu0 0.0
        %1084 = vmatprep.subr.mxu0 0.0
        %1085 = vmatpush1.msra.mxu0 0.0
        %1086 = vmatprep.subr.mxu0 0.0
        %1087 = vmatpush1.msra.mxu0 0.0
        %1088 = vmatprep.subr.mxu0 0.0
        %1089 = vmatpush1.msra.mxu0 0.0
        %1090 = vmatprep.subr.mxu0 0.0
        %1091 = vmatpush1.msra.mxu0 0.0
        %1092 = vmatprep.subr.mxu0 0.0
        %1093 = vmatpush1.msra.mxu0 0.0
        %1094 = vmatprep.subr.mxu0 0.0
        %1095 = vmatpush1.msra.mxu0 0.0
        %1096 = vmatprep.subr.mxu0 0.0
        %1097 = vmatpush1.msra.mxu0 0.0
        %1098 = vmatprep.mubr.f32.mxu0 0.0
        %1099 = vmatmul.mubr.f32.gmra.mrb[0].mxu0 %v954
        %v1100 = vpop.f32.mrb[0].mxu0
        %v1101 = vadd.f32 0.0, %v1100
        %v1102 = vpop.f32.mrb[0].mxu0
        %1103 = vmatprep.mubr.f32.mxu0 0.0
        %1104 = vmatmul.mubr.f32.gmra.mrb[0].mxu0 %v955
        %v1105 = vpop.f32.mrb[0].mxu0
        %v1106 = vadd.f32 0.0, %v1105
        %v1107 = vpop.f32.mrb[0].mxu0
        %1108 = vmatprep.mubr.f32.mxu0 0.0
        %1109 = vmatmul.mubr.f32.gmra.mrb[0].mxu0 %v956
        %v1110 = vpop.f32.mrb[0].mxu0
        %v1111 = vadd.f32 0.0, %v1110
        %v1112 = vpop.f32.mrb[0].mxu0
        %1113 = vmatprep.mubr.f32.mxu0 0.0
        %1114 = vmatmul.mubr.f32.gmra.mrb[0].mxu0 %v957
        %v1115 = vpop.f32.mrb[0].mxu0
        %v1116 = vadd.f32 0.0, %v1115
        %v1117 = vpop.f32.mrb[0].mxu0
        %1118 = vmatprep.mubr.f32.mxu0 0.0
        %1119 = vmatmul.mubr.f32.gmra.mrb[0].mxu0 %v958
        %v1120 = vpop.f32.mrb[0].mxu0
        %v1121 = vadd.f32 0.0, %v1120
        %v1122 = vpop.f32.mrb[0].mxu0
        %1123 = vmatprep.mubr.f32.mxu0 0.0
        %1124 = vmatmul.mubr.f32.gmra.mrb[0].mxu0 %v959
        %v1125 = vpop.f32.mrb[0].mxu0
        %v1126 = vadd.f32 0.0, %v1125
        %v1127 = vpop.f32.mrb[0].mxu0
        %1128 = vmatprep.mubr.f32.mxu0 0.0
        %1129 = vmatmul.mubr.f32.gmra.mrb[0].mxu0 %v960
        %v1130 = vpop.f32.mrb[0].mxu0
        %v1131 = vadd.f32 0.0, %v1130
        %v1132 = vpop.f32.mrb[0].mxu0
        %1133 = vmatprep.mubr.f32.mxu0 0.0
        %1134 = vmatmul.mubr.f32.gmra.mrb[0].mxu0 %v961
        %v1135 = vpop.f32.mrb[0].mxu0
        %v1136 = vadd.f32 0.0, %v1135
        %v1137 = vpop.f32.mrb[0].mxu0
        %1138 = vmatprep.mubr.f32.mxu0 0.0
        %1139 = vmatmul.mubr.f32.gmra.mrb[0].mxu0 %v962
        %v1140 = vpop.f32.mrb[0].mxu0
        %v1141 = vadd.f32 0.0, %v1140
        %v1142 = vpop.f32.mrb[0].mxu0
        %1143 = vmatprep.mubr.f32.mxu0 0.0
        %1144 = vmatmul.mubr.f32.gmra.mrb[0].mxu0 %v963
        %v1145 = vpop.f32.mrb[0].mxu0
        %v1146 = vadd.f32 0.0, %v1145
        %v1147 = vpop.f32.mrb[0].mxu0
        %1148 = vmatprep.mubr.f32.mxu0 0.0
        %1149 = vmatmul.mubr.f32.gmra.mrb[0].mxu0 %v964
        %v1150 = vpop.f32.mrb[0].mxu0
        %v1151 = vadd.f32 0.0, %v1150
        %v1152 = vpop.f32.mrb[0].mxu0
        %1153 = vmatprep.mubr.f32.mxu0 0.0
        %1154 = vmatmul.mubr.f32.gmra.mrb[0].mxu0 %v965
        %v1155 = vpop.f32.mrb[0].mxu0
        %v1156 = vadd.f32 0.0, %v1155
        %v1157 = vpop.f32.mrb[0].mxu0
        %1158 = vmatprep.mubr.f32.mxu0 0.0
        %1159 = vmatmul.mubr.f32.gmra.mrb[0].mxu0 %v966
        %v1160 = vpop.f32.mrb[0].mxu0
        %v1161 = vadd.f32 0.0, %v1160
        %v1162 = vpop.f32.mrb[0].mxu0
        %1163 = vmatprep.mubr.f32.mxu0 0.0
        %1164 = vmatmul.mubr.f32.gmra.mrb[0].mxu0 %v967
        %v1165 = vpop.f32.mrb[0].mxu0
        %v1166 = vadd.f32 0.0, %v1165
        %v1167 = vpop.f32.mrb[0].mxu0
        %1168 = vmatprep.mubr.f32.mxu0 0.0
        %1169 = vmatmul.mubr.f32.gmra.mrb[0].mxu0 %v968
        %v1170 = vpop.f32.mrb[0].mxu0
        %v1171 = vadd.f32 0.0, %v1170
        %v1172 = vpop.f32.mrb[0].mxu0
        %1173 = vmatprep.mubr.f32.mxu0 0.0
        %1174 = vmatmul.mubr.f32.gmra.mrb[0].mxu0 %v969
        %v1175 = vpop.f32.mrb[0].mxu0
        %v1176 = vadd.f32 0.0, %v1175
        %v1177 = vpop.f32.mrb[0].mxu0
        %1178 = vdwg.mxu0
        %1179 = vrot.lane.b32.xlu0 %v451, 120
        %v1180 = vpop.permute.xlu0 %1179
        %1181 = vrot.lane.b32.xlu0 %v456, 120
        %v1182 = vpop.permute.xlu0 %1181
        %1183 = vrot.lane.b32.xlu0 %v461, 120
        %v1184 = vpop.permute.xlu0 %1183
        %1185 = vrot.lane.b32.xlu0 %v466, 120
        %v1186 = vpop.permute.xlu0 %1185
        %1187 = vrot.lane.b32.xlu0 %v471, 120
        %v1188 = vpop.permute.xlu0 %1187
        %1189 = vrot.lane.b32.xlu0 %v476, 120
        %v1190 = vpop.permute.xlu0 %1189
        %1191 = vrot.lane.b32.xlu0 %v481, 120
        %v1192 = vpop.permute.xlu0 %1191
        %1193 = vrot.lane.b32.xlu0 %v486, 120
        %v1194 = vpop.permute.xlu0 %1193
        %1195 = vrot.lane.b32.xlu0 %v491, 120
        %v1196 = vpop.permute.xlu0 %1195
        %1197 = vrot.lane.b32.xlu0 %v496, 120
        %v1198 = vpop.permute.xlu0 %1197
        %1199 = vrot.lane.b32.xlu0 %v501, 120
        %v1200 = vpop.permute.xlu0 %1199
        %1201 = vrot.lane.b32.xlu0 %v506, 120
        %v1202 = vpop.permute.xlu0 %1201
        %1203 = vrot.lane.b32.xlu0 %v511, 120
        %v1204 = vpop.permute.xlu0 %1203
        %1205 = vrot.lane.b32.xlu0 %v516, 120
        %v1206 = vpop.permute.xlu0 %1205
        %1207 = vrot.lane.b32.xlu0 %v521, 120
        %v1208 = vpop.permute.xlu0 %1207
        %1209 = vrot.lane.b32.xlu0 %v526, 120
        %v1210 = vpop.permute.xlu0 %1209
        %1211 = vrot.lane.b32.xlu0 %v451, 88
        %v1212 = vpop.permute.xlu0 %1211
        %1213 = vrot.lane.b32.xlu0 %v456, 88
        %v1214 = vpop.permute.xlu0 %1213
        %1215 = vrot.lane.b32.xlu0 %v461, 88
        %v1216 = vpop.permute.xlu0 %1215
        %1217 = vrot.lane.b32.xlu0 %v466, 88
        %v1218 = vpop.permute.xlu0 %1217
        %1219 = vrot.lane.b32.xlu0 %v471, 88
        %v1220 = vpop.permute.xlu0 %1219
        %1221 = vrot.lane.b32.xlu0 %v476, 88
        %v1222 = vpop.permute.xlu0 %1221
        %1223 = vrot.lane.b32.xlu0 %v481, 88
        %v1224 = vpop.permute.xlu0 %1223
        %1225 = vrot.lane.b32.xlu0 %v486, 88
        %v1226 = vpop.permute.xlu0 %1225
        %1227 = vrot.lane.b32.xlu0 %v491, 88
        %v1228 = vpop.permute.xlu0 %1227
        %1229 = vrot.lane.b32.xlu0 %v496, 88
        %v1230 = vpop.permute.xlu0 %1229
        %1231 = vrot.lane.b32.xlu0 %v501, 88
        %v1232 = vpop.permute.xlu0 %1231
        %1233 = vrot.lane.b32.xlu0 %v506, 88
        %v1234 = vpop.permute.xlu0 %1233
        %1235 = vrot.lane.b32.xlu0 %v511, 88
        %v1236 = vpop.permute.xlu0 %1235
        %1237 = vrot.lane.b32.xlu0 %v516, 88
        %v1238 = vpop.permute.xlu0 %1237
        %1239 = vrot.lane.b32.xlu0 %v521, 88
        %v1240 = vpop.permute.xlu0 %1239
        %1241 = vrot.lane.b32.xlu0 %v526, 88
        %v1242 = vpop.permute.xlu0 %1241
        %v1243 = vsel %vm577, %v1180, 0
        %v1245 = vsel %vm577, %v1182, 0
        %v1247 = vsel %vm577, %v1184, 0
        %v1249 = vsel %vm577, %v1186, 0
        %v1251 = vsel %vm577, %v1188, 0
        %v1253 = vsel %vm577, %v1190, 0
        %v1255 = vsel %vm577, %v1192, 0
        %v1257 = vsel %vm577, %v1194, 0
        %v1259 = vsel %vm577, %v1196, 0
        %v1261 = vsel %vm577, %v1198, 0
        %v1263 = vsel %vm577, %v1200, 0
        %v1265 = vsel %vm577, %v1202, 0
        %v1267 = vsel %vm577, %v1204, 0
        %v1269 = vsel %vm577, %v1206, 0
        %v1271 = vsel %vm577, %v1208, 0
        %v1273 = vsel %vm577, %v1210, 0
        %v1275 = vsel %vm577, %v1212, 0
        %v1277 = vsel %vm577, %v1214, 0
        %v1279 = vsel %vm577, %v1216, 0
        %v1281 = vsel %vm577, %v1218, 0
        %v1283 = vsel %vm577, %v1220, 0
        %v1285 = vsel %vm577, %v1222, 0
        %v1287 = vsel %vm577, %v1224, 0
        %v1289 = vsel %vm577, %v1226, 0
        %v1291 = vsel %vm577, %v1228, 0
        %v1293 = vsel %vm577, %v1230, 0
        %v1295 = vsel %vm577, %v1232, 0
        %v1297 = vsel %vm577, %v1234, 0
        %v1299 = vsel %vm577, %v1236, 0
        %v1301 = vsel %vm577, %v1238, 0
        %v1303 = vsel %vm577, %v1240, 0
        %v1305 = vsel %vm577, %v1242, 0
        %1307 = vmatprep.subr.mxu0 0.0
        %1308 = vmatpush1.xpose.msra.mxu0 %v1275
        %1309 = vmatprep.subr.mxu0 0.0
        %1310 = vmatpush1.xpose.msra.mxu0 %v1277
        %1311 = vmatprep.subr.mxu0 0.0
        %1312 = vmatpush1.xpose.msra.mxu0 %v1279
        %1313 = vmatprep.subr.mxu0 0.0
        %1314 = vmatpush1.xpose.msra.mxu0 %v1281
        %1315 = vmatprep.subr.mxu0 0.0
        %1316 = vmatpush1.xpose.msra.mxu0 %v1283
        %1317 = vmatprep.subr.mxu0 0.0
        %1318 = vmatpush1.xpose.msra.mxu0 %v1285
        %1319 = vmatprep.subr.mxu0 0.0
        %1320 = vmatpush1.xpose.msra.mxu0 %v1287
        %1321 = vmatprep.subr.mxu0 0.0
        %1322 = vmatpush1.xpose.msra.mxu0 %v1289
        %1323 = vmatprep.subr.mxu0 0.0
        %1324 = vmatpush1.xpose.msra.mxu0 %v1291
        %1325 = vmatprep.subr.mxu0 0.0
        %1326 = vmatpush1.xpose.msra.mxu0 %v1293
        %1327 = vmatprep.subr.mxu0 0.0
        %1328 = vmatpush1.xpose.msra.mxu0 %v1295
        %1329 = vmatprep.subr.mxu0 0.0
        %1330 = vmatpush1.xpose.msra.mxu0 %v1297
        %1331 = vmatprep.subr.mxu0 0.0
        %1332 = vmatpush1.xpose.msra.mxu0 %v1299
        %1333 = vmatprep.subr.mxu0 0.0
        %1334 = vmatpush1.xpose.msra.mxu0 %v1301
        %1335 = vmatprep.subr.mxu0 0.0
        %1336 = vmatpush1.xpose.msra.mxu0 %v1303
        %1337 = vmatprep.subr.mxu0 0.0
        %1338 = vmatpush1.xpose.msra.mxu0 %v1305
        %1339 = vmatprep.subr.mxu0 0.0
        %1340 = vmatpush1.xpose.msra.mxu0 0.0
        %1341 = vmatprep.subr.mxu0 0.0
        %1342 = vmatpush1.xpose.msra.mxu0 0.0
        %1343 = vmatprep.subr.mxu0 0.0
        %1344 = vmatpush1.xpose.msra.mxu0 0.0
        %1345 = vmatprep.subr.mxu0 0.0
        %1346 = vmatpush1.xpose.msra.mxu0 0.0
        %1347 = vmatprep.subr.mxu0 0.0
        %1348 = vmatpush1.xpose.msra.mxu0 0.0
        %1349 = vmatprep.subr.mxu0 0.0
        %1350 = vmatpush1.xpose.msra.mxu0 0.0
        %1351 = vmatprep.subr.mxu0 0.0
        %1352 = vmatpush1.xpose.msra.mxu0 0.0
        %1353 = vmatprep.subr.mxu0 0.0
        %1354 = vmatpush1.xpose.msra.mxu0 0.0
        %1355 = vmatprep.subr.mxu0 0.0
        %1356 = vmatpush1.xpose.msra.mxu0 0.0
        %1357 = vmatprep.subr.mxu0 0.0
        %1358 = vmatpush1.xpose.msra.mxu0 0.0
        %1359 = vmatprep.subr.mxu0 0.0
        %1360 = vmatpush1.xpose.msra.mxu0 0.0
        %1361 = vmatprep.subr.mxu0 0.0
        %1362 = vmatpush1.xpose.msra.mxu0 0.0
        %1363 = vmatprep.subr.mxu0 0.0
        %1364 = vmatpush1.xpose.msra.mxu0 0.0
        %1365 = vmatprep.subr.mxu0 0.0
        %1366 = vmatpush1.xpose.msra.mxu0 0.0
        %1367 = vmatprep.subr.mxu0 0.0
        %1368 = vmatpush1.xpose.msra.mxu0 0.0
        %1369 = vmatprep.subr.mxu0 0.0
        %1370 = vmatpush1.xpose.msra.mxu0 0.0
        %1371 = vmatprep.mubr.f32.mxu0 0.0
        %1372 = vmatmul.mubr.f32.gmra.mrb[0].mxu0 %v1243
        %v1373 = vpop.f32.mrb[0].mxu0
        %v1374 = vadd.f32 0.0, %v1373
        %v1375 = vpop.f32.mrb[0].mxu0
        %1376 = vmatprep.mubr.f32.mxu0 0.0
        %1377 = vmatmul.mubr.f32.gmra.mrb[0].mxu0 %v1245
        %v1378 = vpop.f32.mrb[0].mxu0
        %v1379 = vadd.f32 0.0, %v1378
        %v1380 = vpop.f32.mrb[0].mxu0
        %1381 = vmatprep.mubr.f32.mxu0 0.0
        %1382 = vmatmul.mubr.f32.gmra.mrb[0].mxu0 %v1247
        %v1383 = vpop.f32.mrb[0].mxu0
        %v1384 = vadd.f32 0.0, %v1383
        %v1385 = vpop.f32.mrb[0].mxu0
        %1386 = vmatprep.mubr.f32.mxu0 0.0
        %1387 = vmatmul.mubr.f32.gmra.mrb[0].mxu0 %v1249
        %v1388 = vpop.f32.mrb[0].mxu0
        %v1389 = vadd.f32 0.0, %v1388
        %v1390 = vpop.f32.mrb[0].mxu0
        %1391 = vmatprep.mubr.f32.mxu0 0.0
        %1392 = vmatmul.mubr.f32.gmra.mrb[0].mxu0 %v1251
        %v1393 = vpop.f32.mrb[0].mxu0
        %v1394 = vadd.f32 0.0, %v1393
        %v1395 = vpop.f32.mrb[0].mxu0
        %1396 = vmatprep.mubr.f32.mxu0 0.0
        %1397 = vmatmul.mubr.f32.gmra.mrb[0].mxu0 %v1253
        %v1398 = vpop.f32.mrb[0].mxu0
        %v1399 = vadd.f32 0.0, %v1398
        %v1400 = vpop.f32.mrb[0].mxu0
        %1401 = vmatprep.mubr.f32.mxu0 0.0
        %1402 = vmatmul.mubr.f32.gmra.mrb[0].mxu0 %v1255
        %v1403 = vpop.f32.mrb[0].mxu0
        %v1404 = vadd.f32 0.0, %v1403
        %v1405 = vpop.f32.mrb[0].mxu0
        %1406 = vmatprep.mubr.f32.mxu0 0.0
        %1407 = vmatmul.mubr.f32.gmra.mrb[0].mxu0 %v1257
        %v1408 = vpop.f32.mrb[0].mxu0
        %v1409 = vadd.f32 0.0, %v1408
        %v1410 = vpop.f32.mrb[0].mxu0
        %1411 = vmatprep.mubr.f32.mxu0 0.0
        %1412 = vmatmul.mubr.f32.gmra.mrb[0].mxu0 %v1259
        %v1413 = vpop.f32.mrb[0].mxu0
        %v1414 = vadd.f32 0.0, %v1413
        %v1415 = vpop.f32.mrb[0].mxu0
        %1416 = vmatprep.mubr.f32.mxu0 0.0
        %1417 = vmatmul.mubr.f32.gmra.mrb[0].mxu0 %v1261
        %v1418 = vpop.f32.mrb[0].mxu0
        %v1419 = vadd.f32 0.0, %v1418
        %v1420 = vpop.f32.mrb[0].mxu0
        %1421 = vmatprep.mubr.f32.mxu0 0.0
        %1422 = vmatmul.mubr.f32.gmra.mrb[0].mxu0 %v1263
        %v1423 = vpop.f32.mrb[0].mxu0
        %v1424 = vadd.f32 0.0, %v1423
        %v1425 = vpop.f32.mrb[0].mxu0
        %1426 = vmatprep.mubr.f32.mxu0 0.0
        %1427 = vmatmul.mubr.f32.gmra.mrb[0].mxu0 %v1265
        %v1428 = vpop.f32.mrb[0].mxu0
        %v1429 = vadd.f32 0.0, %v1428
        %v1430 = vpop.f32.mrb[0].mxu0
        %1431 = vmatprep.mubr.f32.mxu0 0.0
        %1432 = vmatmul.mubr.f32.gmra.mrb[0].mxu0 %v1267
        %v1433 = vpop.f32.mrb[0].mxu0
        %v1434 = vadd.f32 0.0, %v1433
        %v1435 = vpop.f32.mrb[0].mxu0
        %1436 = vmatprep.mubr.f32.mxu0 0.0
        %1437 = vmatmul.mubr.f32.gmra.mrb[0].mxu0 %v1269
        %v1438 = vpop.f32.mrb[0].mxu0
        %v1439 = vadd.f32 0.0, %v1438
        %v1440 = vpop.f32.mrb[0].mxu0
        %1441 = vmatprep.mubr.f32.mxu0 0.0
        %1442 = vmatmul.mubr.f32.gmra.mrb[0].mxu0 %v1271
        %v1443 = vpop.f32.mrb[0].mxu0
        %v1444 = vadd.f32 0.0, %v1443
        %v1445 = vpop.f32.mrb[0].mxu0
        %1446 = vmatprep.mubr.f32.mxu0 0.0
        %1447 = vmatmul.mubr.f32.gmra.mrb[0].mxu0 %v1273
        %v1448 = vpop.f32.mrb[0].mxu0
        %v1449 = vadd.f32 0.0, %v1448
        %v1450 = vpop.f32.mrb[0].mxu0
        %1451 = vdwg.mxu0
        %v1452 = vmul.f32 %v1374, 0.35355338
        %v1453 = vmul.f32 %v1379, 0.35355338
        %v1454 = vmul.f32 %v1384, 0.35355338
        %v1455 = vmul.f32 %v1389, 0.35355338
        %v1456 = vmul.f32 %v1394, 0.35355338
        %v1457 = vmul.f32 %v1399, 0.35355338
        %v1458 = vmul.f32 %v1404, 0.35355338
        %v1459 = vmul.f32 %v1409, 0.35355338
        %v1460 = vmul.f32 %v1414, 0.35355338
        %v1461 = vmul.f32 %v1419, 0.35355338
        %v1462 = vmul.f32 %v1424, 0.35355338
        %v1463 = vmul.f32 %v1429, 0.35355338
        %v1464 = vmul.f32 %v1434, 0.35355338
        %v1465 = vmul.f32 %v1439, 0.35355338
        %v1466 = vmul.f32 %v1444, 0.35355338
        %v1467 = vmul.f32 %v1449, 0.35355338
        %v1468 = vld [vmem:[%s1] sm:$0x1]
        %v1470 = vlaneseq
        %v1471 = vshrl.u32 %v1470, 7
        %v1472 = vsub.s32 0, %v1471
        %v1473 = vrot.slane %v1468, %v1472
        %v1475 = vadd.f32 %v1452, %v1473
        %v1476 = vadd.f32 %v1453, %v1473
        %v1477 = vadd.f32 %v1454, %v1473
        %v1478 = vadd.f32 %v1455, %v1473
        %v1479 = vadd.f32 %v1456, %v1473
        %v1480 = vadd.f32 %v1457, %v1473
        %v1481 = vadd.f32 %v1458, %v1473
        %v1482 = vadd.f32 %v1459, %v1473
        %v1483 = vadd.f32 %v1460, %v1473
        %v1484 = vadd.f32 %v1461, %v1473
        %v1485 = vadd.f32 %v1462, %v1473
        %v1486 = vadd.f32 %v1463, %v1473
        %v1487 = vadd.f32 %v1464, %v1473
        %v1488 = vadd.f32 %v1465, %v1473
        %v1489 = vadd.f32 %v1466, %v1473
        %v1490 = vadd.f32 %v1467, %v1473
        %1491 = vmax.xlane.f32.xlu0 %v1475
        %v1492 = vpop.xlane.xlu0 %1491
        %1493 = vmax.xlane.f32.xlu0 %v1476
        %v1494 = vpop.xlane.xlu0 %1493
        %1495 = vmax.xlane.f32.xlu0 %v1477
        %v1496 = vpop.xlane.xlu0 %1495
        %1497 = vmax.xlane.f32.xlu0 %v1478
        %v1498 = vpop.xlane.xlu0 %1497
        %1499 = vmax.xlane.f32.xlu0 %v1479
        %v1500 = vpop.xlane.xlu0 %1499
        %1501 = vmax.xlane.f32.xlu0 %v1480
        %v1502 = vpop.xlane.xlu0 %1501
        %1503 = vmax.xlane.f32.xlu0 %v1481
        %v1504 = vpop.xlane.xlu0 %1503
        %1505 = vmax.xlane.f32.xlu0 %v1482
        %v1506 = vpop.xlane.xlu0 %1505
        %1507 = vmax.xlane.f32.xlu0 %v1483
        %v1508 = vpop.xlane.xlu0 %1507
        %1509 = vmax.xlane.f32.xlu0 %v1484
        %v1510 = vpop.xlane.xlu0 %1509
        %1511 = vmax.xlane.f32.xlu0 %v1485
        %v1512 = vpop.xlane.xlu0 %1511
        %1513 = vmax.xlane.f32.xlu0 %v1486
        %v1514 = vpop.xlane.xlu0 %1513
        %1515 = vmax.xlane.f32.xlu0 %v1487
        %v1516 = vpop.xlane.xlu0 %1515
        %1517 = vmax.xlane.f32.xlu0 %v1488
        %v1518 = vpop.xlane.xlu0 %1517
        %1519 = vmax.xlane.f32.xlu0 %v1489
        %v1520 = vpop.xlane.xlu0 %1519
        %1521 = vmax.xlane.f32.xlu0 %v1490
        %v1522 = vpop.xlane.xlu0 %1521
        %v1523 = vsub.f32 %v1475, %v1492
        %v1524 = vsub.f32 %v1476, %v1494
        %v1525 = vsub.f32 %v1477, %v1496
        %v1526 = vsub.f32 %v1478, %v1498
        %v1527 = vsub.f32 %v1479, %v1500
        %v1528 = vsub.f32 %v1480, %v1502
        %v1529 = vsub.f32 %v1481, %v1504
        %v1530 = vsub.f32 %v1482, %v1506
        %v1531 = vsub.f32 %v1483, %v1508
        %v1532 = vsub.f32 %v1484, %v1510
        %v1533 = vsub.f32 %v1485, %v1512
        %v1534 = vsub.f32 %v1486, %v1514
        %v1535 = vsub.f32 %v1487, %v1516
        %v1536 = vsub.f32 %v1488, %v1518
        %v1537 = vsub.f32 %v1489, %v1520
        %v1538 = vsub.f32 %v1490, %v1522
        %v1539 = vmul.f32 %v1523, 1.442695
        %v1540 = vpow.pop %v1539
        %v1541 = vmul.f32 %v1524, 1.442695
        %v1542 = vpow.pop %v1541
        %v1543 = vmul.f32 %v1525, 1.442695
        %v1544 = vpow.pop %v1543
        %v1545 = vmul.f32 %v1526, 1.442695
        %v1546 = vpow.pop %v1545
        %v1547 = vmul.f32 %v1527, 1.442695
        %v1548 = vpow.pop %v1547
        %v1549 = vmul.f32 %v1528, 1.442695
        %v1550 = vpow.pop %v1549
        %v1551 = vmul.f32 %v1529, 1.442695
        %v1552 = vpow.pop %v1551
        %v1553 = vmul.f32 %v1530, 1.442695
        %v1554 = vpow.pop %v1553
        %v1555 = vmul.f32 %v1531, 1.442695
        %v1556 = vpow.pop %v1555
        %v1557 = vmul.f32 %v1532, 1.442695
        %v1558 = vpow.pop %v1557
        %v1559 = vmul.f32 %v1533, 1.442695
        %v1560 = vpow.pop %v1559
        %v1561 = vmul.f32 %v1534, 1.442695
        %v1562 = vpow.pop %v1561
        %v1563 = vmul.f32 %v1535, 1.442695
        %v1564 = vpow.pop %v1563
        %v1565 = vmul.f32 %v1536, 1.442695
        %v1566 = vpow.pop %v1565
        %v1567 = vmul.f32 %v1537, 1.442695
        %v1568 = vpow.pop %v1567
        %v1569 = vmul.f32 %v1538, 1.442695
        %v1570 = vpow.pop %v1569
        %1571 = vadd.xlane.f32.xlu0 %v1540
        %v1572 = vpop.xlane.xlu0 %1571
        %1573 = vadd.xlane.f32.xlu0 %v1542
        %v1574 = vpop.xlane.xlu0 %1573
        %1575 = vadd.xlane.f32.xlu0 %v1544
        %v1576 = vpop.xlane.xlu0 %1575
        %1577 = vadd.xlane.f32.xlu0 %v1546
        %v1578 = vpop.xlane.xlu0 %1577
        %1579 = vadd.xlane.f32.xlu0 %v1548
        %v1580 = vpop.xlane.xlu0 %1579
        %1581 = vadd.xlane.f32.xlu0 %v1550
        %v1582 = vpop.xlane.xlu0 %1581
        %1583 = vadd.xlane.f32.xlu0 %v1552
        %v1584 = vpop.xlane.xlu0 %1583
        %1585 = vadd.xlane.f32.xlu0 %v1554
        %v1586 = vpop.xlane.xlu0 %1585
        %1587 = vadd.xlane.f32.xlu0 %v1556
        %v1588 = vpop.xlane.xlu0 %1587
        %1589 = vadd.xlane.f32.xlu0 %v1558
        %v1590 = vpop.xlane.xlu0 %1589
        %1591 = vadd.xlane.f32.xlu0 %v1560
        %v1592 = vpop.xlane.xlu0 %1591
        %1593 = vadd.xlane.f32.xlu0 %v1562
        %v1594 = vpop.xlane.xlu0 %1593
        %1595 = vadd.xlane.f32.xlu0 %v1564
        %v1596 = vpop.xlane.xlu0 %1595
        %1597 = vadd.xlane.f32.xlu0 %v1566
        %v1598 = vpop.xlane.xlu0 %1597
        %1599 = vadd.xlane.f32.xlu0 %v1568
        %v1600 = vpop.xlane.xlu0 %1599
        %1601 = vadd.xlane.f32.xlu0 %v1570
        %v1602 = vpop.xlane.xlu0 %1601
        %v1603 = vrcp.pop %v1572
        %v1604 = vrcp.pop %v1574
        %v1605 = vrcp.pop %v1576
        %v1606 = vrcp.pop %v1578
        %v1607 = vrcp.pop %v1580
        %v1608 = vrcp.pop %v1582
        %v1609 = vrcp.pop %v1584
        %v1610 = vrcp.pop %v1586
        %v1611 = vrcp.pop %v1588
        %v1612 = vrcp.pop %v1590
        %v1613 = vrcp.pop %v1592
        %v1614 = vrcp.pop %v1594
        %v1615 = vrcp.pop %v1596
        %v1616 = vrcp.pop %v1598
        %v1617 = vrcp.pop %v1600
        %v1618 = vrcp.pop %v1602
        %v1619 = vmul.f32 %v1540, %v1603
        %v1620 = vmul.f32 %v1542, %v1604
        %v1621 = vmul.f32 %v1544, %v1605
        %v1622 = vmul.f32 %v1546, %v1606
        %v1623 = vmul.f32 %v1548, %v1607
        %v1624 = vmul.f32 %v1550, %v1608
        %v1625 = vmul.f32 %v1552, %v1609
        %v1626 = vmul.f32 %v1554, %v1610
        %v1627 = vmul.f32 %v1556, %v1611
        %v1628 = vmul.f32 %v1558, %v1612
        %v1629 = vmul.f32 %v1560, %v1613
        %v1630 = vmul.f32 %v1562, %v1614
        %v1631 = vmul.f32 %v1564, %v1615
        %v1632 = vmul.f32 %v1566, %v1616
        %v1633 = vmul.f32 %v1568, %v1617
        %v1634 = vmul.f32 %v1570, %v1618
        %s1635 = scalar_lea.vmem %s293, 128 [#allocation3]
        %1636 = vst [vmem:[%s1635] sm:$0xff] %v1619
        %1637 = vst [vmem:[%s1635 + $0x8] sm:$0xff] %v1620
        %1638 = vst [vmem:[%s1635 + $0x10] sm:$0xff] %v1621
        %1639 = vst [vmem:[%s1635 + $0x18] sm:$0xff] %v1622
        %1640 = vst [vmem:[%s1635 + $0x20] sm:$0xff] %v1623
        %1641 = vst [vmem:[%s1635 + $0x28] sm:$0xff] %v1624
        %1642 = vst [vmem:[%s1635 + $0x30] sm:$0xff] %v1625
        %1643 = vst [vmem:[%s1635 + $0x38] sm:$0xff] %v1626
        %1644 = vst [vmem:[%s1635 + $0x40] sm:$0xff] %v1627
        %1645 = vst [vmem:[%s1635 + $0x48] sm:$0xff] %v1628
        %1646 = vst [vmem:[%s1635 + $0x50] sm:$0xff] %v1629
        %1647 = vst [vmem:[%s1635 + $0x58] sm:$0xff] %v1630
        %1648 = vst [vmem:[%s1635 + $0x60] sm:$0xff] %v1631
        %1649 = vst [vmem:[%s1635 + $0x68] sm:$0xff] %v1632
        %1650 = vst [vmem:[%s1635 + $0x70] sm:$0xff] %v1633
        %1651 = vst [vmem:[%s1635 + $0x78] sm:$0xff] %v1634
        %1652 = vrot.lane.b32.xlu0 %v451, 56
        %v1653 = vpop.permute.xlu0 %1652
        %1654 = vrot.lane.b32.xlu0 %v456, 56
        %v1655 = vpop.permute.xlu0 %1654
        %1656 = vrot.lane.b32.xlu0 %v461, 56
        %v1657 = vpop.permute.xlu0 %1656
        %1658 = vrot.lane.b32.xlu0 %v466, 56
        %v1659 = vpop.permute.xlu0 %1658
        %1660 = vrot.lane.b32.xlu0 %v471, 56
        %v1661 = vpop.permute.xlu0 %1660
        %1662 = vrot.lane.b32.xlu0 %v476, 56
        %v1663 = vpop.permute.xlu0 %1662
        %1664 = vrot.lane.b32.xlu0 %v481, 56
        %v1665 = vpop.permute.xlu0 %1664
        %1666 = vrot.lane.b32.xlu0 %v486, 56
        %v1667 = vpop.permute.xlu0 %1666
        %1668 = vrot.lane.b32.xlu0 %v491, 56
        %v1669 = vpop.permute.xlu0 %1668
        %1670 = vrot.lane.b32.xlu0 %v496, 56
        %v1671 = vpop.permute.xlu0 %1670
        %1672 = vrot.lane.b32.xlu0 %v501, 56
        %v1673 = vpop.permute.xlu0 %1672
        %1674 = vrot.lane.b32.xlu0 %v506, 56
        %v1675 = vpop.permute.xlu0 %1674
        %1676 = vrot.lane.b32.xlu0 %v511, 56
        %v1677 = vpop.permute.xlu0 %1676
        %1678 = vrot.lane.b32.xlu0 %v516, 56
        %v1679 = vpop.permute.xlu0 %1678
        %1680 = vrot.lane.b32.xlu0 %v521, 56
        %v1681 = vpop.permute.xlu0 %1680
        %1682 = vrot.lane.b32.xlu0 %v526, 56
        %v1683 = vpop.permute.xlu0 %1682
        %1700 = vmatprep.subr.mxu0 0.0
        %1701 = vmatpush1.msra.mxu0 %v1653
        %1702 = vmatprep.subr.mxu0 0.0
        %1703 = vmatpush1.msra.mxu0 %v1655
        %1704 = vmatprep.subr.mxu0 0.0
        %1705 = vmatpush1.msra.mxu0 %v1657
        %1706 = vmatprep.subr.mxu0 0.0
        %1707 = vmatpush1.msra.mxu0 %v1659
        %1708 = vmatprep.subr.mxu0 0.0
        %1709 = vmatpush1.msra.mxu0 %v1661
        %1710 = vmatprep.subr.mxu0 0.0
        %1711 = vmatpush1.msra.mxu0 %v1663
        %1712 = vmatprep.subr.mxu0 0.0
        %1713 = vmatpush1.msra.mxu0 %v1665
        %1714 = vmatprep.subr.mxu0 0.0
        %1715 = vmatpush1.msra.mxu0 %v1667
        %1716 = vmatprep.subr.mxu0 0.0
        %1717 = vmatpush1.msra.mxu0 %v1669
        %1718 = vmatprep.subr.mxu0 0.0
        %1719 = vmatpush1.msra.mxu0 %v1671
        %1720 = vmatprep.subr.mxu0 0.0
        %1721 = vmatpush1.msra.mxu0 %v1673
        %1722 = vmatprep.subr.mxu0 0.0
        %1723 = vmatpush1.msra.mxu0 %v1675
        %1724 = vmatprep.subr.mxu0 0.0
        %1725 = vmatpush1.msra.mxu0 %v1677
        %1726 = vmatprep.subr.mxu0 0.0
        %1727 = vmatpush1.msra.mxu0 %v1679
        %1728 = vmatprep.subr.mxu0 0.0
        %1729 = vmatpush1.msra.mxu0 %v1681
        %1730 = vmatprep.subr.mxu0 0.0
        %1731 = vmatpush1.msra.mxu0 %v1683
        %1732 = vmatprep.subr.mxu0 0.0
        %1733 = vmatpush1.msra.mxu0 0.0
        %1734 = vmatprep.subr.mxu0 0.0
        %1735 = vmatpush1.msra.mxu0 0.0
        %1736 = vmatprep.subr.mxu0 0.0
        %1737 = vmatpush1.msra.mxu0 0.0
        %1738 = vmatprep.subr.mxu0 0.0
        %1739 = vmatpush1.msra.mxu0 0.0
        %1740 = vmatprep.subr.mxu0 0.0
        %1741 = vmatpush1.msra.mxu0 0.0
        %1742 = vmatprep.subr.mxu0 0.0
        %1743 = vmatpush1.msra.mxu0 0.0
        %1744 = vmatprep.subr.mxu0 0.0
        %1745 = vmatpush1.msra.mxu0 0.0
        %1746 = vmatprep.subr.mxu0 0.0
        %1747 = vmatpush1.msra.mxu0 0.0
        %1748 = vmatprep.subr.mxu0 0.0
        %1749 = vmatpush1.msra.mxu0 0.0
        %1750 = vmatprep.subr.mxu0 0.0
        %1751 = vmatpush1.msra.mxu0 0.0
        %1752 = vmatprep.subr.mxu0 0.0
        %1753 = vmatpush1.msra.mxu0 0.0
        %1754 = vmatprep.subr.mxu0 0.0
        %1755 = vmatpush1.msra.mxu0 0.0
        %1756 = vmatprep.subr.mxu0 0.0
        %1757 = vmatpush1.msra.mxu0 0.0
        %1758 = vmatprep.subr.mxu0 0.0
        %1759 = vmatpush1.msra.mxu0 0.0
        %1760 = vmatprep.subr.mxu0 0.0
        %1761 = vmatpush1.msra.mxu0 0.0
        %1762 = vmatprep.subr.mxu0 0.0
        %1763 = vmatpush1.msra.mxu0 0.0
        %1764 = vmatprep.mubr.f32.mxu0 0.0
        %1765 = vmatmul.mubr.f32.gmra.mrb[0].mxu0 %v1619
        %v1766 = vpop.f32.mrb[0].mxu0
        %v1767 = vadd.f32 0.0, %v1766
        %v1768 = vpop.f32.mrb[0].mxu0
        %1769 = vmatprep.mubr.f32.mxu0 0.0
        %1770 = vmatmul.mubr.f32.gmra.mrb[0].mxu0 %v1620
        %v1771 = vpop.f32.mrb[0].mxu0
        %v1772 = vadd.f32 0.0, %v1771
        %v1773 = vpop.f32.mrb[0].mxu0
        %1774 = vmatprep.mubr.f32.mxu0 0.0
        %1775 = vmatmul.mubr.f32.gmra.mrb[0].mxu0 %v1621
        %v1776 = vpop.f32.mrb[0].mxu0
        %v1777 = vadd.f32 0.0, %v1776
        %v1778 = vpop.f32.mrb[0].mxu0
        %1779 = vmatprep.mubr.f32.mxu0 0.0
        %1780 = vmatmul.mubr.f32.gmra.mrb[0].mxu0 %v1622
        %v1781 = vpop.f32.mrb[0].mxu0
        %v1782 = vadd.f32 0.0, %v1781
        %v1783 = vpop.f32.mrb[0].mxu0
        %1784 = vmatprep.mubr.f32.mxu0 0.0
        %1785 = vmatmul.mubr.f32.gmra.mrb[0].mxu0 %v1623
        %v1786 = vpop.f32.mrb[0].mxu0
        %v1787 = vadd.f32 0.0, %v1786
        %v1788 = vpop.f32.mrb[0].mxu0
        %1789 = vmatprep.mubr.f32.mxu0 0.0
        %1790 = vmatmul.mubr.f32.gmra.mrb[0].mxu0 %v1624
        %v1791 = vpop.f32.mrb[0].mxu0
        %v1792 = vadd.f32 0.0, %v1791
        %v1793 = vpop.f32.mrb[0].mxu0
        %1794 = vmatprep.mubr.f32.mxu0 0.0
        %1795 = vmatmul.mubr.f32.gmra.mrb[0].mxu0 %v1625
        %v1796 = vpop.f32.mrb[0].mxu0
        %v1797 = vadd.f32 0.0, %v1796
        %v1798 = vpop.f32.mrb[0].mxu0
        %1799 = vmatprep.mubr.f32.mxu0 0.0
        %1800 = vmatmul.mubr.f32.gmra.mrb[0].mxu0 %v1626
        %v1801 = vpop.f32.mrb[0].mxu0
        %v1802 = vadd.f32 0.0, %v1801
        %v1803 = vpop.f32.mrb[0].mxu0
        %1804 = vmatprep.mubr.f32.mxu0 0.0
        %1805 = vmatmul.mubr.f32.gmra.mrb[0].mxu0 %v1627
        %v1806 = vpop.f32.mrb[0].mxu0
        %v1807 = vadd.f32 0.0, %v1806
        %v1808 = vpop.f32.mrb[0].mxu0
        %1809 = vmatprep.mubr.f32.mxu0 0.0
        %1810 = vmatmul.mubr.f32.gmra.mrb[0].mxu0 %v1628
        %v1811 = vpop.f32.mrb[0].mxu0
        %v1812 = vadd.f32 0.0, %v1811
        %v1813 = vpop.f32.mrb[0].mxu0
        %1814 = vmatprep.mubr.f32.mxu0 0.0
        %1815 = vmatmul.mubr.f32.gmra.mrb[0].mxu0 %v1629
        %v1816 = vpop.f32.mrb[0].mxu0
        %v1817 = vadd.f32 0.0, %v1816
        %v1818 = vpop.f32.mrb[0].mxu0
        %1819 = vmatprep.mubr.f32.mxu0 0.0
        %1820 = vmatmul.mubr.f32.gmra.mrb[0].mxu0 %v1630
        %v1821 = vpop.f32.mrb[0].mxu0
        %v1822 = vadd.f32 0.0, %v1821
        %v1823 = vpop.f32.mrb[0].mxu0
        %1824 = vmatprep.mubr.f32.mxu0 0.0
        %1825 = vmatmul.mubr.f32.gmra.mrb[0].mxu0 %v1631
        %v1826 = vpop.f32.mrb[0].mxu0
        %v1827 = vadd.f32 0.0, %v1826
        %v1828 = vpop.f32.mrb[0].mxu0
        %1829 = vmatprep.mubr.f32.mxu0 0.0
        %1830 = vmatmul.mubr.f32.gmra.mrb[0].mxu0 %v1632
        %v1831 = vpop.f32.mrb[0].mxu0
        %v1832 = vadd.f32 0.0, %v1831
        %v1833 = vpop.f32.mrb[0].mxu0
        %1834 = vmatprep.mubr.f32.mxu0 0.0
        %1835 = vmatmul.mubr.f32.gmra.mrb[0].mxu0 %v1633
        %v1836 = vpop.f32.mrb[0].mxu0
        %v1837 = vadd.f32 0.0, %v1836
        %v1838 = vpop.f32.mrb[0].mxu0
        %1839 = vmatprep.mubr.f32.mxu0 0.0
        %1840 = vmatmul.mubr.f32.gmra.mrb[0].mxu0 %v1634
        %v1841 = vpop.f32.mrb[0].mxu0
        %v1842 = vadd.f32 0.0, %v1841
        %v1843 = vpop.f32.mrb[0].mxu0
        %1844 = vdwg.mxu0
        %1845 = vrot.lane.b32.xlu0 %v451, 112
        %v1846 = vpop.permute.xlu0 %1845
        %1847 = vrot.lane.b32.xlu0 %v456, 112
        %v1848 = vpop.permute.xlu0 %1847
        %1849 = vrot.lane.b32.xlu0 %v461, 112
        %v1850 = vpop.permute.xlu0 %1849
        %1851 = vrot.lane.b32.xlu0 %v466, 112
        %v1852 = vpop.permute.xlu0 %1851
        %1853 = vrot.lane.b32.xlu0 %v471, 112
        %v1854 = vpop.permute.xlu0 %1853
        %1855 = vrot.lane.b32.xlu0 %v476, 112
        %v1856 = vpop.permute.xlu0 %1855
        %1857 = vrot.lane.b32.xlu0 %v481, 112
        %v1858 = vpop.permute.xlu0 %1857
        %1859 = vrot.lane.b32.xlu0 %v486, 112
        %v1860 = vpop.permute.xlu0 %1859
        %1861 = vrot.lane.b32.xlu0 %v491, 112
        %v1862 = vpop.permute.xlu0 %1861
        %1863 = vrot.lane.b32.xlu0 %v496, 112
        %v1864 = vpop.permute.xlu0 %1863
        %1865 = vrot.lane.b32.xlu0 %v501, 112
        %v1866 = vpop.permute.xlu0 %1865
        %1867 = vrot.lane.b32.xlu0 %v506, 112
        %v1868 = vpop.permute.xlu0 %1867
        %1869 = vrot.lane.b32.xlu0 %v511, 112
        %v1870 = vpop.permute.xlu0 %1869
        %1871 = vrot.lane.b32.xlu0 %v516, 112
        %v1872 = vpop.permute.xlu0 %1871
        %1873 = vrot.lane.b32.xlu0 %v521, 112
        %v1874 = vpop.permute.xlu0 %1873
        %1875 = vrot.lane.b32.xlu0 %v526, 112
        %v1876 = vpop.permute.xlu0 %1875
        %1877 = vrot.lane.b32.xlu0 %v451, 80
        %v1878 = vpop.permute.xlu0 %1877
        %1879 = vrot.lane.b32.xlu0 %v456, 80
        %v1880 = vpop.permute.xlu0 %1879
        %1881 = vrot.lane.b32.xlu0 %v461, 80
        %v1882 = vpop.permute.xlu0 %1881
        %1883 = vrot.lane.b32.xlu0 %v466, 80
        %v1884 = vpop.permute.xlu0 %1883
        %1885 = vrot.lane.b32.xlu0 %v471, 80
        %v1886 = vpop.permute.xlu0 %1885
        %1887 = vrot.lane.b32.xlu0 %v476, 80
        %v1888 = vpop.permute.xlu0 %1887
        %1889 = vrot.lane.b32.xlu0 %v481, 80
        %v1890 = vpop.permute.xlu0 %1889
        %1891 = vrot.lane.b32.xlu0 %v486, 80
        %v1892 = vpop.permute.xlu0 %1891
        %1893 = vrot.lane.b32.xlu0 %v491, 80
        %v1894 = vpop.permute.xlu0 %1893
        %1895 = vrot.lane.b32.xlu0 %v496, 80
        %v1896 = vpop.permute.xlu0 %1895
        %1897 = vrot.lane.b32.xlu0 %v501, 80
        %v1898 = vpop.permute.xlu0 %1897
        %1899 = vrot.lane.b32.xlu0 %v506, 80
        %v1900 = vpop.permute.xlu0 %1899
        %1901 = vrot.lane.b32.xlu0 %v511, 80
        %v1902 = vpop.permute.xlu0 %1901
        %1903 = vrot.lane.b32.xlu0 %v516, 80
        %v1904 = vpop.permute.xlu0 %1903
        %1905 = vrot.lane.b32.xlu0 %v521, 80
        %v1906 = vpop.permute.xlu0 %1905
        %1907 = vrot.lane.b32.xlu0 %v526, 80
        %v1908 = vpop.permute.xlu0 %1907
        %v1909 = vsel %vm577, %v1846, 0
        %v1911 = vsel %vm577, %v1848, 0
        %v1913 = vsel %vm577, %v1850, 0
        %v1915 = vsel %vm577, %v1852, 0
        %v1917 = vsel %vm577, %v1854, 0
        %v1919 = vsel %vm577, %v1856, 0
        %v1921 = vsel %vm577, %v1858, 0
        %v1923 = vsel %vm577, %v1860, 0
        %v1925 = vsel %vm577, %v1862, 0
        %v1927 = vsel %vm577, %v1864, 0
        %v1929 = vsel %vm577, %v1866, 0
        %v1931 = vsel %vm577, %v1868, 0
        %v1933 = vsel %vm577, %v1870, 0
        %v1935 = vsel %vm577, %v1872, 0
        %v1937 = vsel %vm577, %v1874, 0
        %v1939 = vsel %vm577, %v1876, 0
        %v1941 = vsel %vm577, %v1878, 0
        %v1943 = vsel %vm577, %v1880, 0
        %v1945 = vsel %vm577, %v1882, 0
        %v1947 = vsel %vm577, %v1884, 0
        %v1949 = vsel %vm577, %v1886, 0
        %v1951 = vsel %vm577, %v1888, 0
        %v1953 = vsel %vm577, %v1890, 0
        %v1955 = vsel %vm577, %v1892, 0
        %v1957 = vsel %vm577, %v1894, 0
        %v1959 = vsel %vm577, %v1896, 0
        %v1961 = vsel %vm577, %v1898, 0
        %v1963 = vsel %vm577, %v1900, 0
        %v1965 = vsel %vm577, %v1902, 0
        %v1967 = vsel %vm577, %v1904, 0
        %v1969 = vsel %vm577, %v1906, 0
        %v1971 = vsel %vm577, %v1908, 0
        %1973 = vmatprep.subr.mxu0 0.0
        %1974 = vmatpush1.xpose.msra.mxu0 %v1941
        %1975 = vmatprep.subr.mxu0 0.0
        %1976 = vmatpush1.xpose.msra.mxu0 %v1943
        %1977 = vmatprep.subr.mxu0 0.0
        %1978 = vmatpush1.xpose.msra.mxu0 %v1945
        %1979 = vmatprep.subr.mxu0 0.0
        %1980 = vmatpush1.xpose.msra.mxu0 %v1947
        %1981 = vmatprep.subr.mxu0 0.0
        %1982 = vmatpush1.xpose.msra.mxu0 %v1949
        %1983 = vmatprep.subr.mxu0 0.0
        %1984 = vmatpush1.xpose.msra.mxu0 %v1951
        %1985 = vmatprep.subr.mxu0 0.0
        %1986 = vmatpush1.xpose.msra.mxu0 %v1953
        %1987 = vmatprep.subr.mxu0 0.0
        %1988 = vmatpush1.xpose.msra.mxu0 %v1955
        %1989 = vmatprep.subr.mxu0 0.0
        %1990 = vmatpush1.xpose.msra.mxu0 %v1957
        %1991 = vmatprep.subr.mxu0 0.0
        %1992 = vmatpush1.xpose.msra.mxu0 %v1959
        %1993 = vmatprep.subr.mxu0 0.0
        %1994 = vmatpush1.xpose.msra.mxu0 %v1961
        %1995 = vmatprep.subr.mxu0 0.0
        %1996 = vmatpush1.xpose.msra.mxu0 %v1963
        %1997 = vmatprep.subr.mxu0 0.0
        %1998 = vmatpush1.xpose.msra.mxu0 %v1965
        %1999 = vmatprep.subr.mxu0 0.0
        %2000 = vmatpush1.xpose.msra.mxu0 %v1967
        %2001 = vmatprep.subr.mxu0 0.0
        %2002 = vmatpush1.xpose.msra.mxu0 %v1969
        %2003 = vmatprep.subr.mxu0 0.0
        %2004 = vmatpush1.xpose.msra.mxu0 %v1971
        %2005 = vmatprep.subr.mxu0 0.0
        %2006 = vmatpush1.xpose.msra.mxu0 0.0
        %2007 = vmatprep.subr.mxu0 0.0
        %2008 = vmatpush1.xpose.msra.mxu0 0.0
        %2009 = vmatprep.subr.mxu0 0.0
        %2010 = vmatpush1.xpose.msra.mxu0 0.0
        %2011 = vmatprep.subr.mxu0 0.0
        %2012 = vmatpush1.xpose.msra.mxu0 0.0
        %2013 = vmatprep.subr.mxu0 0.0
        %2014 = vmatpush1.xpose.msra.mxu0 0.0
        %2015 = vmatprep.subr.mxu0 0.0
        %2016 = vmatpush1.xpose.msra.mxu0 0.0
        %2017 = vmatprep.subr.mxu0 0.0
        %2018 = vmatpush1.xpose.msra.mxu0 0.0
        %2019 = vmatprep.subr.mxu0 0.0
        %2020 = vmatpush1.xpose.msra.mxu0 0.0
        %2021 = vmatprep.subr.mxu0 0.0
        %2022 = vmatpush1.xpose.msra.mxu0 0.0
        %2023 = vmatprep.subr.mxu0 0.0
        %2024 = vmatpush1.xpose.msra.mxu0 0.0
        %2025 = vmatprep.subr.mxu0 0.0
        %2026 = vmatpush1.xpose.msra.mxu0 0.0
        %2027 = vmatprep.subr.mxu0 0.0
        %2028 = vmatpush1.xpose.msra.mxu0 0.0
        %2029 = vmatprep.subr.mxu0 0.0
        %2030 = vmatpush1.xpose.msra.mxu0 0.0
        %2031 = vmatprep.subr.mxu0 0.0
        %2032 = vmatpush1.xpose.msra.mxu0 0.0
        %2033 = vmatprep.subr.mxu0 0.0
        %2034 = vmatpush1.xpose.msra.mxu0 0.0
        %2035 = vmatprep.subr.mxu0 0.0
        %2036 = vmatpush1.xpose.msra.mxu0 0.0
        %2037 = vmatprep.mubr.f32.mxu0 0.0
        %2038 = vmatmul.mubr.f32.gmra.mrb[0].mxu0 %v1909
        %v2039 = vpop.f32.mrb[0].mxu0
        %v2040 = vadd.f32 0.0, %v2039
        %v2041 = vpop.f32.mrb[0].mxu0
        %2042 = vmatprep.mubr.f32.mxu0 0.0
        %2043 = vmatmul.mubr.f32.gmra.mrb[0].mxu0 %v1911
        %v2044 = vpop.f32.mrb[0].mxu0
        %v2045 = vadd.f32 0.0, %v2044
        %v2046 = vpop.f32.mrb[0].mxu0
        %2047 = vmatprep.mubr.f32.mxu0 0.0
        %2048 = vmatmul.mubr.f32.gmra.mrb[0].mxu0 %v1913
        %v2049 = vpop.f32.mrb[0].mxu0
        %v2050 = vadd.f32 0.0, %v2049
        %v2051 = vpop.f32.mrb[0].mxu0
        %2052 = vmatprep.mubr.f32.mxu0 0.0
        %2053 = vmatmul.mubr.f32.gmra.mrb[0].mxu0 %v1915
        %v2054 = vpop.f32.mrb[0].mxu0
        %v2055 = vadd.f32 0.0, %v2054
        %v2056 = vpop.f32.mrb[0].mxu0
        %2057 = vmatprep.mubr.f32.mxu0 0.0
        %2058 = vmatmul.mubr.f32.gmra.mrb[0].mxu0 %v1917
        %v2059 = vpop.f32.mrb[0].mxu0
        %v2060 = vadd.f32 0.0, %v2059
        %v2061 = vpop.f32.mrb[0].mxu0
        %2062 = vmatprep.mubr.f32.mxu0 0.0
        %2063 = vmatmul.mubr.f32.gmra.mrb[0].mxu0 %v1919
        %v2064 = vpop.f32.mrb[0].mxu0
        %v2065 = vadd.f32 0.0, %v2064
        %v2066 = vpop.f32.mrb[0].mxu0
        %2067 = vmatprep.mubr.f32.mxu0 0.0
        %2068 = vmatmul.mubr.f32.gmra.mrb[0].mxu0 %v1921
        %v2069 = vpop.f32.mrb[0].mxu0
        %v2070 = vadd.f32 0.0, %v2069
        %v2071 = vpop.f32.mrb[0].mxu0
        %2072 = vmatprep.mubr.f32.mxu0 0.0
        %2073 = vmatmul.mubr.f32.gmra.mrb[0].mxu0 %v1923
        %v2074 = vpop.f32.mrb[0].mxu0
        %v2075 = vadd.f32 0.0, %v2074
        %v2076 = vpop.f32.mrb[0].mxu0
        %2077 = vmatprep.mubr.f32.mxu0 0.0
        %2078 = vmatmul.mubr.f32.gmra.mrb[0].mxu0 %v1925
        %v2079 = vpop.f32.mrb[0].mxu0
        %v2080 = vadd.f32 0.0, %v2079
        %v2081 = vpop.f32.mrb[0].mxu0
        %2082 = vmatprep.mubr.f32.mxu0 0.0
        %2083 = vmatmul.mubr.f32.gmra.mrb[0].mxu0 %v1927
        %v2084 = vpop.f32.mrb[0].mxu0
        %v2085 = vadd.f32 0.0, %v2084
        %v2086 = vpop.f32.mrb[0].mxu0
        %2087 = vmatprep.mubr.f32.mxu0 0.0
        %2088 = vmatmul.mubr.f32.gmra.mrb[0].mxu0 %v1929
        %v2089 = vpop.f32.mrb[0].mxu0
        %v2090 = vadd.f32 0.0, %v2089
        %v2091 = vpop.f32.mrb[0].mxu0
        %2092 = vmatprep.mubr.f32.mxu0 0.0
        %2093 = vmatmul.mubr.f32.gmra.mrb[0].mxu0 %v1931
        %v2094 = vpop.f32.mrb[0].mxu0
        %v2095 = vadd.f32 0.0, %v2094
        %v2096 = vpop.f32.mrb[0].mxu0
        %2097 = vmatprep.mubr.f32.mxu0 0.0
        %2098 = vmatmul.mubr.f32.gmra.mrb[0].mxu0 %v1933
        %v2099 = vpop.f32.mrb[0].mxu0
        %v2100 = vadd.f32 0.0, %v2099
        %v2101 = vpop.f32.mrb[0].mxu0
        %2102 = vmatprep.mubr.f32.mxu0 0.0
        %2103 = vmatmul.mubr.f32.gmra.mrb[0].mxu0 %v1935
        %v2104 = vpop.f32.mrb[0].mxu0
        %v2105 = vadd.f32 0.0, %v2104
        %v2106 = vpop.f32.mrb[0].mxu0
        %2107 = vmatprep.mubr.f32.mxu0 0.0
        %2108 = vmatmul.mubr.f32.gmra.mrb[0].mxu0 %v1937
        %v2109 = vpop.f32.mrb[0].mxu0
        %v2110 = vadd.f32 0.0, %v2109
        %v2111 = vpop.f32.mrb[0].mxu0
        %2112 = vmatprep.mubr.f32.mxu0 0.0
        %2113 = vmatmul.mubr.f32.gmra.mrb[0].mxu0 %v1939
        %v2114 = vpop.f32.mrb[0].mxu0
        %v2115 = vadd.f32 0.0, %v2114
        %v2116 = vpop.f32.mrb[0].mxu0
        %2117 = vdwg.mxu0
        %v2118 = vmul.f32 %v2040, 0.35355338
        %v2119 = vmul.f32 %v2045, 0.35355338
        %v2120 = vmul.f32 %v2050, 0.35355338
        %v2121 = vmul.f32 %v2055, 0.35355338
        %v2122 = vmul.f32 %v2060, 0.35355338
        %v2123 = vmul.f32 %v2065, 0.35355338
        %v2124 = vmul.f32 %v2070, 0.35355338
        %v2125 = vmul.f32 %v2075, 0.35355338
        %v2126 = vmul.f32 %v2080, 0.35355338
        %v2127 = vmul.f32 %v2085, 0.35355338
        %v2128 = vmul.f32 %v2090, 0.35355338
        %v2129 = vmul.f32 %v2095, 0.35355338
        %v2130 = vmul.f32 %v2100, 0.35355338
        %v2131 = vmul.f32 %v2105, 0.35355338
        %v2132 = vmul.f32 %v2110, 0.35355338
        %v2133 = vmul.f32 %v2115, 0.35355338
        %v2134 = vld [vmem:[%s1] sm:$0x1]
        %v2136 = vlaneseq
        %v2137 = vshrl.u32 %v2136, 7
        %v2138 = vsub.s32 0, %v2137
        %v2139 = vrot.slane %v2134, %v2138
        %v2141 = vadd.f32 %v2118, %v2139
        %v2142 = vadd.f32 %v2119, %v2139
        %v2143 = vadd.f32 %v2120, %v2139
        %v2144 = vadd.f32 %v2121, %v2139
        %v2145 = vadd.f32 %v2122, %v2139
        %v2146 = vadd.f32 %v2123, %v2139
        %v2147 = vadd.f32 %v2124, %v2139
        %v2148 = vadd.f32 %v2125, %v2139
        %v2149 = vadd.f32 %v2126, %v2139
        %v2150 = vadd.f32 %v2127, %v2139
        %v2151 = vadd.f32 %v2128, %v2139
        %v2152 = vadd.f32 %v2129, %v2139
        %v2153 = vadd.f32 %v2130, %v2139
        %v2154 = vadd.f32 %v2131, %v2139
        %v2155 = vadd.f32 %v2132, %v2139
        %v2156 = vadd.f32 %v2133, %v2139
        %2157 = vmax.xlane.f32.xlu0 %v2141
        %v2158 = vpop.xlane.xlu0 %2157
        %2159 = vmax.xlane.f32.xlu0 %v2142
        %v2160 = vpop.xlane.xlu0 %2159
        %2161 = vmax.xlane.f32.xlu0 %v2143
        %v2162 = vpop.xlane.xlu0 %2161
        %2163 = vmax.xlane.f32.xlu0 %v2144
        %v2164 = vpop.xlane.xlu0 %2163
        %2165 = vmax.xlane.f32.xlu0 %v2145
        %v2166 = vpop.xlane.xlu0 %2165
        %2167 = vmax.xlane.f32.xlu0 %v2146
        %v2168 = vpop.xlane.xlu0 %2167
        %2169 = vmax.xlane.f32.xlu0 %v2147
        %v2170 = vpop.xlane.xlu0 %2169
        %2171 = vmax.xlane.f32.xlu0 %v2148
        %v2172 = vpop.xlane.xlu0 %2171
        %2173 = vmax.xlane.f32.xlu0 %v2149
        %v2174 = vpop.xlane.xlu0 %2173
        %2175 = vmax.xlane.f32.xlu0 %v2150
        %v2176 = vpop.xlane.xlu0 %2175
        %2177 = vmax.xlane.f32.xlu0 %v2151
        %v2178 = vpop.xlane.xlu0 %2177
        %2179 = vmax.xlane.f32.xlu0 %v2152
        %v2180 = vpop.xlane.xlu0 %2179
        %2181 = vmax.xlane.f32.xlu0 %v2153
        %v2182 = vpop.xlane.xlu0 %2181
        %2183 = vmax.xlane.f32.xlu0 %v2154
        %v2184 = vpop.xlane.xlu0 %2183
        %2185 = vmax.xlane.f32.xlu0 %v2155
        %v2186 = vpop.xlane.xlu0 %2185
        %2187 = vmax.xlane.f32.xlu0 %v2156
        %v2188 = vpop.xlane.xlu0 %2187
        %v2189 = vsub.f32 %v2141, %v2158
        %v2190 = vsub.f32 %v2142, %v2160
        %v2191 = vsub.f32 %v2143, %v2162
        %v2192 = vsub.f32 %v2144, %v2164
        %v2193 = vsub.f32 %v2145, %v2166
        %v2194 = vsub.f32 %v2146, %v2168
        %v2195 = vsub.f32 %v2147, %v2170
        %v2196 = vsub.f32 %v2148, %v2172
        %v2197 = vsub.f32 %v2149, %v2174
        %v2198 = vsub.f32 %v2150, %v2176
        %v2199 = vsub.f32 %v2151, %v2178
        %v2200 = vsub.f32 %v2152, %v2180
        %v2201 = vsub.f32 %v2153, %v2182
        %v2202 = vsub.f32 %v2154, %v2184
        %v2203 = vsub.f32 %v2155, %v2186
        %v2204 = vsub.f32 %v2156, %v2188
        %v2205 = vmul.f32 %v2189, 1.442695
        %v2206 = vpow.pop %v2205
        %v2207 = vmul.f32 %v2190, 1.442695
        %v2208 = vpow.pop %v2207
        %v2209 = vmul.f32 %v2191, 1.442695
        %v2210 = vpow.pop %v2209
        %v2211 = vmul.f32 %v2192, 1.442695
        %v2212 = vpow.pop %v2211
        %v2213 = vmul.f32 %v2193, 1.442695
        %v2214 = vpow.pop %v2213
        %v2215 = vmul.f32 %v2194, 1.442695
        %v2216 = vpow.pop %v2215
        %v2217 = vmul.f32 %v2195, 1.442695
        %v2218 = vpow.pop %v2217
        %v2219 = vmul.f32 %v2196, 1.442695
        %v2220 = vpow.pop %v2219
        %v2221 = vmul.f32 %v2197, 1.442695
        %v2222 = vpow.pop %v2221
        %v2223 = vmul.f32 %v2198, 1.442695
        %v2224 = vpow.pop %v2223
        %v2225 = vmul.f32 %v2199, 1.442695
        %v2226 = vpow.pop %v2225
        %v2227 = vmul.f32 %v2200, 1.442695
        %v2228 = vpow.pop %v2227
        %v2229 = vmul.f32 %v2201, 1.442695
        %v2230 = vpow.pop %v2229
        %v2231 = vmul.f32 %v2202, 1.442695
        %v2232 = vpow.pop %v2231
        %v2233 = vmul.f32 %v2203, 1.442695
        %v2234 = vpow.pop %v2233
        %v2235 = vmul.f32 %v2204, 1.442695
        %v2236 = vpow.pop %v2235
        %2237 = vadd.xlane.f32.xlu0 %v2206
        %v2238 = vpop.xlane.xlu0 %2237
        %2239 = vadd.xlane.f32.xlu0 %v2208
        %v2240 = vpop.xlane.xlu0 %2239
        %2241 = vadd.xlane.f32.xlu0 %v2210
        %v2242 = vpop.xlane.xlu0 %2241
        %2243 = vadd.xlane.f32.xlu0 %v2212
        %v2244 = vpop.xlane.xlu0 %2243
        %2245 = vadd.xlane.f32.xlu0 %v2214
        %v2246 = vpop.xlane.xlu0 %2245
        %2247 = vadd.xlane.f32.xlu0 %v2216
        %v2248 = vpop.xlane.xlu0 %2247
        %2249 = vadd.xlane.f32.xlu0 %v2218
        %v2250 = vpop.xlane.xlu0 %2249
        %2251 = vadd.xlane.f32.xlu0 %v2220
        %v2252 = vpop.xlane.xlu0 %2251
        %2253 = vadd.xlane.f32.xlu0 %v2222
        %v2254 = vpop.xlane.xlu0 %2253
        %2255 = vadd.xlane.f32.xlu0 %v2224
        %v2256 = vpop.xlane.xlu0 %2255
        %2257 = vadd.xlane.f32.xlu0 %v2226
        %v2258 = vpop.xlane.xlu0 %2257
        %2259 = vadd.xlane.f32.xlu0 %v2228
        %v2260 = vpop.xlane.xlu0 %2259
        %2261 = vadd.xlane.f32.xlu0 %v2230
        %v2262 = vpop.xlane.xlu0 %2261
        %2263 = vadd.xlane.f32.xlu0 %v2232
        %v2264 = vpop.xlane.xlu0 %2263
        %2265 = vadd.xlane.f32.xlu0 %v2234
        %v2266 = vpop.xlane.xlu0 %2265
        %2267 = vadd.xlane.f32.xlu0 %v2236
        %v2268 = vpop.xlane.xlu0 %2267
        %v2269 = vrcp.pop %v2238
        %v2270 = vrcp.pop %v2240
        %v2271 = vrcp.pop %v2242
        %v2272 = vrcp.pop %v2244
        %v2273 = vrcp.pop %v2246
        %v2274 = vrcp.pop %v2248
        %v2275 = vrcp.pop %v2250
        %v2276 = vrcp.pop %v2252
        %v2277 = vrcp.pop %v2254
        %v2278 = vrcp.pop %v2256
        %v2279 = vrcp.pop %v2258
        %v2280 = vrcp.pop %v2260
        %v2281 = vrcp.pop %v2262
        %v2282 = vrcp.pop %v2264
        %v2283 = vrcp.pop %v2266
        %v2284 = vrcp.pop %v2268
        %v2285 = vmul.f32 %v2206, %v2269
        %v2286 = vmul.f32 %v2208, %v2270
        %v2287 = vmul.f32 %v2210, %v2271
        %v2288 = vmul.f32 %v2212, %v2272
        %v2289 = vmul.f32 %v2214, %v2273
        %v2290 = vmul.f32 %v2216, %v2274
        %v2291 = vmul.f32 %v2218, %v2275
        %v2292 = vmul.f32 %v2220, %v2276
        %v2293 = vmul.f32 %v2222, %v2277
        %v2294 = vmul.f32 %v2224, %v2278
        %v2295 = vmul.f32 %v2226, %v2279
        %v2296 = vmul.f32 %v2228, %v2280
        %v2297 = vmul.f32 %v2230, %v2281
        %v2298 = vmul.f32 %v2232, %v2282
        %v2299 = vmul.f32 %v2234, %v2283
        %v2300 = vmul.f32 %v2236, %v2284
        %s2301 = scalar_lea.vmem %s293, 256 [#allocation3]
        %2302 = vst [vmem:[%s2301] sm:$0xff] %v2285
        %2303 = vst [vmem:[%s2301 + $0x8] sm:$0xff] %v2286
        %2304 = vst [vmem:[%s2301 + $0x10] sm:$0xff] %v2287
        %2305 = vst [vmem:[%s2301 + $0x18] sm:$0xff] %v2288
        %2306 = vst [vmem:[%s2301 + $0x20] sm:$0xff] %v2289
        %2307 = vst [vmem:[%s2301 + $0x28] sm:$0xff] %v2290
        %2308 = vst [vmem:[%s2301 + $0x30] sm:$0xff] %v2291
        %2309 = vst [vmem:[%s2301 + $0x38] sm:$0xff] %v2292
        %2310 = vst [vmem:[%s2301 + $0x40] sm:$0xff] %v2293
        %2311 = vst [vmem:[%s2301 + $0x48] sm:$0xff] %v2294
        %2312 = vst [vmem:[%s2301 + $0x50] sm:$0xff] %v2295
        %2313 = vst [vmem:[%s2301 + $0x58] sm:$0xff] %v2296
        %2314 = vst [vmem:[%s2301 + $0x60] sm:$0xff] %v2297
        %2315 = vst [vmem:[%s2301 + $0x68] sm:$0xff] %v2298
        %2316 = vst [vmem:[%s2301 + $0x70] sm:$0xff] %v2299
        %2317 = vst [vmem:[%s2301 + $0x78] sm:$0xff] %v2300
        %2318 = vrot.lane.b32.xlu0 %v451, 48
        %v2319 = vpop.permute.xlu0 %2318
        %2320 = vrot.lane.b32.xlu0 %v456, 48
        %v2321 = vpop.permute.xlu0 %2320
        %2322 = vrot.lane.b32.xlu0 %v461, 48
        %v2323 = vpop.permute.xlu0 %2322
        %2324 = vrot.lane.b32.xlu0 %v466, 48
        %v2325 = vpop.permute.xlu0 %2324
        %2326 = vrot.lane.b32.xlu0 %v471, 48
        %v2327 = vpop.permute.xlu0 %2326
        %2328 = vrot.lane.b32.xlu0 %v476, 48
        %v2329 = vpop.permute.xlu0 %2328
        %2330 = vrot.lane.b32.xlu0 %v481, 48
        %v2331 = vpop.permute.xlu0 %2330
        %2332 = vrot.lane.b32.xlu0 %v486, 48
        %v2333 = vpop.permute.xlu0 %2332
        %2334 = vrot.lane.b32.xlu0 %v491, 48
        %v2335 = vpop.permute.xlu0 %2334
        %2336 = vrot.lane.b32.xlu0 %v496, 48
        %v2337 = vpop.permute.xlu0 %2336
        %2338 = vrot.lane.b32.xlu0 %v501, 48
        %v2339 = vpop.permute.xlu0 %2338
        %2340 = vrot.lane.b32.xlu0 %v506, 48
        %v2341 = vpop.permute.xlu0 %2340
        %2342 = vrot.lane.b32.xlu0 %v511, 48
        %v2343 = vpop.permute.xlu0 %2342
        %2344 = vrot.lane.b32.xlu0 %v516, 48
        %v2345 = vpop.permute.xlu0 %2344
        %2346 = vrot.lane.b32.xlu0 %v521, 48
        %v2347 = vpop.permute.xlu0 %2346
        %2348 = vrot.lane.b32.xlu0 %v526, 48
        %v2349 = vpop.permute.xlu0 %2348
        %2366 = vmatprep.subr.mxu0 0.0
        %2367 = vmatpush1.msra.mxu0 %v2319
        %2368 = vmatprep.subr.mxu0 0.0
        %2369 = vmatpush1.msra.mxu0 %v2321
        %2370 = vmatprep.subr.mxu0 0.0
        %2371 = vmatpush1.msra.mxu0 %v2323
        %2372 = vmatprep.subr.mxu0 0.0
        %2373 = vmatpush1.msra.mxu0 %v2325
        %2374 = vmatprep.subr.mxu0 0.0
        %2375 = vmatpush1.msra.mxu0 %v2327
        %2376 = vmatprep.subr.mxu0 0.0
        %2377 = vmatpush1.msra.mxu0 %v2329
        %2378 = vmatprep.subr.mxu0 0.0
        %2379 = vmatpush1.msra.mxu0 %v2331
        %2380 = vmatprep.subr.mxu0 0.0
        %2381 = vmatpush1.msra.mxu0 %v2333
        %2382 = vmatprep.subr.mxu0 0.0
        %2383 = vmatpush1.msra.mxu0 %v2335
        %2384 = vmatprep.subr.mxu0 0.0
        %2385 = vmatpush1.msra.mxu0 %v2337
        %2386 = vmatprep.subr.mxu0 0.0
        %2387 = vmatpush1.msra.mxu0 %v2339
        %2388 = vmatprep.subr.mxu0 0.0
        %2389 = vmatpush1.msra.mxu0 %v2341
        %2390 = vmatprep.subr.mxu0 0.0
        %2391 = vmatpush1.msra.mxu0 %v2343
        %2392 = vmatprep.subr.mxu0 0.0
        %2393 = vmatpush1.msra.mxu0 %v2345
        %2394 = vmatprep.subr.mxu0 0.0
        %2395 = vmatpush1.msra.mxu0 %v2347
        %2396 = vmatprep.subr.mxu0 0.0
        %2397 = vmatpush1.msra.mxu0 %v2349
        %2398 = vmatprep.subr.mxu0 0.0
        %2399 = vmatpush1.msra.mxu0 0.0
        %2400 = vmatprep.subr.mxu0 0.0
        %2401 = vmatpush1.msra.mxu0 0.0
        %2402 = vmatprep.subr.mxu0 0.0
        %2403 = vmatpush1.msra.mxu0 0.0
        %2404 = vmatprep.subr.mxu0 0.0
        %2405 = vmatpush1.msra.mxu0 0.0
        %2406 = vmatprep.subr.mxu0 0.0
        %2407 = vmatpush1.msra.mxu0 0.0
        %2408 = vmatprep.subr.mxu0 0.0
        %2409 = vmatpush1.msra.mxu0 0.0
        %2410 = vmatprep.subr.mxu0 0.0
        %2411 = vmatpush1.msra.mxu0 0.0
        %2412 = vmatprep.subr.mxu0 0.0
        %2413 = vmatpush1.msra.mxu0 0.0
        %2414 = vmatprep.subr.mxu0 0.0
        %2415 = vmatpush1.msra.mxu0 0.0
        %2416 = vmatprep.subr.mxu0 0.0
        %2417 = vmatpush1.msra.mxu0 0.0
        %2418 = vmatprep.subr.mxu0 0.0
        %2419 = vmatpush1.msra.mxu0 0.0
        %2420 = vmatprep.subr.mxu0 0.0
        %2421 = vmatpush1.msra.mxu0 0.0
        %2422 = vmatprep.subr.mxu0 0.0
        %2423 = vmatpush1.msra.mxu0 0.0
        %2424 = vmatprep.subr.mxu0 0.0
        %2425 = vmatpush1.msra.mxu0 0.0
        %2426 = vmatprep.subr.mxu0 0.0
        %2427 = vmatpush1.msra.mxu0 0.0
        %2428 = vmatprep.subr.mxu0 0.0
        %2429 = vmatpush1.msra.mxu0 0.0
        %2430 = vmatprep.mubr.f32.mxu0 0.0
        %2431 = vmatmul.mubr.f32.gmra.mrb[0].mxu0 %v2285
        %v2432 = vpop.f32.mrb[0].mxu0
        %v2433 = vadd.f32 0.0, %v2432
        %v2434 = vpop.f32.mrb[0].mxu0
        %2435 = vmatprep.mubr.f32.mxu0 0.0
        %2436 = vmatmul.mubr.f32.gmra.mrb[0].mxu0 %v2286
        %v2437 = vpop.f32.mrb[0].mxu0
        %v2438 = vadd.f32 0.0, %v2437
        %v2439 = vpop.f32.mrb[0].mxu0
        %2440 = vmatprep.mubr.f32.mxu0 0.0
        %2441 = vmatmul.mubr.f32.gmra.mrb[0].mxu0 %v2287
        %v2442 = vpop.f32.mrb[0].mxu0
        %v2443 = vadd.f32 0.0, %v2442
        %v2444 = vpop.f32.mrb[0].mxu0
        %2445 = vmatprep.mubr.f32.mxu0 0.0
        %2446 = vmatmul.mubr.f32.gmra.mrb[0].mxu0 %v2288
        %v2447 = vpop.f32.mrb[0].mxu0
        %v2448 = vadd.f32 0.0, %v2447
        %v2449 = vpop.f32.mrb[0].mxu0
        %2450 = vmatprep.mubr.f32.mxu0 0.0
        %2451 = vmatmul.mubr.f32.gmra.mrb[0].mxu0 %v2289
        %v2452 = vpop.f32.mrb[0].mxu0
        %v2453 = vadd.f32 0.0, %v2452
        %v2454 = vpop.f32.mrb[0].mxu0
        %2455 = vmatprep.mubr.f32.mxu0 0.0
        %2456 = vmatmul.mubr.f32.gmra.mrb[0].mxu0 %v2290
        %v2457 = vpop.f32.mrb[0].mxu0
        %v2458 = vadd.f32 0.0, %v2457
        %v2459 = vpop.f32.mrb[0].mxu0
        %2460 = vmatprep.mubr.f32.mxu0 0.0
        %2461 = vmatmul.mubr.f32.gmra.mrb[0].mxu0 %v2291
        %v2462 = vpop.f32.mrb[0].mxu0
        %v2463 = vadd.f32 0.0, %v2462
        %v2464 = vpop.f32.mrb[0].mxu0
        %2465 = vmatprep.mubr.f32.mxu0 0.0
        %2466 = vmatmul.mubr.f32.gmra.mrb[0].mxu0 %v2292
        %v2467 = vpop.f32.mrb[0].mxu0
        %v2468 = vadd.f32 0.0, %v2467
        %v2469 = vpop.f32.mrb[0].mxu0
        %2470 = vmatprep.mubr.f32.mxu0 0.0
        %2471 = vmatmul.mubr.f32.gmra.mrb[0].mxu0 %v2293
        %v2472 = vpop.f32.mrb[0].mxu0
        %v2473 = vadd.f32 0.0, %v2472
        %v2474 = vpop.f32.mrb[0].mxu0
        %2475 = vmatprep.mubr.f32.mxu0 0.0
        %2476 = vmatmul.mubr.f32.gmra.mrb[0].mxu0 %v2294
        %v2477 = vpop.f32.mrb[0].mxu0
        %v2478 = vadd.f32 0.0, %v2477
        %v2479 = vpop.f32.mrb[0].mxu0
        %2480 = vmatprep.mubr.f32.mxu0 0.0
        %2481 = vmatmul.mubr.f32.gmra.mrb[0].mxu0 %v2295
        %v2482 = vpop.f32.mrb[0].mxu0
        %v2483 = vadd.f32 0.0, %v2482
        %v2484 = vpop.f32.mrb[0].mxu0
        %2485 = vmatprep.mubr.f32.mxu0 0.0
        %2486 = vmatmul.mubr.f32.gmra.mrb[0].mxu0 %v2296
        %v2487 = vpop.f32.mrb[0].mxu0
        %v2488 = vadd.f32 0.0, %v2487
        %v2489 = vpop.f32.mrb[0].mxu0
        %2490 = vmatprep.mubr.f32.mxu0 0.0
        %2491 = vmatmul.mubr.f32.gmra.mrb[0].mxu0 %v2297
        %v2492 = vpop.f32.mrb[0].mxu0
        %v2493 = vadd.f32 0.0, %v2492
        %v2494 = vpop.f32.mrb[0].mxu0
        %2495 = vmatprep.mubr.f32.mxu0 0.0
        %2496 = vmatmul.mubr.f32.gmra.mrb[0].mxu0 %v2298
        %v2497 = vpop.f32.mrb[0].mxu0
        %v2498 = vadd.f32 0.0, %v2497
        %v2499 = vpop.f32.mrb[0].mxu0
        %2500 = vmatprep.mubr.f32.mxu0 0.0
        %2501 = vmatmul.mubr.f32.gmra.mrb[0].mxu0 %v2299
        %v2502 = vpop.f32.mrb[0].mxu0
        %v2503 = vadd.f32 0.0, %v2502
        %v2504 = vpop.f32.mrb[0].mxu0
        %2505 = vmatprep.mubr.f32.mxu0 0.0
        %2506 = vmatmul.mubr.f32.gmra.mrb[0].mxu0 %v2300
        %v2507 = vpop.f32.mrb[0].mxu0
        %v2508 = vadd.f32 0.0, %v2507
        %v2509 = vpop.f32.mrb[0].mxu0
        %2510 = vdwg.mxu0
        %2511 = vrot.lane.b32.xlu0 %v451, 104
        %v2512 = vpop.permute.xlu0 %2511
        %2513 = vrot.lane.b32.xlu0 %v456, 104
        %v2514 = vpop.permute.xlu0 %2513
        %2515 = vrot.lane.b32.xlu0 %v461, 104
        %v2516 = vpop.permute.xlu0 %2515
        %2517 = vrot.lane.b32.xlu0 %v466, 104
        %v2518 = vpop.permute.xlu0 %2517
        %2519 = vrot.lane.b32.xlu0 %v471, 104
        %v2520 = vpop.permute.xlu0 %2519
        %2521 = vrot.lane.b32.xlu0 %v476, 104
        %v2522 = vpop.permute.xlu0 %2521
        %2523 = vrot.lane.b32.xlu0 %v481, 104
        %v2524 = vpop.permute.xlu0 %2523
        %2525 = vrot.lane.b32.xlu0 %v486, 104
        %v2526 = vpop.permute.xlu0 %2525
        %2527 = vrot.lane.b32.xlu0 %v491, 104
        %v2528 = vpop.permute.xlu0 %2527
        %2529 = vrot.lane.b32.xlu0 %v496, 104
        %v2530 = vpop.permute.xlu0 %2529
        %2531 = vrot.lane.b32.xlu0 %v501, 104
        %v2532 = vpop.permute.xlu0 %2531
        %2533 = vrot.lane.b32.xlu0 %v506, 104
        %v2534 = vpop.permute.xlu0 %2533
        %2535 = vrot.lane.b32.xlu0 %v511, 104
        %v2536 = vpop.permute.xlu0 %2535
        %2537 = vrot.lane.b32.xlu0 %v516, 104
        %v2538 = vpop.permute.xlu0 %2537
        %2539 = vrot.lane.b32.xlu0 %v521, 104
        %v2540 = vpop.permute.xlu0 %2539
        %2541 = vrot.lane.b32.xlu0 %v526, 104
        %v2542 = vpop.permute.xlu0 %2541
        %2543 = vrot.lane.b32.xlu0 %v451, 72
        %v2544 = vpop.permute.xlu0 %2543
        %2545 = vrot.lane.b32.xlu0 %v456, 72
        %v2546 = vpop.permute.xlu0 %2545
        %2547 = vrot.lane.b32.xlu0 %v461, 72
        %v2548 = vpop.permute.xlu0 %2547
        %2549 = vrot.lane.b32.xlu0 %v466, 72
        %v2550 = vpop.permute.xlu0 %2549
        %2551 = vrot.lane.b32.xlu0 %v471, 72
        %v2552 = vpop.permute.xlu0 %2551
        %2553 = vrot.lane.b32.xlu0 %v476, 72
        %v2554 = vpop.permute.xlu0 %2553
        %2555 = vrot.lane.b32.xlu0 %v481, 72
        %v2556 = vpop.permute.xlu0 %2555
        %2557 = vrot.lane.b32.xlu0 %v486, 72
        %v2558 = vpop.permute.xlu0 %2557
        %2559 = vrot.lane.b32.xlu0 %v491, 72
        %v2560 = vpop.permute.xlu0 %2559
        %2561 = vrot.lane.b32.xlu0 %v496, 72
        %v2562 = vpop.permute.xlu0 %2561
        %2563 = vrot.lane.b32.xlu0 %v501, 72
        %v2564 = vpop.permute.xlu0 %2563
        %2565 = vrot.lane.b32.xlu0 %v506, 72
        %v2566 = vpop.permute.xlu0 %2565
        %2567 = vrot.lane.b32.xlu0 %v511, 72
        %v2568 = vpop.permute.xlu0 %2567
        %2569 = vrot.lane.b32.xlu0 %v516, 72
        %v2570 = vpop.permute.xlu0 %2569
        %2571 = vrot.lane.b32.xlu0 %v521, 72
        %v2572 = vpop.permute.xlu0 %2571
        %2573 = vrot.lane.b32.xlu0 %v526, 72
        %v2574 = vpop.permute.xlu0 %2573
        %v2575 = vsel %vm577, %v2512, 0
        %v2577 = vsel %vm577, %v2514, 0
        %v2579 = vsel %vm577, %v2516, 0
        %v2581 = vsel %vm577, %v2518, 0
        %v2583 = vsel %vm577, %v2520, 0
        %v2585 = vsel %vm577, %v2522, 0
        %v2587 = vsel %vm577, %v2524, 0
        %v2589 = vsel %vm577, %v2526, 0
        %v2591 = vsel %vm577, %v2528, 0
        %v2593 = vsel %vm577, %v2530, 0
        %v2595 = vsel %vm577, %v2532, 0
        %v2597 = vsel %vm577, %v2534, 0
        %v2599 = vsel %vm577, %v2536, 0
        %v2601 = vsel %vm577, %v2538, 0
        %v2603 = vsel %vm577, %v2540, 0
        %v2605 = vsel %vm577, %v2542, 0
        %v2607 = vsel %vm577, %v2544, 0
        %v2609 = vsel %vm577, %v2546, 0
        %v2611 = vsel %vm577, %v2548, 0
        %v2613 = vsel %vm577, %v2550, 0
        %v2615 = vsel %vm577, %v2552, 0
        %v2617 = vsel %vm577, %v2554, 0
        %v2619 = vsel %vm577, %v2556, 0
        %v2621 = vsel %vm577, %v2558, 0
        %v2623 = vsel %vm577, %v2560, 0
        %v2625 = vsel %vm577, %v2562, 0
        %v2627 = vsel %vm577, %v2564, 0
        %v2629 = vsel %vm577, %v2566, 0
        %v2631 = vsel %vm577, %v2568, 0
        %v2633 = vsel %vm577, %v2570, 0
        %v2635 = vsel %vm577, %v2572, 0
        %v2637 = vsel %vm577, %v2574, 0
        %2639 = vmatprep.subr.mxu0 0.0
        %2640 = vmatpush1.xpose.msra.mxu0 %v2607
        %2641 = vmatprep.subr.mxu0 0.0
        %2642 = vmatpush1.xpose.msra.mxu0 %v2609
        %2643 = vmatprep.subr.mxu0 0.0
        %2644 = vmatpush1.xpose.msra.mxu0 %v2611
        %2645 = vmatprep.subr.mxu0 0.0
        %2646 = vmatpush1.xpose.msra.mxu0 %v2613
        %2647 = vmatprep.subr.mxu0 0.0
        %2648 = vmatpush1.xpose.msra.mxu0 %v2615
        %2649 = vmatprep.subr.mxu0 0.0
        %2650 = vmatpush1.xpose.msra.mxu0 %v2617
        %2651 = vmatprep.subr.mxu0 0.0
        %2652 = vmatpush1.xpose.msra.mxu0 %v2619
        %2653 = vmatprep.subr.mxu0 0.0
        %2654 = vmatpush1.xpose.msra.mxu0 %v2621
        %2655 = vmatprep.subr.mxu0 0.0
        %2656 = vmatpush1.xpose.msra.mxu0 %v2623
        %2657 = vmatprep.subr.mxu0 0.0
        %2658 = vmatpush1.xpose.msra.mxu0 %v2625
        %2659 = vmatprep.subr.mxu0 0.0
        %2660 = vmatpush1.xpose.msra.mxu0 %v2627
        %2661 = vmatprep.subr.mxu0 0.0
        %2662 = vmatpush1.xpose.msra.mxu0 %v2629
        %2663 = vmatprep.subr.mxu0 0.0
        %2664 = vmatpush1.xpose.msra.mxu0 %v2631
        %2665 = vmatprep.subr.mxu0 0.0
        %2666 = vmatpush1.xpose.msra.mxu0 %v2633
        %2667 = vmatprep.subr.mxu0 0.0
        %2668 = vmatpush1.xpose.msra.mxu0 %v2635
        %2669 = vmatprep.subr.mxu0 0.0
        %2670 = vmatpush1.xpose.msra.mxu0 %v2637
        %2671 = vmatprep.subr.mxu0 0.0
        %2672 = vmatpush1.xpose.msra.mxu0 0.0
        %2673 = vmatprep.subr.mxu0 0.0
        %2674 = vmatpush1.xpose.msra.mxu0 0.0
        %2675 = vmatprep.subr.mxu0 0.0
        %2676 = vmatpush1.xpose.msra.mxu0 0.0
        %2677 = vmatprep.subr.mxu0 0.0
        %2678 = vmatpush1.xpose.msra.mxu0 0.0
        %2679 = vmatprep.subr.mxu0 0.0
        %2680 = vmatpush1.xpose.msra.mxu0 0.0
        %2681 = vmatprep.subr.mxu0 0.0
        %2682 = vmatpush1.xpose.msra.mxu0 0.0
        %2683 = vmatprep.subr.mxu0 0.0
        %2684 = vmatpush1.xpose.msra.mxu0 0.0
        %2685 = vmatprep.subr.mxu0 0.0
        %2686 = vmatpush1.xpose.msra.mxu0 0.0
        %2687 = vmatprep.subr.mxu0 0.0
        %2688 = vmatpush1.xpose.msra.mxu0 0.0
        %2689 = vmatprep.subr.mxu0 0.0
        %2690 = vmatpush1.xpose.msra.mxu0 0.0
        %2691 = vmatprep.subr.mxu0 0.0
        %2692 = vmatpush1.xpose.msra.mxu0 0.0
        %2693 = vmatprep.subr.mxu0 0.0
        %2694 = vmatpush1.xpose.msra.mxu0 0.0
        %2695 = vmatprep.subr.mxu0 0.0
        %2696 = vmatpush1.xpose.msra.mxu0 0.0
        %2697 = vmatprep.subr.mxu0 0.0
        %2698 = vmatpush1.xpose.msra.mxu0 0.0
        %2699 = vmatprep.subr.mxu0 0.0
        %2700 = vmatpush1.xpose.msra.mxu0 0.0
        %2701 = vmatprep.subr.mxu0 0.0
        %2702 = vmatpush1.xpose.msra.mxu0 0.0
        %2703 = vmatprep.mubr.f32.mxu0 0.0
        %2704 = vmatmul.mubr.f32.gmra.mrb[0].mxu0 %v2575
        %v2705 = vpop.f32.mrb[0].mxu0
        %v2706 = vadd.f32 0.0, %v2705
        %v2707 = vpop.f32.mrb[0].mxu0
        %2708 = vmatprep.mubr.f32.mxu0 0.0
        %2709 = vmatmul.mubr.f32.gmra.mrb[0].mxu0 %v2577
        %v2710 = vpop.f32.mrb[0].mxu0
        %v2711 = vadd.f32 0.0, %v2710
        %v2712 = vpop.f32.mrb[0].mxu0
        %2713 = vmatprep.mubr.f32.mxu0 0.0
        %2714 = vmatmul.mubr.f32.gmra.mrb[0].mxu0 %v2579
        %v2715 = vpop.f32.mrb[0].mxu0
        %v2716 = vadd.f32 0.0, %v2715
        %v2717 = vpop.f32.mrb[0].mxu0
        %2718 = vmatprep.mubr.f32.mxu0 0.0
        %2719 = vmatmul.mubr.f32.gmra.mrb[0].mxu0 %v2581
        %v2720 = vpop.f32.mrb[0].mxu0
        %v2721 = vadd.f32 0.0, %v2720
        %v2722 = vpop.f32.mrb[0].mxu0
        %2723 = vmatprep.mubr.f32.mxu0 0.0
        %2724 = vmatmul.mubr.f32.gmra.mrb[0].mxu0 %v2583
        %v2725 = vpop.f32.mrb[0].mxu0
        %v2726 = vadd.f32 0.0, %v2725
        %v2727 = vpop.f32.mrb[0].mxu0
        %2728 = vmatprep.mubr.f32.mxu0 0.0
        %2729 = vmatmul.mubr.f32.gmra.mrb[0].mxu0 %v2585
        %v2730 = vpop.f32.mrb[0].mxu0
        %v2731 = vadd.f32 0.0, %v2730
        %v2732 = vpop.f32.mrb[0].mxu0
        %2733 = vmatprep.mubr.f32.mxu0 0.0
        %2734 = vmatmul.mubr.f32.gmra.mrb[0].mxu0 %v2587
        %v2735 = vpop.f32.mrb[0].mxu0
        %v2736 = vadd.f32 0.0, %v2735
        %v2737 = vpop.f32.mrb[0].mxu0
        %2738 = vmatprep.mubr.f32.mxu0 0.0
        %2739 = vmatmul.mubr.f32.gmra.mrb[0].mxu0 %v2589
        %v2740 = vpop.f32.mrb[0].mxu0
        %v2741 = vadd.f32 0.0, %v2740
        %v2742 = vpop.f32.mrb[0].mxu0
        %2743 = vmatprep.mubr.f32.mxu0 0.0
        %2744 = vmatmul.mubr.f32.gmra.mrb[0].mxu0 %v2591
        %v2745 = vpop.f32.mrb[0].mxu0
        %v2746 = vadd.f32 0.0, %v2745
        %v2747 = vpop.f32.mrb[0].mxu0
        %2748 = vmatprep.mubr.f32.mxu0 0.0
        %2749 = vmatmul.mubr.f32.gmra.mrb[0].mxu0 %v2593
        %v2750 = vpop.f32.mrb[0].mxu0
        %v2751 = vadd.f32 0.0, %v2750
        %v2752 = vpop.f32.mrb[0].mxu0
        %2753 = vmatprep.mubr.f32.mxu0 0.0
        %2754 = vmatmul.mubr.f32.gmra.mrb[0].mxu0 %v2595
        %v2755 = vpop.f32.mrb[0].mxu0
        %v2756 = vadd.f32 0.0, %v2755
        %v2757 = vpop.f32.mrb[0].mxu0
        %2758 = vmatprep.mubr.f32.mxu0 0.0
        %2759 = vmatmul.mubr.f32.gmra.mrb[0].mxu0 %v2597
        %v2760 = vpop.f32.mrb[0].mxu0
        %v2761 = vadd.f32 0.0, %v2760
        %v2762 = vpop.f32.mrb[0].mxu0
        %2763 = vmatprep.mubr.f32.mxu0 0.0
        %2764 = vmatmul.mubr.f32.gmra.mrb[0].mxu0 %v2599
        %v2765 = vpop.f32.mrb[0].mxu0
        %v2766 = vadd.f32 0.0, %v2765
        %v2767 = vpop.f32.mrb[0].mxu0
        %2768 = vmatprep.mubr.f32.mxu0 0.0
        %2769 = vmatmul.mubr.f32.gmra.mrb[0].mxu0 %v2601
        %v2770 = vpop.f32.mrb[0].mxu0
        %v2771 = vadd.f32 0.0, %v2770
        %v2772 = vpop.f32.mrb[0].mxu0
        %2773 = vmatprep.mubr.f32.mxu0 0.0
        %2774 = vmatmul.mubr.f32.gmra.mrb[0].mxu0 %v2603
        %v2775 = vpop.f32.mrb[0].mxu0
        %v2776 = vadd.f32 0.0, %v2775
        %v2777 = vpop.f32.mrb[0].mxu0
        %2778 = vmatprep.mubr.f32.mxu0 0.0
        %2779 = vmatmul.mubr.f32.gmra.mrb[0].mxu0 %v2605
        %v2780 = vpop.f32.mrb[0].mxu0
        %v2781 = vadd.f32 0.0, %v2780
        %v2782 = vpop.f32.mrb[0].mxu0
        %2783 = vdwg.mxu0
        %v2784 = vmul.f32 %v2706, 0.35355338
        %v2785 = vmul.f32 %v2711, 0.35355338
        %v2786 = vmul.f32 %v2716, 0.35355338
        %v2787 = vmul.f32 %v2721, 0.35355338
        %v2788 = vmul.f32 %v2726, 0.35355338
        %v2789 = vmul.f32 %v2731, 0.35355338
        %v2790 = vmul.f32 %v2736, 0.35355338
        %v2791 = vmul.f32 %v2741, 0.35355338
        %v2792 = vmul.f32 %v2746, 0.35355338
        %v2793 = vmul.f32 %v2751, 0.35355338
        %v2794 = vmul.f32 %v2756, 0.35355338
        %v2795 = vmul.f32 %v2761, 0.35355338
        %v2796 = vmul.f32 %v2766, 0.35355338
        %v2797 = vmul.f32 %v2771, 0.35355338
        %v2798 = vmul.f32 %v2776, 0.35355338
        %v2799 = vmul.f32 %v2781, 0.35355338
        %v2800 = vld [vmem:[%s1] sm:$0x1]
        %v2802 = vlaneseq
        %v2803 = vshrl.u32 %v2802, 7
        %v2804 = vsub.s32 0, %v2803
        %v2805 = vrot.slane %v2800, %v2804
        %v2807 = vadd.f32 %v2784, %v2805
        %v2808 = vadd.f32 %v2785, %v2805
        %v2809 = vadd.f32 %v2786, %v2805
        %v2810 = vadd.f32 %v2787, %v2805
        %v2811 = vadd.f32 %v2788, %v2805
        %v2812 = vadd.f32 %v2789, %v2805
        %v2813 = vadd.f32 %v2790, %v2805
        %v2814 = vadd.f32 %v2791, %v2805
        %v2815 = vadd.f32 %v2792, %v2805
        %v2816 = vadd.f32 %v2793, %v2805
        %v2817 = vadd.f32 %v2794, %v2805
        %v2818 = vadd.f32 %v2795, %v2805
        %v2819 = vadd.f32 %v2796, %v2805
        %v2820 = vadd.f32 %v2797, %v2805
        %v2821 = vadd.f32 %v2798, %v2805
        %v2822 = vadd.f32 %v2799, %v2805
        %2823 = vmax.xlane.f32.xlu0 %v2807
        %v2824 = vpop.xlane.xlu0 %2823
        %2825 = vmax.xlane.f32.xlu0 %v2808
        %v2826 = vpop.xlane.xlu0 %2825
        %2827 = vmax.xlane.f32.xlu0 %v2809
        %v2828 = vpop.xlane.xlu0 %2827
        %2829 = vmax.xlane.f32.xlu0 %v2810
        %v2830 = vpop.xlane.xlu0 %2829
        %2831 = vmax.xlane.f32.xlu0 %v2811
        %v2832 = vpop.xlane.xlu0 %2831
        %2833 = vmax.xlane.f32.xlu0 %v2812
        %v2834 = vpop.xlane.xlu0 %2833
        %2835 = vmax.xlane.f32.xlu0 %v2813
        %v2836 = vpop.xlane.xlu0 %2835
        %2837 = vmax.xlane.f32.xlu0 %v2814
        %v2838 = vpop.xlane.xlu0 %2837
        %2839 = vmax.xlane.f32.xlu0 %v2815
        %v2840 = vpop.xlane.xlu0 %2839
        %2841 = vmax.xlane.f32.xlu0 %v2816
        %v2842 = vpop.xlane.xlu0 %2841
        %2843 = vmax.xlane.f32.xlu0 %v2817
        %v2844 = vpop.xlane.xlu0 %2843
        %2845 = vmax.xlane.f32.xlu0 %v2818
        %v2846 = vpop.xlane.xlu0 %2845
        %2847 = vmax.xlane.f32.xlu0 %v2819
        %v2848 = vpop.xlane.xlu0 %2847
        %2849 = vmax.xlane.f32.xlu0 %v2820
        %v2850 = vpop.xlane.xlu0 %2849
        %2851 = vmax.xlane.f32.xlu0 %v2821
        %v2852 = vpop.xlane.xlu0 %2851
        %2853 = vmax.xlane.f32.xlu0 %v2822
        %v2854 = vpop.xlane.xlu0 %2853
        %v2855 = vsub.f32 %v2807, %v2824
        %v2856 = vsub.f32 %v2808, %v2826
        %v2857 = vsub.f32 %v2809, %v2828
        %v2858 = vsub.f32 %v2810, %v2830
        %v2859 = vsub.f32 %v2811, %v2832
        %v2860 = vsub.f32 %v2812, %v2834
        %v2861 = vsub.f32 %v2813, %v2836
        %v2862 = vsub.f32 %v2814, %v2838
        %v2863 = vsub.f32 %v2815, %v2840
        %v2864 = vsub.f32 %v2816, %v2842
        %v2865 = vsub.f32 %v2817, %v2844
        %v2866 = vsub.f32 %v2818, %v2846
        %v2867 = vsub.f32 %v2819, %v2848
        %v2868 = vsub.f32 %v2820, %v2850
        %v2869 = vsub.f32 %v2821, %v2852
        %v2870 = vsub.f32 %v2822, %v2854
        %v2871 = vmul.f32 %v2855, 1.442695
        %v2872 = vpow.pop %v2871
        %v2873 = vmul.f32 %v2856, 1.442695
        %v2874 = vpow.pop %v2873
        %v2875 = vmul.f32 %v2857, 1.442695
        %v2876 = vpow.pop %v2875
        %v2877 = vmul.f32 %v2858, 1.442695
        %v2878 = vpow.pop %v2877
        %v2879 = vmul.f32 %v2859, 1.442695
        %v2880 = vpow.pop %v2879
        %v2881 = vmul.f32 %v2860, 1.442695
        %v2882 = vpow.pop %v2881
        %v2883 = vmul.f32 %v2861, 1.442695
        %v2884 = vpow.pop %v2883
        %v2885 = vmul.f32 %v2862, 1.442695
        %v2886 = vpow.pop %v2885
        %v2887 = vmul.f32 %v2863, 1.442695
        %v2888 = vpow.pop %v2887
        %v2889 = vmul.f32 %v2864, 1.442695
        %v2890 = vpow.pop %v2889
        %v2891 = vmul.f32 %v2865, 1.442695
        %v2892 = vpow.pop %v2891
        %v2893 = vmul.f32 %v2866, 1.442695
        %v2894 = vpow.pop %v2893
        %v2895 = vmul.f32 %v2867, 1.442695
        %v2896 = vpow.pop %v2895
        %v2897 = vmul.f32 %v2868, 1.442695
        %v2898 = vpow.pop %v2897
        %v2899 = vmul.f32 %v2869, 1.442695
        %v2900 = vpow.pop %v2899
        %v2901 = vmul.f32 %v2870, 1.442695
        %v2902 = vpow.pop %v2901
        %2903 = vadd.xlane.f32.xlu0 %v2872
        %v2904 = vpop.xlane.xlu0 %2903
        %2905 = vadd.xlane.f32.xlu0 %v2874
        %v2906 = vpop.xlane.xlu0 %2905
        %2907 = vadd.xlane.f32.xlu0 %v2876
        %v2908 = vpop.xlane.xlu0 %2907
        %2909 = vadd.xlane.f32.xlu0 %v2878
        %v2910 = vpop.xlane.xlu0 %2909
        %2911 = vadd.xlane.f32.xlu0 %v2880
        %v2912 = vpop.xlane.xlu0 %2911
        %2913 = vadd.xlane.f32.xlu0 %v2882
        %v2914 = vpop.xlane.xlu0 %2913
        %2915 = vadd.xlane.f32.xlu0 %v2884
        %v2916 = vpop.xlane.xlu0 %2915
        %2917 = vadd.xlane.f32.xlu0 %v2886
        %v2918 = vpop.xlane.xlu0 %2917
        %2919 = vadd.xlane.f32.xlu0 %v2888
        %v2920 = vpop.xlane.xlu0 %2919
        %2921 = vadd.xlane.f32.xlu0 %v2890
        %v2922 = vpop.xlane.xlu0 %2921
        %2923 = vadd.xlane.f32.xlu0 %v2892
        %v2924 = vpop.xlane.xlu0 %2923
        %2925 = vadd.xlane.f32.xlu0 %v2894
        %v2926 = vpop.xlane.xlu0 %2925
        %2927 = vadd.xlane.f32.xlu0 %v2896
        %v2928 = vpop.xlane.xlu0 %2927
        %2929 = vadd.xlane.f32.xlu0 %v2898
        %v2930 = vpop.xlane.xlu0 %2929
        %2931 = vadd.xlane.f32.xlu0 %v2900
        %v2932 = vpop.xlane.xlu0 %2931
        %2933 = vadd.xlane.f32.xlu0 %v2902
        %v2934 = vpop.xlane.xlu0 %2933
        %v2935 = vrcp.pop %v2904
        %v2936 = vrcp.pop %v2906
        %v2937 = vrcp.pop %v2908
        %v2938 = vrcp.pop %v2910
        %v2939 = vrcp.pop %v2912
        %v2940 = vrcp.pop %v2914
        %v2941 = vrcp.pop %v2916
        %v2942 = vrcp.pop %v2918
        %v2943 = vrcp.pop %v2920
        %v2944 = vrcp.pop %v2922
        %v2945 = vrcp.pop %v2924
        %v2946 = vrcp.pop %v2926
        %v2947 = vrcp.pop %v2928
        %v2948 = vrcp.pop %v2930
        %v2949 = vrcp.pop %v2932
        %v2950 = vrcp.pop %v2934
        %v2951 = vmul.f32 %v2872, %v2935
        %v2952 = vmul.f32 %v2874, %v2936
        %v2953 = vmul.f32 %v2876, %v2937
        %v2954 = vmul.f32 %v2878, %v2938
        %v2955 = vmul.f32 %v2880, %v2939
        %v2956 = vmul.f32 %v2882, %v2940
        %v2957 = vmul.f32 %v2884, %v2941
        %v2958 = vmul.f32 %v2886, %v2942
        %v2959 = vmul.f32 %v2888, %v2943
        %v2960 = vmul.f32 %v2890, %v2944
        %v2961 = vmul.f32 %v2892, %v2945
        %v2962 = vmul.f32 %v2894, %v2946
        %v2963 = vmul.f32 %v2896, %v2947
        %v2964 = vmul.f32 %v2898, %v2948
        %v2965 = vmul.f32 %v2900, %v2949
        %v2966 = vmul.f32 %v2902, %v2950
        %s2967 = scalar_lea.vmem %s293, 384 [#allocation3]
        %2968 = vst [vmem:[%s2967] sm:$0xff] %v2951
        %2969 = vst [vmem:[%s2967 + $0x8] sm:$0xff] %v2952
        %2970 = vst [vmem:[%s2967 + $0x10] sm:$0xff] %v2953
        %2971 = vst [vmem:[%s2967 + $0x18] sm:$0xff] %v2954
        %2972 = vst [vmem:[%s2967 + $0x20] sm:$0xff] %v2955
        %2973 = vst [vmem:[%s2967 + $0x28] sm:$0xff] %v2956
        %2974 = vst [vmem:[%s2967 + $0x30] sm:$0xff] %v2957
        %2975 = vst [vmem:[%s2967 + $0x38] sm:$0xff] %v2958
        %2976 = vst [vmem:[%s2967 + $0x40] sm:$0xff] %v2959
        %2977 = vst [vmem:[%s2967 + $0x48] sm:$0xff] %v2960
        %2978 = vst [vmem:[%s2967 + $0x50] sm:$0xff] %v2961
        %2979 = vst [vmem:[%s2967 + $0x58] sm:$0xff] %v2962
        %2980 = vst [vmem:[%s2967 + $0x60] sm:$0xff] %v2963
        %2981 = vst [vmem:[%s2967 + $0x68] sm:$0xff] %v2964
        %2982 = vst [vmem:[%s2967 + $0x70] sm:$0xff] %v2965
        %2983 = vst [vmem:[%s2967 + $0x78] sm:$0xff] %v2966
        %2984 = vrot.lane.b32.xlu0 %v451, 40
        %v2985 = vpop.permute.xlu0 %2984
        %2986 = vrot.lane.b32.xlu0 %v456, 40
        %v2987 = vpop.permute.xlu0 %2986
        %2988 = vrot.lane.b32.xlu0 %v461, 40
        %v2989 = vpop.permute.xlu0 %2988
        %2990 = vrot.lane.b32.xlu0 %v466, 40
        %v2991 = vpop.permute.xlu0 %2990
        %2992 = vrot.lane.b32.xlu0 %v471, 40
        %v2993 = vpop.permute.xlu0 %2992
        %2994 = vrot.lane.b32.xlu0 %v476, 40
        %v2995 = vpop.permute.xlu0 %2994
        %2996 = vrot.lane.b32.xlu0 %v481, 40
        %v2997 = vpop.permute.xlu0 %2996
        %2998 = vrot.lane.b32.xlu0 %v486, 40
        %v2999 = vpop.permute.xlu0 %2998
        %3000 = vrot.lane.b32.xlu0 %v491, 40
        %v3001 = vpop.permute.xlu0 %3000
        %3002 = vrot.lane.b32.xlu0 %v496, 40
        %v3003 = vpop.permute.xlu0 %3002
        %3004 = vrot.lane.b32.xlu0 %v501, 40
        %v3005 = vpop.permute.xlu0 %3004
        %3006 = vrot.lane.b32.xlu0 %v506, 40
        %v3007 = vpop.permute.xlu0 %3006
        %3008 = vrot.lane.b32.xlu0 %v511, 40
        %v3009 = vpop.permute.xlu0 %3008
        %3010 = vrot.lane.b32.xlu0 %v516, 40
        %v3011 = vpop.permute.xlu0 %3010
        %3012 = vrot.lane.b32.xlu0 %v521, 40
        %v3013 = vpop.permute.xlu0 %3012
        %3014 = vrot.lane.b32.xlu0 %v526, 40
        %v3015 = vpop.permute.xlu0 %3014
        %3032 = vmatprep.subr.mxu0 0.0
        %3033 = vmatpush1.msra.mxu0 %v2985
        %3034 = vmatprep.subr.mxu0 0.0
        %3035 = vmatpush1.msra.mxu0 %v2987
        %3036 = vmatprep.subr.mxu0 0.0
        %3037 = vmatpush1.msra.mxu0 %v2989
        %3038 = vmatprep.subr.mxu0 0.0
        %3039 = vmatpush1.msra.mxu0 %v2991
        %3040 = vmatprep.subr.mxu0 0.0
        %3041 = vmatpush1.msra.mxu0 %v2993
        %3042 = vmatprep.subr.mxu0 0.0
        %3043 = vmatpush1.msra.mxu0 %v2995
        %3044 = vmatprep.subr.mxu0 0.0
        %3045 = vmatpush1.msra.mxu0 %v2997
        %3046 = vmatprep.subr.mxu0 0.0
        %3047 = vmatpush1.msra.mxu0 %v2999
        %3048 = vmatprep.subr.mxu0 0.0
        %3049 = vmatpush1.msra.mxu0 %v3001
        %3050 = vmatprep.subr.mxu0 0.0
        %3051 = vmatpush1.msra.mxu0 %v3003
        %3052 = vmatprep.subr.mxu0 0.0
        %3053 = vmatpush1.msra.mxu0 %v3005
        %3054 = vmatprep.subr.mxu0 0.0
        %3055 = vmatpush1.msra.mxu0 %v3007
        %3056 = vmatprep.subr.mxu0 0.0
        %3057 = vmatpush1.msra.mxu0 %v3009
        %3058 = vmatprep.subr.mxu0 0.0
        %3059 = vmatpush1.msra.mxu0 %v3011
        %3060 = vmatprep.subr.mxu0 0.0
        %3061 = vmatpush1.msra.mxu0 %v3013
        %3062 = vmatprep.subr.mxu0 0.0
        %3063 = vmatpush1.msra.mxu0 %v3015
        %3064 = vmatprep.subr.mxu0 0.0
        %3065 = vmatpush1.msra.mxu0 0.0
        %3066 = vmatprep.subr.mxu0 0.0
        %3067 = vmatpush1.msra.mxu0 0.0
        %3068 = vmatprep.subr.mxu0 0.0
        %3069 = vmatpush1.msra.mxu0 0.0
        %3070 = vmatprep.subr.mxu0 0.0
        %3071 = vmatpush1.msra.mxu0 0.0
        %3072 = vmatprep.subr.mxu0 0.0
        %3073 = vmatpush1.msra.mxu0 0.0
        %3074 = vmatprep.subr.mxu0 0.0
        %3075 = vmatpush1.msra.mxu0 0.0
        %3076 = vmatprep.subr.mxu0 0.0
        %3077 = vmatpush1.msra.mxu0 0.0
        %3078 = vmatprep.subr.mxu0 0.0
        %3079 = vmatpush1.msra.mxu0 0.0
        %3080 = vmatprep.subr.mxu0 0.0
        %3081 = vmatpush1.msra.mxu0 0.0
        %3082 = vmatprep.subr.mxu0 0.0
        %3083 = vmatpush1.msra.mxu0 0.0
        %3084 = vmatprep.subr.mxu0 0.0
        %3085 = vmatpush1.msra.mxu0 0.0
        %3086 = vmatprep.subr.mxu0 0.0
        %3087 = vmatpush1.msra.mxu0 0.0
        %3088 = vmatprep.subr.mxu0 0.0
        %3089 = vmatpush1.msra.mxu0 0.0
        %3090 = vmatprep.subr.mxu0 0.0
        %3091 = vmatpush1.msra.mxu0 0.0
        %3092 = vmatprep.subr.mxu0 0.0
        %3093 = vmatpush1.msra.mxu0 0.0
        %3094 = vmatprep.subr.mxu0 0.0
        %3095 = vmatpush1.msra.mxu0 0.0
        %3096 = vmatprep.mubr.f32.mxu0 0.0
        %3097 = vmatmul.mubr.f32.gmra.mrb[0].mxu0 %v2951
        %v3098 = vpop.f32.mrb[0].mxu0
        %v3099 = vadd.f32 0.0, %v3098
        %v3100 = vpop.f32.mrb[0].mxu0
        %3101 = vmatprep.mubr.f32.mxu0 0.0
        %3102 = vmatmul.mubr.f32.gmra.mrb[0].mxu0 %v2952
        %v3103 = vpop.f32.mrb[0].mxu0
        %v3104 = vadd.f32 0.0, %v3103
        %v3105 = vpop.f32.mrb[0].mxu0
        %3106 = vmatprep.mubr.f32.mxu0 0.0
        %3107 = vmatmul.mubr.f32.gmra.mrb[0].mxu0 %v2953
        %v3108 = vpop.f32.mrb[0].mxu0
        %v3109 = vadd.f32 0.0, %v3108
        %v3110 = vpop.f32.mrb[0].mxu0
        %3111 = vmatprep.mubr.f32.mxu0 0.0
        %3112 = vmatmul.mubr.f32.gmra.mrb[0].mxu0 %v2954
        %v3113 = vpop.f32.mrb[0].mxu0
        %v3114 = vadd.f32 0.0, %v3113
        %v3115 = vpop.f32.mrb[0].mxu0
        %3116 = vmatprep.mubr.f32.mxu0 0.0
        %3117 = vmatmul.mubr.f32.gmra.mrb[0].mxu0 %v2955
        %v3118 = vpop.f32.mrb[0].mxu0
        %v3119 = vadd.f32 0.0, %v3118
        %v3120 = vpop.f32.mrb[0].mxu0
        %3121 = vmatprep.mubr.f32.mxu0 0.0
        %3122 = vmatmul.mubr.f32.gmra.mrb[0].mxu0 %v2956
        %v3123 = vpop.f32.mrb[0].mxu0
        %v3124 = vadd.f32 0.0, %v3123
        %v3125 = vpop.f32.mrb[0].mxu0
        %3126 = vmatprep.mubr.f32.mxu0 0.0
        %3127 = vmatmul.mubr.f32.gmra.mrb[0].mxu0 %v2957
        %v3128 = vpop.f32.mrb[0].mxu0
        %v3129 = vadd.f32 0.0, %v3128
        %v3130 = vpop.f32.mrb[0].mxu0
        %3131 = vmatprep.mubr.f32.mxu0 0.0
        %3132 = vmatmul.mubr.f32.gmra.mrb[0].mxu0 %v2958
        %v3133 = vpop.f32.mrb[0].mxu0
        %v3134 = vadd.f32 0.0, %v3133
        %v3135 = vpop.f32.mrb[0].mxu0
        %3136 = vmatprep.mubr.f32.mxu0 0.0
        %3137 = vmatmul.mubr.f32.gmra.mrb[0].mxu0 %v2959
        %v3138 = vpop.f32.mrb[0].mxu0
        %v3139 = vadd.f32 0.0, %v3138
        %v3140 = vpop.f32.mrb[0].mxu0
        %3141 = vmatprep.mubr.f32.mxu0 0.0
        %3142 = vmatmul.mubr.f32.gmra.mrb[0].mxu0 %v2960
        %v3143 = vpop.f32.mrb[0].mxu0
        %v3144 = vadd.f32 0.0, %v3143
        %v3145 = vpop.f32.mrb[0].mxu0
        %3146 = vmatprep.mubr.f32.mxu0 0.0
        %3147 = vmatmul.mubr.f32.gmra.mrb[0].mxu0 %v2961
        %v3148 = vpop.f32.mrb[0].mxu0
        %v3149 = vadd.f32 0.0, %v3148
        %v3150 = vpop.f32.mrb[0].mxu0
        %3151 = vmatprep.mubr.f32.mxu0 0.0
        %3152 = vmatmul.mubr.f32.gmra.mrb[0].mxu0 %v2962
        %v3153 = vpop.f32.mrb[0].mxu0
        %v3154 = vadd.f32 0.0, %v3153
        %v3155 = vpop.f32.mrb[0].mxu0
        %3156 = vmatprep.mubr.f32.mxu0 0.0
        %3157 = vmatmul.mubr.f32.gmra.mrb[0].mxu0 %v2963
        %v3158 = vpop.f32.mrb[0].mxu0
        %v3159 = vadd.f32 0.0, %v3158
        %v3160 = vpop.f32.mrb[0].mxu0
        %3161 = vmatprep.mubr.f32.mxu0 0.0
        %3162 = vmatmul.mubr.f32.gmra.mrb[0].mxu0 %v2964
        %v3163 = vpop.f32.mrb[0].mxu0
        %v3164 = vadd.f32 0.0, %v3163
        %v3165 = vpop.f32.mrb[0].mxu0
        %3166 = vmatprep.mubr.f32.mxu0 0.0
        %3167 = vmatmul.mubr.f32.gmra.mrb[0].mxu0 %v2965
        %v3168 = vpop.f32.mrb[0].mxu0
        %v3169 = vadd.f32 0.0, %v3168
        %v3170 = vpop.f32.mrb[0].mxu0
        %3171 = vmatprep.mubr.f32.mxu0 0.0
        %3172 = vmatmul.mubr.f32.gmra.mrb[0].mxu0 %v2966
        %v3173 = vpop.f32.mrb[0].mxu0
        %v3174 = vadd.f32 0.0, %v3173
        %v3175 = vpop.f32.mrb[0].mxu0
        %3176 = vdwg.mxu0
        %3193 = vrot.lane.b32.xlu0 %v1767, 8
        %v3194 = vpop.permute.xlu0 %3193
        %3195 = vrot.lane.b32.xlu0 %v1772, 8
        %v3196 = vpop.permute.xlu0 %3195
        %3197 = vrot.lane.b32.xlu0 %v1777, 8
        %v3198 = vpop.permute.xlu0 %3197
        %3199 = vrot.lane.b32.xlu0 %v1782, 8
        %v3200 = vpop.permute.xlu0 %3199
        %3201 = vrot.lane.b32.xlu0 %v1787, 8
        %v3202 = vpop.permute.xlu0 %3201
        %3203 = vrot.lane.b32.xlu0 %v1792, 8
        %v3204 = vpop.permute.xlu0 %3203
        %3205 = vrot.lane.b32.xlu0 %v1797, 8
        %v3206 = vpop.permute.xlu0 %3205
        %3207 = vrot.lane.b32.xlu0 %v1802, 8
        %v3208 = vpop.permute.xlu0 %3207
        %3209 = vrot.lane.b32.xlu0 %v1807, 8
        %v3210 = vpop.permute.xlu0 %3209
        %3211 = vrot.lane.b32.xlu0 %v1812, 8
        %v3212 = vpop.permute.xlu0 %3211
        %3213 = vrot.lane.b32.xlu0 %v1817, 8
        %v3214 = vpop.permute.xlu0 %3213
        %3215 = vrot.lane.b32.xlu0 %v1822, 8
        %v3216 = vpop.permute.xlu0 %3215
        %3217 = vrot.lane.b32.xlu0 %v1827, 8
        %v3218 = vpop.permute.xlu0 %3217
        %3219 = vrot.lane.b32.xlu0 %v1832, 8
        %v3220 = vpop.permute.xlu0 %3219
        %3221 = vrot.lane.b32.xlu0 %v1837, 8
        %v3222 = vpop.permute.xlu0 %3221
        %3223 = vrot.lane.b32.xlu0 %v1842, 8
        %v3224 = vpop.permute.xlu0 %3223
        %3257 = vrot.lane.b32.xlu0 %v2433, 16
        %v3258 = vpop.permute.xlu0 %3257
        %3259 = vrot.lane.b32.xlu0 %v2438, 16
        %v3260 = vpop.permute.xlu0 %3259
        %3261 = vrot.lane.b32.xlu0 %v2443, 16
        %v3262 = vpop.permute.xlu0 %3261
        %3263 = vrot.lane.b32.xlu0 %v2448, 16
        %v3264 = vpop.permute.xlu0 %3263
        %3265 = vrot.lane.b32.xlu0 %v2453, 16
        %v3266 = vpop.permute.xlu0 %3265
        %3267 = vrot.lane.b32.xlu0 %v2458, 16
        %v3268 = vpop.permute.xlu0 %3267
        %3269 = vrot.lane.b32.xlu0 %v2463, 16
        %v3270 = vpop.permute.xlu0 %3269
        %3271 = vrot.lane.b32.xlu0 %v2468, 16
        %v3272 = vpop.permute.xlu0 %3271
        %3273 = vrot.lane.b32.xlu0 %v2473, 16
        %v3274 = vpop.permute.xlu0 %3273
        %3275 = vrot.lane.b32.xlu0 %v2478, 16
        %v3276 = vpop.permute.xlu0 %3275
        %3277 = vrot.lane.b32.xlu0 %v2483, 16
        %v3278 = vpop.permute.xlu0 %3277
        %3279 = vrot.lane.b32.xlu0 %v2488, 16
        %v3280 = vpop.permute.xlu0 %3279
        %3281 = vrot.lane.b32.xlu0 %v2493, 16
        %v3282 = vpop.permute.xlu0 %3281
        %3283 = vrot.lane.b32.xlu0 %v2498, 16
        %v3284 = vpop.permute.xlu0 %3283
        %3285 = vrot.lane.b32.xlu0 %v2503, 16
        %v3286 = vpop.permute.xlu0 %3285
        %3287 = vrot.lane.b32.xlu0 %v2508, 16
        %v3288 = vpop.permute.xlu0 %3287
        %3321 = vrot.lane.b32.xlu0 %v3099, 24
        %v3322 = vpop.permute.xlu0 %3321
        %3323 = vrot.lane.b32.xlu0 %v3104, 24
        %v3324 = vpop.permute.xlu0 %3323
        %3325 = vrot.lane.b32.xlu0 %v3109, 24
        %v3326 = vpop.permute.xlu0 %3325
        %3327 = vrot.lane.b32.xlu0 %v3114, 24
        %v3328 = vpop.permute.xlu0 %3327
        %3329 = vrot.lane.b32.xlu0 %v3119, 24
        %v3330 = vpop.permute.xlu0 %3329
        %3331 = vrot.lane.b32.xlu0 %v3124, 24
        %v3332 = vpop.permute.xlu0 %3331
        %3333 = vrot.lane.b32.xlu0 %v3129, 24
        %v3334 = vpop.permute.xlu0 %3333
        %3335 = vrot.lane.b32.xlu0 %v3134, 24
        %v3336 = vpop.permute.xlu0 %3335
        %3337 = vrot.lane.b32.xlu0 %v3139, 24
        %v3338 = vpop.permute.xlu0 %3337
        %3339 = vrot.lane.b32.xlu0 %v3144, 24
        %v3340 = vpop.permute.xlu0 %3339
        %3341 = vrot.lane.b32.xlu0 %v3149, 24
        %v3342 = vpop.permute.xlu0 %3341
        %3343 = vrot.lane.b32.xlu0 %v3154, 24
        %v3344 = vpop.permute.xlu0 %3343
        %3345 = vrot.lane.b32.xlu0 %v3159, 24
        %v3346 = vpop.permute.xlu0 %3345
        %3347 = vrot.lane.b32.xlu0 %v3164, 24
        %v3348 = vpop.permute.xlu0 %3347
        %3349 = vrot.lane.b32.xlu0 %v3169, 24
        %v3350 = vpop.permute.xlu0 %3349
        %3351 = vrot.lane.b32.xlu0 %v3174, 24
        %v3352 = vpop.permute.xlu0 %3351
        %v3369 = vsel %vm577, %v1101, %v3194
        %v3370 = vsel %vm577, %v1106, %v3196
        %v3371 = vsel %vm577, %v1111, %v3198
        %v3372 = vsel %vm577, %v1116, %v3200
        %v3373 = vsel %vm577, %v1121, %v3202
        %v3374 = vsel %vm577, %v1126, %v3204
        %v3375 = vsel %vm577, %v1131, %v3206
        %v3376 = vsel %vm577, %v1136, %v3208
        %v3377 = vsel %vm577, %v1141, %v3210
        %v3378 = vsel %vm577, %v1146, %v3212
        %v3379 = vsel %vm577, %v1151, %v3214
        %v3380 = vsel %vm577, %v1156, %v3216
        %v3381 = vsel %vm577, %v1161, %v3218
        %v3382 = vsel %vm577, %v1166, %v3220
        %v3383 = vsel %vm577, %v1171, %v3222
        %v3384 = vsel %vm577, %v1176, %v3224
        %vm3385 = vcmask 130048
        %v3386 = vsel %vm3385, %v3369, %v3258
        %v3387 = vsel %vm3385, %v3370, %v3260
        %v3388 = vsel %vm3385, %v3371, %v3262
        %v3389 = vsel %vm3385, %v3372, %v3264
        %v3390 = vsel %vm3385, %v3373, %v3266
        %v3391 = vsel %vm3385, %v3374, %v3268
        %v3392 = vsel %vm3385, %v3375, %v3270
        %v3393 = vsel %vm3385, %v3376, %v3272
        %v3394 = vsel %vm3385, %v3377, %v3274
        %v3395 = vsel %vm3385, %v3378, %v3276
        %v3396 = vsel %vm3385, %v3379, %v3278
        %v3397 = vsel %vm3385, %v3380, %v3280
        %v3398 = vsel %vm3385, %v3381, %v3282
        %v3399 = vsel %vm3385, %v3382, %v3284
        %v3400 = vsel %vm3385, %v3383, %v3286
        %v3401 = vsel %vm3385, %v3384, %v3288
        %vm3402 = vcmask 195584
        %v3403 = vsel %vm3402, %v3386, %v3322
        %v3404 = vsel %vm3402, %v3387, %v3324
        %v3405 = vsel %vm3402, %v3388, %v3326
        %v3406 = vsel %vm3402, %v3389, %v3328
        %v3407 = vsel %vm3402, %v3390, %v3330
        %v3408 = vsel %vm3402, %v3391, %v3332
        %v3409 = vsel %vm3402, %v3392, %v3334
        %v3410 = vsel %vm3402, %v3393, %v3336
        %v3411 = vsel %vm3402, %v3394, %v3338
        %v3412 = vsel %vm3402, %v3395, %v3340
        %v3413 = vsel %vm3402, %v3396, %v3342
        %v3414 = vsel %vm3402, %v3397, %v3344
        %v3415 = vsel %vm3402, %v3398, %v3346
        %v3416 = vsel %vm3402, %v3399, %v3348
        %v3417 = vsel %vm3402, %v3400, %v3350
        %v3418 = vsel %vm3402, %v3401, %v3352
        %s3419 = smul.u32 %s27, 128
        %s3420 = scalar_lea.vmem [#allocation2], %s3419
        %3421 = vst.msk [vmem:[%s3420] sm:$0xff] %vm335, %v3403
        %3422 = vst.msk [vmem:[%s3420 + $0x8] sm:$0xff] %vm335, %v3404
        %3423 = vst.msk [vmem:[%s3420 + $0x10] sm:$0xff] %vm335, %v3405
        %3424 = vst.msk [vmem:[%s3420 + $0x18] sm:$0xff] %vm335, %v3406
        %3425 = vst.msk [vmem:[%s3420 + $0x20] sm:$0xff] %vm335, %v3407
        %3426 = vst.msk [vmem:[%s3420 + $0x28] sm:$0xff] %vm335, %v3408
        %3427 = vst.msk [vmem:[%s3420 + $0x30] sm:$0xff] %vm335, %v3409
        %3428 = vst.msk [vmem:[%s3420 + $0x38] sm:$0xff] %vm335, %v3410
        %3429 = vst.msk [vmem:[%s3420 + $0x40] sm:$0xff] %vm335, %v3411
        %3430 = vst.msk [vmem:[%s3420 + $0x48] sm:$0xff] %vm335, %v3412
        %3431 = vst.msk [vmem:[%s3420 + $0x50] sm:$0xff] %vm335, %v3413
        %3432 = vst.msk [vmem:[%s3420 + $0x58] sm:$0xff] %vm335, %v3414
        %3433 = vst.msk [vmem:[%s3420 + $0x60] sm:$0xff] %vm335, %v3415
        %3434 = vst.msk [vmem:[%s3420 + $0x68] sm:$0xff] %vm335, %v3416
        %3435 = vst.msk [vmem:[%s3420 + $0x70] sm:$0xff] %vm335, %v3417
        %3436 = vst.msk [vmem:[%s3420 + $0x78] sm:$0xff] %vm335, %v3418
        %p3437 = scmp.eq.s32.totalorder %s27, 0
        // Predicated region
        $region45: #{tpu_custom_call.1} parent=43 // pred_check
          %p3438 = pneg %p3437
        $region46: #{tpu_custom_call.1} parent=43 // pred_check_branch
          %3440 = sbr.rel (%p3438) target = $region48
        $region47: #{tpu_custom_call.1} parent=43 // pred_region
          %v3441 = vld [vmem:[#allocation2] sm:$0xff]
          %v3442 = vld [vmem:[#allocation2 + $0x8] sm:$0xff]
          %v3443 = vld [vmem:[#allocation2 + $0x10] sm:$0xff]
          %v3444 = vld [vmem:[#allocation2 + $0x18] sm:$0xff]
          %v3445 = vld [vmem:[#allocation2 + $0x20] sm:$0xff]
          %v3446 = vld [vmem:[#allocation2 + $0x28] sm:$0xff]
          %v3447 = vld [vmem:[#allocation2 + $0x30] sm:$0xff]
          %v3448 = vld [vmem:[#allocation2 + $0x38] sm:$0xff]
          %v3449 = vld [vmem:[#allocation2 + $0x40] sm:$0xff]
          %v3450 = vld [vmem:[#allocation2 + $0x48] sm:$0xff]
          %v3451 = vld [vmem:[#allocation2 + $0x50] sm:$0xff]
          %v3452 = vld [vmem:[#allocation2 + $0x58] sm:$0xff]
          %v3453 = vld [vmem:[#allocation2 + $0x60] sm:$0xff]
          %v3454 = vld [vmem:[#allocation2 + $0x68] sm:$0xff]
          %v3455 = vld [vmem:[#allocation2 + $0x70] sm:$0xff]
          %v3456 = vld [vmem:[#allocation2 + $0x78] sm:$0xff]
          %v3457 = vld [vmem:[%s4] sm:$0xff]
          %v3458 = vld [vmem:[%s4 + $0x8] sm:$0xff]
          %v3459 = vld [vmem:[%s4 + $0x10] sm:$0xff]
          %v3460 = vld [vmem:[%s4 + $0x18] sm:$0xff]
          %v3461 = vld [vmem:[%s5] sm:$0x1]
          %v3463 = vlaneseq
          %v3464 = vshrl.u32 %v3463, 7
          %v3465 = vsub.s32 0, %v3464
          %v3466 = vrot.slane %v3461, %v3465
          %v3469 = vsel %vm335, %v3441, 0
          %v3472 = vsel %vm335, %v3442, 0
          %v3475 = vsel %vm335, %v3443, 0
          %v3478 = vsel %vm335, %v3444, 0
          %v3481 = vsel %vm335, %v3445, 0
          %v3484 = vsel %vm335, %v3446, 0
          %v3487 = vsel %vm335, %v3447, 0
          %v3490 = vsel %vm335, %v3448, 0
          %v3493 = vsel %vm335, %v3449, 0
          %v3496 = vsel %vm335, %v3450, 0
          %v3499 = vsel %vm335, %v3451, 0
          %v3502 = vsel %vm335, %v3452, 0
          %v3505 = vsel %vm335, %v3453, 0
          %v3508 = vsel %vm335, %v3454, 0
          %v3511 = vsel %vm335, %v3455, 0
          %v3514 = vsel %vm335, %v3456, 0
          %3516 = vmatprep.subr.mxu0 0.0
          %3517 = vmatpush1.msra.mxu0 %v3457
          %3518 = vmatprep.subr.mxu0 0.0
          %3519 = vmatpush1.msra.mxu0 %v3458
          %3520 = vmatprep.subr.mxu0 0.0
          %3521 = vmatpush1.msra.mxu0 %v3459
          %3522 = vmatprep.subr.mxu0 0.0
          %3523 = vmatpush1.msra.mxu0 %v3460
          %3524 = vmatprep.subr.mxu0 0.0
          %3525 = vmatpush1.msra.mxu0 0.0
          %3526 = vmatprep.subr.mxu0 0.0
          %3527 = vmatpush1.msra.mxu0 0.0
          %3528 = vmatprep.subr.mxu0 0.0
          %3529 = vmatpush1.msra.mxu0 0.0
          %3530 = vmatprep.subr.mxu0 0.0
          %3531 = vmatpush1.msra.mxu0 0.0
          %3532 = vmatprep.subr.mxu0 0.0
          %3533 = vmatpush1.msra.mxu0 0.0
          %3534 = vmatprep.subr.mxu0 0.0
          %3535 = vmatpush1.msra.mxu0 0.0
          %3536 = vmatprep.subr.mxu0 0.0
          %3537 = vmatpush1.msra.mxu0 0.0
          %3538 = vmatprep.subr.mxu0 0.0
          %3539 = vmatpush1.msra.mxu0 0.0
          %3540 = vmatprep.subr.mxu0 0.0
          %3541 = vmatpush1.msra.mxu0 0.0
          %3542 = vmatprep.subr.mxu0 0.0
          %3543 = vmatpush1.msra.mxu0 0.0
          %3544 = vmatprep.subr.mxu0 0.0
          %3545 = vmatpush1.msra.mxu0 0.0
          %3546 = vmatprep.subr.mxu0 0.0
          %3547 = vmatpush1.msra.mxu0 0.0
          %3548 = vmatprep.subr.mxu0 0.0
          %3549 = vmatpush1.msra.mxu0 0.0
          %3550 = vmatprep.subr.mxu0 0.0
          %3551 = vmatpush1.msra.mxu0 0.0
          %3552 = vmatprep.subr.mxu0 0.0
          %3553 = vmatpush1.msra.mxu0 0.0
          %3554 = vmatprep.subr.mxu0 0.0
          %3555 = vmatpush1.msra.mxu0 0.0
          %3556 = vmatprep.subr.mxu0 0.0
          %3557 = vmatpush1.msra.mxu0 0.0
          %3558 = vmatprep.subr.mxu0 0.0
          %3559 = vmatpush1.msra.mxu0 0.0
          %3560 = vmatprep.subr.mxu0 0.0
          %3561 = vmatpush1.msra.mxu0 0.0
          %3562 = vmatprep.subr.mxu0 0.0
          %3563 = vmatpush1.msra.mxu0 0.0
          %3564 = vmatprep.subr.mxu0 0.0
          %3565 = vmatpush1.msra.mxu0 0.0
          %3566 = vmatprep.subr.mxu0 0.0
          %3567 = vmatpush1.msra.mxu0 0.0
          %3568 = vmatprep.subr.mxu0 0.0
          %3569 = vmatpush1.msra.mxu0 0.0
          %3570 = vmatprep.subr.mxu0 0.0
          %3571 = vmatpush1.msra.mxu0 0.0
          %3572 = vmatprep.subr.mxu0 0.0
          %3573 = vmatpush1.msra.mxu0 0.0
          %3574 = vmatprep.subr.mxu0 0.0
          %3575 = vmatpush1.msra.mxu0 0.0
          %3576 = vmatprep.subr.mxu0 0.0
          %3577 = vmatpush1.msra.mxu0 0.0
          %3578 = vmatprep.subr.mxu0 0.0
          %3579 = vmatpush1.msra.mxu0 0.0
          %3580 = vmatprep.mubr.f32.mxu0 0.0
          %3581 = vmatmul.mubr.f32.gmra.mrb[0].mxu0 %v3469
          %v3582 = vpop.f32.mrb[0].mxu0
          %v3583 = vadd.f32 %v3466, %v3582
          %v3584 = vpop.f32.mrb[0].mxu0
          %3585 = vmatprep.mubr.f32.mxu0 0.0
          %3586 = vmatmul.mubr.f32.gmra.mrb[0].mxu0 %v3472
          %v3587 = vpop.f32.mrb[0].mxu0
          %v3588 = vadd.f32 %v3466, %v3587
          %v3589 = vpop.f32.mrb[0].mxu0
          %3590 = vmatprep.mubr.f32.mxu0 0.0
          %3591 = vmatmul.mubr.f32.gmra.mrb[0].mxu0 %v3475
          %v3592 = vpop.f32.mrb[0].mxu0
          %v3593 = vadd.f32 %v3466, %v3592
          %v3594 = vpop.f32.mrb[0].mxu0
          %3595 = vmatprep.mubr.f32.mxu0 0.0
          %3596 = vmatmul.mubr.f32.gmra.mrb[0].mxu0 %v3478
          %v3597 = vpop.f32.mrb[0].mxu0
          %v3598 = vadd.f32 %v3466, %v3597
          %v3599 = vpop.f32.mrb[0].mxu0
          %3600 = vmatprep.mubr.f32.mxu0 0.0
          %3601 = vmatmul.mubr.f32.gmra.mrb[0].mxu0 %v3481
          %v3602 = vpop.f32.mrb[0].mxu0
          %v3603 = vadd.f32 %v3466, %v3602
          %v3604 = vpop.f32.mrb[0].mxu0
          %3605 = vmatprep.mubr.f32.mxu0 0.0
          %3606 = vmatmul.mubr.f32.gmra.mrb[0].mxu0 %v3484
          %v3607 = vpop.f32.mrb[0].mxu0
          %v3608 = vadd.f32 %v3466, %v3607
          %v3609 = vpop.f32.mrb[0].mxu0
          %3610 = vmatprep.mubr.f32.mxu0 0.0
          %3611 = vmatmul.mubr.f32.gmra.mrb[0].mxu0 %v3487
          %v3612 = vpop.f32.mrb[0].mxu0
          %v3613 = vadd.f32 %v3466, %v3612
          %v3614 = vpop.f32.mrb[0].mxu0
          %3615 = vmatprep.mubr.f32.mxu0 0.0
          %3616 = vmatmul.mubr.f32.gmra.mrb[0].mxu0 %v3490
          %v3617 = vpop.f32.mrb[0].mxu0
          %v3618 = vadd.f32 %v3466, %v3617
          %v3619 = vpop.f32.mrb[0].mxu0
          %3620 = vmatprep.mubr.f32.mxu0 0.0
          %3621 = vmatmul.mubr.f32.gmra.mrb[0].mxu0 %v3493
          %v3622 = vpop.f32.mrb[0].mxu0
          %v3623 = vadd.f32 %v3466, %v3622
          %v3624 = vpop.f32.mrb[0].mxu0
          %3625 = vmatprep.mubr.f32.mxu0 0.0
          %3626 = vmatmul.mubr.f32.gmra.mrb[0].mxu0 %v3496
          %v3627 = vpop.f32.mrb[0].mxu0
          %v3628 = vadd.f32 %v3466, %v3627
          %v3629 = vpop.f32.mrb[0].mxu0
          %3630 = vmatprep.mubr.f32.mxu0 0.0
          %3631 = vmatmul.mubr.f32.gmra.mrb[0].mxu0 %v3499
          %v3632 = vpop.f32.mrb[0].mxu0
          %v3633 = vadd.f32 %v3466, %v3632
          %v3634 = vpop.f32.mrb[0].mxu0
          %3635 = vmatprep.mubr.f32.mxu0 0.0
          %3636 = vmatmul.mubr.f32.gmra.mrb[0].mxu0 %v3502
          %v3637 = vpop.f32.mrb[0].mxu0
          %v3638 = vadd.f32 %v3466, %v3637
          %v3639 = vpop.f32.mrb[0].mxu0
          %3640 = vmatprep.mubr.f32.mxu0 0.0
          %3641 = vmatmul.mubr.f32.gmra.mrb[0].mxu0 %v3505
          %v3642 = vpop.f32.mrb[0].mxu0
          %v3643 = vadd.f32 %v3466, %v3642
          %v3644 = vpop.f32.mrb[0].mxu0
          %3645 = vmatprep.mubr.f32.mxu0 0.0
          %3646 = vmatmul.mubr.f32.gmra.mrb[0].mxu0 %v3508
          %v3647 = vpop.f32.mrb[0].mxu0
          %v3648 = vadd.f32 %v3466, %v3647
          %v3649 = vpop.f32.mrb[0].mxu0
          %3650 = vmatprep.mubr.f32.mxu0 0.0
          %3651 = vmatmul.mubr.f32.gmra.mrb[0].mxu0 %v3511
          %v3652 = vpop.f32.mrb[0].mxu0
          %v3653 = vadd.f32 %v3466, %v3652
          %v3654 = vpop.f32.mrb[0].mxu0
          %3655 = vmatprep.mubr.f32.mxu0 0.0
          %3656 = vmatmul.mubr.f32.gmra.mrb[0].mxu0 %v3514
          %v3657 = vpop.f32.mrb[0].mxu0
          %v3658 = vadd.f32 %v3466, %v3657
          %v3659 = vpop.f32.mrb[0].mxu0
          %3660 = vdwg.mxu0
          %3661 = vst.msk [vmem:[%s303] sm:$0xff] %vm335, %v3583
          %3662 = vst.msk [vmem:[%s303 + $0x8] sm:$0xff] %vm335, %v3588
          %3663 = vst.msk [vmem:[%s303 + $0x10] sm:$0xff] %vm335, %v3593
          %3664 = vst.msk [vmem:[%s303 + $0x18] sm:$0xff] %vm335, %v3598
          %3665 = vst.msk [vmem:[%s303 + $0x20] sm:$0xff] %vm335, %v3603
          %3666 = vst.msk [vmem:[%s303 + $0x28] sm:$0xff] %vm335, %v3608
          %3667 = vst.msk [vmem:[%s303 + $0x30] sm:$0xff] %vm335, %v3613
          %3668 = vst.msk [vmem:[%s303 + $0x38] sm:$0xff] %vm335, %v3618
          %3669 = vst.msk [vmem:[%s303 + $0x40] sm:$0xff] %vm335, %v3623
          %3670 = vst.msk [vmem:[%s303 + $0x48] sm:$0xff] %vm335, %v3628
          %3671 = vst.msk [vmem:[%s303 + $0x50] sm:$0xff] %vm335, %v3633
          %3672 = vst.msk [vmem:[%s303 + $0x58] sm:$0xff] %vm335, %v3638
          %3673 = vst.msk [vmem:[%s303 + $0x60] sm:$0xff] %vm335, %v3643
          %3674 = vst.msk [vmem:[%s303 + $0x68] sm:$0xff] %vm335, %v3648
          %3675 = vst.msk [vmem:[%s303 + $0x70] sm:$0xff] %vm335, %v3653
          %3676 = vst.msk [vmem:[%s303 + $0x78] sm:$0xff] %vm335, %v3658
        $region48: #{tpu_custom_call.1} parent=43 // pred_fallthru
          _
        %p3677 = scmp.lt.s32.totalorder %s26, 1
        %s3678 = scalar_select %p3677, %s26, 1
        %s3679 = smul.addr %s3678, 16
        %s3680 = smul.addr %s3679, 8
        %s3681 = scalar_lea.vmem %s6, %s3680
        %s3682 = sand.u32 %s201, 1
        %s3683 = scalar_lea.sflag [#allocation4], %s3682
        %s3684 = sand.u32 %s201, 1
        %s3685 = smul.addr %s3684, 512
        %s3686 = scalar_lea.vmem [#allocation3], %s3685
        // Predicated region
        $region49: #{tpu_custom_call.1} parent=43 // pred_check
          %p3687 = pneg %p183
        $region50: #{tpu_custom_call.1} parent=43 // pred_check_branch
          %3689 = sbr.rel (%p3687) target = $region52
        $region51: #{tpu_custom_call.1} parent=43 // pred_region
          _
        $region52: #{tpu_custom_call.1} parent=43 // pred_fallthru
          _
        // Predicated region
        $region53: #{tpu_custom_call.1} parent=43 // pred_check
          %p3690 = pneg %p211
        $region54: #{tpu_custom_call.1} parent=43 // pred_check_branch
          %3692 = sbr.rel (%p3690) target = $region56
        $region55: #{tpu_custom_call.1} parent=43 // pred_region
          %s3693 = smul.u32 4, %s27
          %s3695 = ssub.s32 8192, 8192
          %3696 = vsyncadd %s3683, %s3695
          %s3697 = smul.addr %s3693, 16
          %s3698 = smul.addr %s26, 64
          %s3699 = sadd.s32 %s3697, %s3698
          %s3700 = smul.addr %s3699, 128
          %s3701 = scalar_lea.hbm %s7, %s3700
          %s3702 = sshll.u32 %s3686, 4
          %s3703 = int_to_ptr.vmem [resolvable:$true] %s3702
          %3708 = dma.vmem_to_hbm [thread:$0]  %s3703, 8192, %s3701, %s3683, 128, 128, 8
        $region56: #{tpu_custom_call.1} parent=43 // pred_fallthru
          _
      $region44: #{tpu_custom_call.1} parent=5 // pred_fallthru
        _
      %p3709 = scmp.le.s32.totalorder 2, %s17
      // Predicated region
      $region57: #{tpu_custom_call.1} parent=5 // pred_check
        %p3710 = pneg %p3709
      $region58: #{tpu_custom_call.1} parent=5 // pred_check_branch
        %3712 = sbr.rel (%p3710) target = $region60
      $region59: #{tpu_custom_call.1} parent=5 // pred_region
        %s3713 = ssub.s32 %s17, 2
        // Predicated region
        $region61: #{tpu_custom_call.1} parent=59 // pred_check
          %p3714 = pneg %p189
        $region62: #{tpu_custom_call.1} parent=59 // pred_check_branch
          %3716 = sbr.rel (%p3714) target = $region64
        $region63: #{tpu_custom_call.1} parent=59 // pred_region
          %p3717 = scmp.lt.s32.totalorder %s28, 1
          %s3718 = scalar_select %p3717, %s28, 1
          %s3719 = smul.addr %s3718, 16
          %s3720 = smul.addr %s3719, 8
          %s3721 = scalar_lea.vmem %s6, %s3720
        $region64: #{tpu_custom_call.1} parent=59 // pred_fallthru
          _
        // Predicated region
        $region65: #{tpu_custom_call.1} parent=59 // pred_check
          %p3722 = pneg %p217
        $region66: #{tpu_custom_call.1} parent=59 // pred_check_branch
          %3724 = sbr.rel (%p3722) target = $region68
        $region67: #{tpu_custom_call.1} parent=59 // pred_region
          %s3725 = sand.u32 %s202, 1
          %s3726 = scalar_lea.sflag [#allocation4], %s3725
          %s3727 = sand.u32 %s202, 1
          %s3728 = smul.addr %s3727, 512
          %s3729 = scalar_lea.vmem [#allocation3], %s3728
          %3730 = dma.done %s3726, 8192
        $region68: #{tpu_custom_call.1} parent=59 // pred_fallthru
          _
      $region60: #{tpu_custom_call.1} parent=5 // pred_fallthru
        _
    $region6: #{tpu_custom_call.1} parent=1 // loop_footer
      %s21 = sadd.s32 1, %s17
    $region7: #{tpu_custom_call.1} parent=1 // loop_footer_branch
      %16 = sbr.rel target = $region3
    $region8: #{tpu_custom_call.1} parent=1 // loop_exit
      _
    %3731 = vsyncpa [#allocation4], 1
    %s3732 = scalar_lea.sflag [#allocation4], 1
    %3733 = vsyncpa %s3732, 1

</llo_original>
